<compile_context>
chip_gen: v6e
topology: v6e:2x2x1
jax: 0.10.0
libtpu: 0.0.40
codegen_flags: <defaults>
</compile_context>

<pallas_src>
import functools

import jax
import jax.numpy as jnp
from jax import lax
from jax.experimental import pallas as pl
from jax.experimental.pallas import tpu as pltpu

# ---- small config consistent with the module structure (scaled down) ----
VOCAB_SIZE = 65          # len(chars) for tiny-shakespeare-like text
N_EMBD     = 64          # module uses 384
N_HEAD     = 4           # module uses 6
N_LAYER    = 2           # module uses 6
BLOCK_SIZE = 16          # module uses 256
HEAD_SIZE  = N_EMBD // N_HEAD
EPS        = 1e-5        # torch.nn.LayerNorm default
LOGIT_PAD  = 128         # lane-dense lm_head output (vocab 65 -> 128 lanes)
NEG_INF    = -1e30       # additive causal mask value (avoids inf-inf NaNs)
WEIGHT_DTYPE = jnp.bfloat16   # matmul weights; accumulation stays f32


# ---------------------------------------------------------------- kernel ----

def _layer_norm(v, g, b):
    mean = jnp.mean(v, axis=-1, keepdims=True)
    var = jnp.mean((v - mean) ** 2, axis=-1, keepdims=True)
    return (v - mean) * lax.rsqrt(var + EPS) * g + b


def _fused_forward_kernel(x_ref, pos_ref,
                          ln1_g_ref, ln1_b_ref, wqkv_ref,
                          proj_w_ref, proj_b_ref,
                          ln2_g_ref, ln2_b_ref,
                          fc1_w_ref, fc1_b_ref, fc2_w_ref, fc2_b_ref,
                          lnf_g_ref, lnf_b_ref, lm_w_ref, lm_b_ref,
                          o_ref, *, n_layer, n_head, head_size, scale):
    # token embedding (gathered outside) + position embedding, both in VMEM.
    x = x_ref[0].astype(jnp.float32) + pos_ref[...].astype(jnp.float32)   # (T, C)
    T, C = x.shape

    # Additive causal mask, built once (XLU iota + compare + select), then a
    # single VALU add per head instead of a per-head select.
    row = lax.broadcasted_iota(jnp.int32, (T, T), 0)
    col = lax.broadcasted_iota(jnp.int32, (T, T), 1)
    causal_add = jnp.where(col <= row, 0.0, NEG_INF).astype(jnp.float32)  # (T, T)

    for l in range(n_layer):                               # static, unrolled
        # ---- self-attention sub-block -----------------------------------
        h = _layer_norm(x, ln1_g_ref[l], ln1_b_ref[l])
        # all heads' Q/K/V in one lane-dense (T,C)@(C,3C) matmul
        qkv = jnp.dot(h.astype(wqkv_ref.dtype), wqkv_ref[l],
                      preferred_element_type=jnp.float32)  # (T, 3*C)
        heads = []
        for hd in range(n_head):
            lo = hd * head_size
            q = qkv[:, lo:lo + head_size]
            k = qkv[:, C + lo:C + lo + head_size]
            v = qkv[:, 2 * C + lo:2 * C + lo + head_size]
            s = jnp.dot(q, k.T, preferred_element_type=jnp.float32) * scale
            s = s + causal_add                             # causal mask (add, not select)
            m = jnp.max(s, axis=-1, keepdims=True)
            p = jnp.exp(s - m)
            p = p * pl.reciprocal(jnp.sum(p, axis=-1, keepdims=True), approx=True)
            # TODO(synk): attention-weight dropout is identity in eval mode.
            heads.append(jnp.dot(p, v, preferred_element_type=jnp.float32))
        attn = jnp.concatenate(heads, axis=-1)             # (T, C); torch.cat(dim=-1) order
        sa = jnp.dot(attn.astype(proj_w_ref.dtype), proj_w_ref[l],
                     preferred_element_type=jnp.float32) + proj_b_ref[l]
        # TODO(synk): dropout after proj is identity in eval mode.
        x = x + sa                                         # residual, in VMEM

        # ---- feed-forward sub-block --------------------------------------
        h2 = _layer_norm(x, ln2_g_ref[l], ln2_b_ref[l])
        ff = jnp.dot(h2.astype(fc1_w_ref.dtype), fc1_w_ref[l],
                     preferred_element_type=jnp.float32) + fc1_b_ref[l]
        ff = jnp.maximum(ff, 0.0)                          # ReLU
        ff = jnp.dot(ff.astype(fc2_w_ref.dtype), fc2_w_ref[l],
                     preferred_element_type=jnp.float32) + fc2_b_ref[l]
        # TODO(synk): FeedForward's trailing nn.Dropout is identity in eval mode.
        x = x + ff                                         # residual, in VMEM

    xf = _layer_norm(x, lnf_g_ref[...], lnf_b_ref[...])
    logits = jnp.dot(xf.astype(lm_w_ref.dtype), lm_w_ref[...],
                     preferred_element_type=jnp.float32) + lm_b_ref[...]
    o_ref[0] = logits.astype(o_ref.dtype)                  # (T, 128) lane-dense store


# ------------------------------------------------------------- parameters ---

def _uniform(key, shape, fan_in):
    bound = 1.0 / (fan_in ** 0.5)
    return jax.random.uniform(key, shape, jnp.float32, -bound, bound)


def init_params(key):
    keys = jax.random.split(key, 3 + N_LAYER)
    params = {
        "tok_emb": jax.random.normal(keys[0], (VOCAB_SIZE, N_EMBD), jnp.float32),
        "pos_emb": jax.random.normal(keys[1], (BLOCK_SIZE, N_EMBD), jnp.float32),
        "lnf_g": jnp.ones((1, N_EMBD), jnp.float32),
        "lnf_b": jnp.zeros((1, N_EMBD), jnp.float32),
    }
    # lm_head, padded to 128 output lanes (zero columns beyond VOCAB_SIZE)
    kw, kb = jax.random.split(keys[2])
    lm_w = _uniform(kw, (N_EMBD, VOCAB_SIZE), N_EMBD)
    lm_b = _uniform(kb, (VOCAB_SIZE,), N_EMBD)
    params["lm_w_pad"] = (jnp.zeros((N_EMBD, LOGIT_PAD), WEIGHT_DTYPE)
                          .at[:, :VOCAB_SIZE].set(lm_w.astype(WEIGHT_DTYPE)))
    params["lm_b_pad"] = (jnp.zeros((1, LOGIT_PAD), jnp.float32)
                          .at[0, :VOCAB_SIZE].set(lm_b))

    stacks = {k: [] for k in ["ln1_g", "ln1_b", "wqkv", "proj_w", "proj_b",
                              "ln2_g", "ln2_b", "fc1_w", "fc1_b", "fc2_w", "fc2_b"]}
    for l in range(N_LAYER):
        bk = jax.random.split(keys[3 + l], 9)
        # Per-head K/Q/V projections (bias=False). Head h occupies columns
        # [h*hs:(h+1)*hs] of wq/wk/wv, matching torch.cat([h(x) ...], dim=-1).
        wq = _uniform(bk[0], (N_EMBD, N_HEAD * HEAD_SIZE), N_EMBD)
        wk = _uniform(bk[1], (N_EMBD, N_HEAD * HEAD_SIZE), N_EMBD)
        wv = _uniform(bk[2], (N_EMBD, N_HEAD * HEAD_SIZE), N_EMBD)
        stacks["wqkv"].append(jnp.concatenate([wq, wk, wv], axis=-1))   # (C, 3C)
        stacks["proj_w"].append(_uniform(bk[3], (N_EMBD, N_EMBD), N_EMBD))
        stacks["proj_b"].append(_uniform(bk[4], (1, N_EMBD), N_EMBD))
        stacks["fc1_w"].append(_uniform(bk[5], (N_EMBD, 4 * N_EMBD), N_EMBD))
        stacks["fc1_b"].append(_uniform(bk[6], (1, 4 * N_EMBD), N_EMBD))
        stacks["fc2_w"].append(_uniform(bk[7], (4 * N_EMBD, N_EMBD), 4 * N_EMBD))
        stacks["fc2_b"].append(_uniform(bk[8], (1, N_EMBD), 4 * N_EMBD))
        stacks["ln1_g"].append(jnp.ones((1, N_EMBD), jnp.float32))
        stacks["ln1_b"].append(jnp.zeros((1, N_EMBD), jnp.float32))
        stacks["ln2_g"].append(jnp.ones((1, N_EMBD), jnp.float32))
        stacks["ln2_b"].append(jnp.zeros((1, N_EMBD), jnp.float32))

    for k, v in stacks.items():
        arr = jnp.stack(v, axis=0)
        if k in ("wqkv", "proj_w", "fc1_w", "fc2_w"):
            arr = arr.astype(WEIGHT_DTYPE)
        params[k] = arr
    return params


# ----------------------------------------------------------------- forward --

def bigram_lm_forward(params, idx, targets=None):
    """idx: (B, T) int32 token ids. Returns (logits (B,T,vocab), loss)."""
    B, T = idx.shape
    C = N_EMBD
    tok_emb = jnp.take(params["tok_emb"], idx, axis=0)   # (B,T,C) gather (JAX glue)
    pos_emb = params["pos_emb"][:T]                      # (T,C)
    scale = float(N_EMBD) ** -0.5   # module scales by C**-0.5 where C = n_embd

    kernel = functools.partial(_fused_forward_kernel, n_layer=N_LAYER,
                               n_head=N_HEAD, head_size=HEAD_SIZE, scale=scale)

    def full(shape):  # full-array block, constant block index across the batch grid
        return pl.BlockSpec(shape, lambda b, _s=shape: (0,) * len(_s))

    padded_logits = pl.pallas_call(
        kernel,
        out_shape=jax.ShapeDtypeStruct((B, T, LOGIT_PAD), jnp.float32),
        grid=(B,),
        in_specs=[
            pl.BlockSpec((1, T, C), lambda b: (b, 0, 0)),        # tok_emb
            full((T, C)),                                        # pos_emb
            full((N_LAYER, 1, C)),                               # ln1_g
            full((N_LAYER, 1, C)),                               # ln1_b
            full((N_LAYER, C, 3 * C)),                           # wqkv
            full((N_LAYER, C, C)),                               # proj_w
            full((N_LAYER, 1, C)),                               # proj_b
            full((N_LAYER, 1, C)),                               # ln2_g
            full((N_LAYER, 1, C)),                               # ln2_b
            full((N_LAYER, C, 4 * C)),                           # fc1_w
            full((N_LAYER, 1, 4 * C)),                           # fc1_b
            full((N_LAYER, 4 * C, C)),                           # fc2_w
            full((N_LAYER, 1, C)),                               # fc2_b
            full((1, C)),                                        # lnf_g
            full((1, C)),                                        # lnf_b
            full((C, LOGIT_PAD)),                                # lm_w (padded)
            full((1, LOGIT_PAD)),                                # lm_b (padded)
        ],
        out_specs=pl.BlockSpec((1, T, LOGIT_PAD), lambda b: (b, 0, 0)),
        compiler_params=pltpu.CompilerParams(
            dimension_semantics=("parallel",)),                  # shards batch on 2-TC chips
    )(tok_emb, pos_emb,
      params["ln1_g"], params["ln1_b"], params["wqkv"],
      params["proj_w"], params["proj_b"],
      params["ln2_g"], params["ln2_b"],
      params["fc1_w"], params["fc1_b"], params["fc2_w"], params["fc2_b"],
      params["lnf_g"], params["lnf_b"], params["lm_w_pad"], params["lm_b_pad"])

    logits = padded_logits[..., :VOCAB_SIZE]                     # drop lane padding

    loss = None
    if targets is not None:
        # F.cross_entropy (mean reduction), computed in plain JAX.
        lse = jax.nn.logsumexp(logits, axis=-1)                  # (B,T)
        tgt = jnp.take_along_axis(logits, targets[..., None], axis=-1)[..., 0]
        loss = jnp.mean(lse - tgt)
    return logits, loss


# -------------------------------------------------------------------- main --

if __name__ == "__main__":
    key = jax.random.PRNGKey(0)
    kp, ki, kt = jax.random.split(key, 3)
    params = init_params(kp)

    B, T = 2, BLOCK_SIZE
    idx = jax.random.randint(ki, (B, T), 0, VOCAB_SIZE, dtype=jnp.int32)
    targets = jax.random.randint(kt, (B, T), 0, VOCAB_SIZE, dtype=jnp.int32)

    fwd = jax.jit(bigram_lm_forward)
    logits, loss = fwd(params, idx, targets)
    logits = jax.block_until_ready(logits)
    loss = jax.block_until_ready(loss)

    assert logits.shape == (B, T, VOCAB_SIZE)
    assert bool(jnp.all(jnp.isfinite(logits)))
    assert bool(jnp.isfinite(loss))
    print("KERNEL_OK")
</pallas_src>

<mosaic_0001>
module attributes {stable_mosaic.version = 11 : i64} {
  func.func @_fused_forward_kernel(%arg0: i32, %arg1: memref<1x16x64xf32, #tpu.memory_space<vmem>>, %arg2: memref<16x64xf32, #tpu.memory_space<vmem>>, %arg3: memref<2x1x64xf32, #tpu.memory_space<vmem>>, %arg4: memref<2x1x64xf32, #tpu.memory_space<vmem>>, %arg5: memref<2x64x192xbf16, #tpu.memory_space<vmem>>, %arg6: memref<2x64x64xbf16, #tpu.memory_space<vmem>>, %arg7: memref<2x1x64xf32, #tpu.memory_space<vmem>>, %arg8: memref<2x1x64xf32, #tpu.memory_space<vmem>>, %arg9: memref<2x1x64xf32, #tpu.memory_space<vmem>>, %arg10: memref<2x64x256xbf16, #tpu.memory_space<vmem>>, %arg11: memref<2x1x256xf32, #tpu.memory_space<vmem>>, %arg12: memref<2x256x64xbf16, #tpu.memory_space<vmem>>, %arg13: memref<2x1x64xf32, #tpu.memory_space<vmem>>, %arg14: memref<1x64xf32, #tpu.memory_space<vmem>>, %arg15: memref<1x64xf32, #tpu.memory_space<vmem>>, %arg16: memref<64x128xbf16, #tpu.memory_space<vmem>>, %arg17: memref<1x128xf32, #tpu.memory_space<vmem>>, %arg18: memref<1x16x128xf32, #tpu.memory_space<vmem>>) attributes {dimension_semantics = [#tpu.dimension_semantics<parallel>], iteration_bounds = array<i64: 2>, scalar_prefetch = 0 : i64, scratch_operands = 0 : i64, tpu.core_type = #tpu.core_type<tc>, window_params = [{transform_indices = @transform_0, window_bounds = array<i64: 1, 16, 64>}, {pipeline_mode = #tpu.pipeline_mode<synchronous>, transform_indices = @transform_1, window_bounds = array<i64: 16, 64>}, {pipeline_mode = #tpu.pipeline_mode<synchronous>, transform_indices = @transform_2, window_bounds = array<i64: 2, 1, 64>}, {pipeline_mode = #tpu.pipeline_mode<synchronous>, transform_indices = @transform_3, window_bounds = array<i64: 2, 1, 64>}, {pipeline_mode = #tpu.pipeline_mode<synchronous>, transform_indices = @transform_4, window_bounds = array<i64: 2, 64, 192>}, {pipeline_mode = #tpu.pipeline_mode<synchronous>, transform_indices = @transform_5, window_bounds = array<i64: 2, 64, 64>}, {pipeline_mode = #tpu.pipeline_mode<synchronous>, transform_indices = @transform_6, window_bounds = array<i64: 2, 1, 64>}, {pipeline_mode = #tpu.pipeline_mode<synchronous>, transform_indices = @transform_7, window_bounds = array<i64: 2, 1, 64>}, {pipeline_mode = #tpu.pipeline_mode<synchronous>, transform_indices = @transform_8, window_bounds = array<i64: 2, 1, 64>}, {pipeline_mode = #tpu.pipeline_mode<synchronous>, transform_indices = @transform_9, window_bounds = array<i64: 2, 64, 256>}, {pipeline_mode = #tpu.pipeline_mode<synchronous>, transform_indices = @transform_10, window_bounds = array<i64: 2, 1, 256>}, {pipeline_mode = #tpu.pipeline_mode<synchronous>, transform_indices = @transform_11, window_bounds = array<i64: 2, 256, 64>}, {pipeline_mode = #tpu.pipeline_mode<synchronous>, transform_indices = @transform_12, window_bounds = array<i64: 2, 1, 64>}, {pipeline_mode = #tpu.pipeline_mode<synchronous>, transform_indices = @transform_13, window_bounds = array<i64: 1, 64>}, {pipeline_mode = #tpu.pipeline_mode<synchronous>, transform_indices = @transform_14, window_bounds = array<i64: 1, 64>}, {pipeline_mode = #tpu.pipeline_mode<synchronous>, transform_indices = @transform_15, window_bounds = array<i64: 64, 128>}, {pipeline_mode = #tpu.pipeline_mode<synchronous>, transform_indices = @transform_16, window_bounds = array<i64: 1, 128>}, {transform_indices = @transform_17, window_bounds = array<i64: 1, 16, 128>}]} {
    %c0 = arith.constant 0 : index
    %c0_0 = arith.constant 0 : index
    %c0_1 = arith.constant 0 : index
    %0 = vector.load %arg1[%c0, %c0_0, %c0_1] : memref<1x16x64xf32, #tpu.memory_space<vmem>>, vector<1x16x64xf32>
    %1 = vector.shape_cast %0 : vector<1x16x64xf32> to vector<16x64xf32>
    %c0_2 = arith.constant 0 : index
    %c0_3 = arith.constant 0 : index
    %2 = vector.load %arg2[%c0_2, %c0_3] : memref<16x64xf32, #tpu.memory_space<vmem>>, vector<16x64xf32>
    %3 = arith.addf %1, %2 : vector<16x64xf32>
    %4 = tpu.iota {dimensions = array<i32: 0>} : vector<16x16xi32>
    %5 = tpu.iota {dimensions = array<i32: 1>} : vector<16x16xi32>
    %6 = arith.cmpi sle, %5, %4 : vector<16x16xi32>
    %cst = arith.constant 0.000000e+00 : f32
    %cst_4 = arith.constant -1.000000e+30 : f32
    %7 = vector.broadcast %cst : f32 to vector<16x16xf32>
    %8 = vector.broadcast %cst_4 : f32 to vector<16x16xf32>
    %9 = arith.select %6, %7, %8 : vector<16x16xi1>, vector<16x16xf32>
    %c0_5 = arith.constant 0 : index
    %c0_6 = arith.constant 0 : index
    %c0_7 = arith.constant 0 : index
    %10 = vector.load %arg3[%c0_5, %c0_6, %c0_7] : memref<2x1x64xf32, #tpu.memory_space<vmem>>, vector<1x1x64xf32>
    %11 = vector.shape_cast %10 : vector<1x1x64xf32> to vector<1x64xf32>
    %c0_8 = arith.constant 0 : index
    %c0_9 = arith.constant 0 : index
    %c0_10 = arith.constant 0 : index
    %12 = vector.load %arg4[%c0_8, %c0_9, %c0_10] : memref<2x1x64xf32, #tpu.memory_space<vmem>>, vector<1x1x64xf32>
    %13 = vector.shape_cast %12 : vector<1x1x64xf32> to vector<1x64xf32>
    %cst_11 = arith.constant dense<0.000000e+00> : vector<16xf32>
    %14 = vector.multi_reduction <add>, %3, %cst_11 [1] : vector<16x64xf32> to vector<16xf32>
    %15 = vector.shape_cast %14 : vector<16xf32> to vector<16x1xf32>
    %cst_12 = arith.constant 6.400000e+01 : f32
    %16 = vector.broadcast %cst_12 : f32 to vector<16x1xf32>
    %17 = arith.divf %15, %16 : vector<16x1xf32>
    %18 = vector.broadcast %17 : vector<16x1xf32> to vector<16x64xf32>
    %19 = arith.subf %3, %18 : vector<16x64xf32>
    %20 = arith.mulf %19, %19 : vector<16x64xf32>
    %cst_13 = arith.constant dense<0.000000e+00> : vector<16xf32>
    %21 = vector.multi_reduction <add>, %20, %cst_13 [1] : vector<16x64xf32> to vector<16xf32>
    %22 = vector.shape_cast %21 : vector<16xf32> to vector<16x1xf32>
    %cst_14 = arith.constant 6.400000e+01 : f32
    %23 = vector.broadcast %cst_14 : f32 to vector<16x1xf32>
    %24 = arith.divf %22, %23 : vector<16x1xf32>
    %25 = vector.broadcast %17 : vector<16x1xf32> to vector<16x64xf32>
    %26 = arith.subf %3, %25 : vector<16x64xf32>
    %cst_15 = arith.constant 9.99999974E-6 : f32
    %27 = vector.broadcast %cst_15 : f32 to vector<16x1xf32>
    %28 = arith.addf %24, %27 : vector<16x1xf32>
    %29 = math.rsqrt %28 : vector<16x1xf32>
    %30 = vector.broadcast %29 : vector<16x1xf32> to vector<16x64xf32>
    %31 = arith.mulf %26, %30 : vector<16x64xf32>
    %32 = vector.broadcast %11 : vector<1x64xf32> to vector<16x64xf32>
    %33 = arith.mulf %31, %32 : vector<16x64xf32>
    %34 = vector.broadcast %13 : vector<1x64xf32> to vector<16x64xf32>
    %35 = arith.addf %33, %34 : vector<16x64xf32>
    %36 = arith.truncf %35 : vector<16x64xf32> to vector<16x64xbf16>
    %c0_16 = arith.constant 0 : index
    %c0_17 = arith.constant 0 : index
    %c0_18 = arith.constant 0 : index
    %37 = vector.load %arg5[%c0_16, %c0_17, %c0_18] : memref<2x64x192xbf16, #tpu.memory_space<vmem>>, vector<1x64x192xbf16>
    %38 = vector.shape_cast %37 : vector<1x64x192xbf16> to vector<64x192xbf16>
    %cst_19 = arith.constant dense<0.000000e+00> : vector<16x192xf32>
    %39 = tpu.matmul %36, %38, %cst_19 {dimension_numbers = #tpu.dot_dimension_numbers<[1], [0], [0], [1], [0, 0, 1, 1], [], []>} : vector<16x64xbf16>, vector<64x192xbf16>, vector<16x192xf32> -> vector<16x192xf32>
    %40 = vector.extract_strided_slice %39 {offsets = [0, 0], sizes = [16, 16], strides = [1, 1]} : vector<16x192xf32> to vector<16x16xf32>
    %41 = vector.extract_strided_slice %39 {offsets = [0, 64], sizes = [16, 16], strides = [1, 1]} : vector<16x192xf32> to vector<16x16xf32>
    %42 = vector.extract_strided_slice %39 {offsets = [0, 128], sizes = [16, 16], strides = [1, 1]} : vector<16x192xf32> to vector<16x16xf32>
    %43 = tpu.transpose %41, [1, 0] : vector<16x16xf32> -> vector<16x16xf32>
    %cst_20 = arith.constant dense<0.000000e+00> : vector<16x16xf32>
    %44 = tpu.matmul %40, %43, %cst_20 {dimension_numbers = #tpu.dot_dimension_numbers<[1], [0], [0], [1], [0, 0, 1, 1], [], []>} : vector<16x16xf32>, vector<16x16xf32>, vector<16x16xf32> -> vector<16x16xf32>
    %cst_21 = arith.constant 1.250000e-01 : f32
    %45 = vector.broadcast %cst_21 : f32 to vector<16x16xf32>
    %46 = arith.mulf %44, %45 : vector<16x16xf32>
    %47 = arith.addf %46, %9 : vector<16x16xf32>
    %cst_22 = arith.constant dense<0xFF800000> : vector<16xf32>
    %48 = vector.multi_reduction <maximumf>, %47, %cst_22 [1] : vector<16x16xf32> to vector<16xf32>
    %49 = vector.shape_cast %48 : vector<16xf32> to vector<16x1xf32>
    %50 = vector.broadcast %49 : vector<16x1xf32> to vector<16x16xf32>
    %51 = arith.subf %47, %50 : vector<16x16xf32>
    %52 = math.exp %51 : vector<16x16xf32>
    %cst_23 = arith.constant dense<0.000000e+00> : vector<16xf32>
    %53 = vector.multi_reduction <add>, %52, %cst_23 [1] : vector<16x16xf32> to vector<16xf32>
    %54 = vector.shape_cast %53 : vector<16xf32> to vector<16x1xf32>
    %55 = tpu.reciprocal %54 {approx = true} : vector<16x1xf32> -> vector<16x1xf32>
    %56 = vector.broadcast %55 : vector<16x1xf32> to vector<16x16xf32>
    %57 = arith.mulf %52, %56 : vector<16x16xf32>
    %cst_24 = arith.constant dense<0.000000e+00> : vector<16x16xf32>
    %58 = tpu.matmul %57, %42, %cst_24 {dimension_numbers = #tpu.dot_dimension_numbers<[1], [0], [0], [1], [0, 0, 1, 1], [], []>} : vector<16x16xf32>, vector<16x16xf32>, vector<16x16xf32> -> vector<16x16xf32>
    %59 = vector.extract_strided_slice %39 {offsets = [0, 16], sizes = [16, 16], strides = [1, 1]} : vector<16x192xf32> to vector<16x16xf32>
    %60 = vector.extract_strided_slice %39 {offsets = [0, 80], sizes = [16, 16], strides = [1, 1]} : vector<16x192xf32> to vector<16x16xf32>
    %61 = vector.extract_strided_slice %39 {offsets = [0, 144], sizes = [16, 16], strides = [1, 1]} : vector<16x192xf32> to vector<16x16xf32>
    %62 = tpu.transpose %60, [1, 0] : vector<16x16xf32> -> vector<16x16xf32>
    %cst_25 = arith.constant dense<0.000000e+00> : vector<16x16xf32>
    %63 = tpu.matmul %59, %62, %cst_25 {dimension_numbers = #tpu.dot_dimension_numbers<[1], [0], [0], [1], [0, 0, 1, 1], [], []>} : vector<16x16xf32>, vector<16x16xf32>, vector<16x16xf32> -> vector<16x16xf32>
    %cst_26 = arith.constant 1.250000e-01 : f32
    %64 = vector.broadcast %cst_26 : f32 to vector<16x16xf32>
    %65 = arith.mulf %63, %64 : vector<16x16xf32>
    %66 = arith.addf %65, %9 : vector<16x16xf32>
    %cst_27 = arith.constant dense<0xFF800000> : vector<16xf32>
    %67 = vector.multi_reduction <maximumf>, %66, %cst_27 [1] : vector<16x16xf32> to vector<16xf32>
    %68 = vector.shape_cast %67 : vector<16xf32> to vector<16x1xf32>
    %69 = vector.broadcast %68 : vector<16x1xf32> to vector<16x16xf32>
    %70 = arith.subf %66, %69 : vector<16x16xf32>
    %71 = math.exp %70 : vector<16x16xf32>
    %cst_28 = arith.constant dense<0.000000e+00> : vector<16xf32>
    %72 = vector.multi_reduction <add>, %71, %cst_28 [1] : vector<16x16xf32> to vector<16xf32>
    %73 = vector.shape_cast %72 : vector<16xf32> to vector<16x1xf32>
    %74 = tpu.reciprocal %73 {approx = true} : vector<16x1xf32> -> vector<16x1xf32>
    %75 = vector.broadcast %74 : vector<16x1xf32> to vector<16x16xf32>
    %76 = arith.mulf %71, %75 : vector<16x16xf32>
    %cst_29 = arith.constant dense<0.000000e+00> : vector<16x16xf32>
    %77 = tpu.matmul %76, %61, %cst_29 {dimension_numbers = #tpu.dot_dimension_numbers<[1], [0], [0], [1], [0, 0, 1, 1], [], []>} : vector<16x16xf32>, vector<16x16xf32>, vector<16x16xf32> -> vector<16x16xf32>
    %78 = vector.extract_strided_slice %39 {offsets = [0, 32], sizes = [16, 16], strides = [1, 1]} : vector<16x192xf32> to vector<16x16xf32>
    %79 = vector.extract_strided_slice %39 {offsets = [0, 96], sizes = [16, 16], strides = [1, 1]} : vector<16x192xf32> to vector<16x16xf32>
    %80 = vector.extract_strided_slice %39 {offsets = [0, 160], sizes = [16, 16], strides = [1, 1]} : vector<16x192xf32> to vector<16x16xf32>
    %81 = tpu.transpose %79, [1, 0] : vector<16x16xf32> -> vector<16x16xf32>
    %cst_30 = arith.constant dense<0.000000e+00> : vector<16x16xf32>
    %82 = tpu.matmul %78, %81, %cst_30 {dimension_numbers = #tpu.dot_dimension_numbers<[1], [0], [0], [1], [0, 0, 1, 1], [], []>} : vector<16x16xf32>, vector<16x16xf32>, vector<16x16xf32> -> vector<16x16xf32>
    %cst_31 = arith.constant 1.250000e-01 : f32
    %83 = vector.broadcast %cst_31 : f32 to vector<16x16xf32>
    %84 = arith.mulf %82, %83 : vector<16x16xf32>
    %85 = arith.addf %84, %9 : vector<16x16xf32>
    %cst_32 = arith.constant dense<0xFF800000> : vector<16xf32>
    %86 = vector.multi_reduction <maximumf>, %85, %cst_32 [1] : vector<16x16xf32> to vector<16xf32>
    %87 = vector.shape_cast %86 : vector<16xf32> to vector<16x1xf32>
    %88 = vector.broadcast %87 : vector<16x1xf32> to vector<16x16xf32>
    %89 = arith.subf %85, %88 : vector<16x16xf32>
    %90 = math.exp %89 : vector<16x16xf32>
    %cst_33 = arith.constant dense<0.000000e+00> : vector<16xf32>
    %91 = vector.multi_reduction <add>, %90, %cst_33 [1] : vector<16x16xf32> to vector<16xf32>
    %92 = vector.shape_cast %91 : vector<16xf32> to vector<16x1xf32>
    %93 = tpu.reciprocal %92 {approx = true} : vector<16x1xf32> -> vector<16x1xf32>
    %94 = vector.broadcast %93 : vector<16x1xf32> to vector<16x16xf32>
    %95 = arith.mulf %90, %94 : vector<16x16xf32>
    %cst_34 = arith.constant dense<0.000000e+00> : vector<16x16xf32>
    %96 = tpu.matmul %95, %80, %cst_34 {dimension_numbers = #tpu.dot_dimension_numbers<[1], [0], [0], [1], [0, 0, 1, 1], [], []>} : vector<16x16xf32>, vector<16x16xf32>, vector<16x16xf32> -> vector<16x16xf32>
    %97 = vector.extract_strided_slice %39 {offsets = [0, 48], sizes = [16, 16], strides = [1, 1]} : vector<16x192xf32> to vector<16x16xf32>
    %98 = vector.extract_strided_slice %39 {offsets = [0, 112], sizes = [16, 16], strides = [1, 1]} : vector<16x192xf32> to vector<16x16xf32>
    %99 = vector.extract_strided_slice %39 {offsets = [0, 176], sizes = [16, 16], strides = [1, 1]} : vector<16x192xf32> to vector<16x16xf32>
    %100 = tpu.transpose %98, [1, 0] : vector<16x16xf32> -> vector<16x16xf32>
    %cst_35 = arith.constant dense<0.000000e+00> : vector<16x16xf32>
    %101 = tpu.matmul %97, %100, %cst_35 {dimension_numbers = #tpu.dot_dimension_numbers<[1], [0], [0], [1], [0, 0, 1, 1], [], []>} : vector<16x16xf32>, vector<16x16xf32>, vector<16x16xf32> -> vector<16x16xf32>
    %cst_36 = arith.constant 1.250000e-01 : f32
    %102 = vector.broadcast %cst_36 : f32 to vector<16x16xf32>
    %103 = arith.mulf %101, %102 : vector<16x16xf32>
    %104 = arith.addf %103, %9 : vector<16x16xf32>
    %cst_37 = arith.constant dense<0xFF800000> : vector<16xf32>
    %105 = vector.multi_reduction <maximumf>, %104, %cst_37 [1] : vector<16x16xf32> to vector<16xf32>
    %106 = vector.shape_cast %105 : vector<16xf32> to vector<16x1xf32>
    %107 = vector.broadcast %106 : vector<16x1xf32> to vector<16x16xf32>
    %108 = arith.subf %104, %107 : vector<16x16xf32>
    %109 = math.exp %108 : vector<16x16xf32>
    %cst_38 = arith.constant dense<0.000000e+00> : vector<16xf32>
    %110 = vector.multi_reduction <add>, %109, %cst_38 [1] : vector<16x16xf32> to vector<16xf32>
    %111 = vector.shape_cast %110 : vector<16xf32> to vector<16x1xf32>
    %112 = tpu.reciprocal %111 {approx = true} : vector<16x1xf32> -> vector<16x1xf32>
    %113 = vector.broadcast %112 : vector<16x1xf32> to vector<16x16xf32>
    %114 = arith.mulf %109, %113 : vector<16x16xf32>
    %cst_39 = arith.constant dense<0.000000e+00> : vector<16x16xf32>
    %115 = tpu.matmul %114, %99, %cst_39 {dimension_numbers = #tpu.dot_dimension_numbers<[1], [0], [0], [1], [0, 0, 1, 1], [], []>} : vector<16x16xf32>, vector<16x16xf32>, vector<16x16xf32> -> vector<16x16xf32>
    %116 = tpu.concatenate %58, %77, %96, %115 in 1 : vector<16x16xf32>, vector<16x16xf32>, vector<16x16xf32>, vector<16x16xf32> -> vector<16x64xf32>
    %117 = arith.truncf %116 : vector<16x64xf32> to vector<16x64xbf16>
    %c0_40 = arith.constant 0 : index
    %c0_41 = arith.constant 0 : index
    %c0_42 = arith.constant 0 : index
    %118 = vector.load %arg6[%c0_40, %c0_41, %c0_42] : memref<2x64x64xbf16, #tpu.memory_space<vmem>>, vector<1x64x64xbf16>
    %119 = vector.shape_cast %118 : vector<1x64x64xbf16> to vector<64x64xbf16>
    %cst_43 = arith.constant dense<0.000000e+00> : vector<16x64xf32>
    %120 = tpu.matmul %117, %119, %cst_43 {dimension_numbers = #tpu.dot_dimension_numbers<[1], [0], [0], [1], [0, 0, 1, 1], [], []>} : vector<16x64xbf16>, vector<64x64xbf16>, vector<16x64xf32> -> vector<16x64xf32>
    %c0_44 = arith.constant 0 : index
    %c0_45 = arith.constant 0 : index
    %c0_46 = arith.constant 0 : index
    %121 = vector.load %arg7[%c0_44, %c0_45, %c0_46] : memref<2x1x64xf32, #tpu.memory_space<vmem>>, vector<1x1x64xf32>
    %122 = vector.shape_cast %121 : vector<1x1x64xf32> to vector<1x64xf32>
    %123 = vector.broadcast %122 : vector<1x64xf32> to vector<16x64xf32>
    %124 = arith.addf %120, %123 : vector<16x64xf32>
    %125 = arith.addf %3, %124 : vector<16x64xf32>
    %c0_47 = arith.constant 0 : index
    %c0_48 = arith.constant 0 : index
    %c0_49 = arith.constant 0 : index
    %126 = vector.load %arg8[%c0_47, %c0_48, %c0_49] : memref<2x1x64xf32, #tpu.memory_space<vmem>>, vector<1x1x64xf32>
    %127 = vector.shape_cast %126 : vector<1x1x64xf32> to vector<1x64xf32>
    %c0_50 = arith.constant 0 : index
    %c0_51 = arith.constant 0 : index
    %c0_52 = arith.constant 0 : index
    %128 = vector.load %arg9[%c0_50, %c0_51, %c0_52] : memref<2x1x64xf32, #tpu.memory_space<vmem>>, vector<1x1x64xf32>
    %129 = vector.shape_cast %128 : vector<1x1x64xf32> to vector<1x64xf32>
    %cst_53 = arith.constant dense<0.000000e+00> : vector<16xf32>
    %130 = vector.multi_reduction <add>, %125, %cst_53 [1] : vector<16x64xf32> to vector<16xf32>
    %131 = vector.shape_cast %130 : vector<16xf32> to vector<16x1xf32>
    %cst_54 = arith.constant 6.400000e+01 : f32
    %132 = vector.broadcast %cst_54 : f32 to vector<16x1xf32>
    %133 = arith.divf %131, %132 : vector<16x1xf32>
    %134 = vector.broadcast %133 : vector<16x1xf32> to vector<16x64xf32>
    %135 = arith.subf %125, %134 : vector<16x64xf32>
    %136 = arith.mulf %135, %135 : vector<16x64xf32>
    %cst_55 = arith.constant dense<0.000000e+00> : vector<16xf32>
    %137 = vector.multi_reduction <add>, %136, %cst_55 [1] : vector<16x64xf32> to vector<16xf32>
    %138 = vector.shape_cast %137 : vector<16xf32> to vector<16x1xf32>
    %cst_56 = arith.constant 6.400000e+01 : f32
    %139 = vector.broadcast %cst_56 : f32 to vector<16x1xf32>
    %140 = arith.divf %138, %139 : vector<16x1xf32>
    %141 = vector.broadcast %133 : vector<16x1xf32> to vector<16x64xf32>
    %142 = arith.subf %125, %141 : vector<16x64xf32>
    %cst_57 = arith.constant 9.99999974E-6 : f32
    %143 = vector.broadcast %cst_57 : f32 to vector<16x1xf32>
    %144 = arith.addf %140, %143 : vector<16x1xf32>
    %145 = math.rsqrt %144 : vector<16x1xf32>
    %146 = vector.broadcast %145 : vector<16x1xf32> to vector<16x64xf32>
    %147 = arith.mulf %142, %146 : vector<16x64xf32>
    %148 = vector.broadcast %127 : vector<1x64xf32> to vector<16x64xf32>
    %149 = arith.mulf %147, %148 : vector<16x64xf32>
    %150 = vector.broadcast %129 : vector<1x64xf32> to vector<16x64xf32>
    %151 = arith.addf %149, %150 : vector<16x64xf32>
    %152 = arith.truncf %151 : vector<16x64xf32> to vector<16x64xbf16>
    %c0_58 = arith.constant 0 : index
    %c0_59 = arith.constant 0 : index
    %c0_60 = arith.constant 0 : index
    %153 = vector.load %arg10[%c0_58, %c0_59, %c0_60] : memref<2x64x256xbf16, #tpu.memory_space<vmem>>, vector<1x64x256xbf16>
    %154 = vector.shape_cast %153 : vector<1x64x256xbf16> to vector<64x256xbf16>
    %cst_61 = arith.constant dense<0.000000e+00> : vector<16x256xf32>
    %155 = tpu.matmul %152, %154, %cst_61 {dimension_numbers = #tpu.dot_dimension_numbers<[1], [0], [0], [1], [0, 0, 1, 1], [], []>} : vector<16x64xbf16>, vector<64x256xbf16>, vector<16x256xf32> -> vector<16x256xf32>
    %c0_62 = arith.constant 0 : index
    %c0_63 = arith.constant 0 : index
    %c0_64 = arith.constant 0 : index
    %156 = vector.load %arg11[%c0_62, %c0_63, %c0_64] : memref<2x1x256xf32, #tpu.memory_space<vmem>>, vector<1x1x256xf32>
    %157 = vector.shape_cast %156 : vector<1x1x256xf32> to vector<1x256xf32>
    %158 = vector.broadcast %157 : vector<1x256xf32> to vector<16x256xf32>
    %159 = arith.addf %155, %158 : vector<16x256xf32>
    %cst_65 = arith.constant 0.000000e+00 : f32
    %160 = vector.broadcast %cst_65 : f32 to vector<16x256xf32>
    %161 = arith.maximumf %159, %160 : vector<16x256xf32>
    %162 = arith.truncf %161 : vector<16x256xf32> to vector<16x256xbf16>
    %c0_66 = arith.constant 0 : index
    %c0_67 = arith.constant 0 : index
    %c0_68 = arith.constant 0 : index
    %163 = vector.load %arg12[%c0_66, %c0_67, %c0_68] : memref<2x256x64xbf16, #tpu.memory_space<vmem>>, vector<1x256x64xbf16>
    %164 = vector.shape_cast %163 : vector<1x256x64xbf16> to vector<256x64xbf16>
    %cst_69 = arith.constant dense<0.000000e+00> : vector<16x64xf32>
    %165 = tpu.matmul %162, %164, %cst_69 {dimension_numbers = #tpu.dot_dimension_numbers<[1], [0], [0], [1], [0, 0, 1, 1], [], []>} : vector<16x256xbf16>, vector<256x64xbf16>, vector<16x64xf32> -> vector<16x64xf32>
    %c0_70 = arith.constant 0 : index
    %c0_71 = arith.constant 0 : index
    %c0_72 = arith.constant 0 : index
    %166 = vector.load %arg13[%c0_70, %c0_71, %c0_72] : memref<2x1x64xf32, #tpu.memory_space<vmem>>, vector<1x1x64xf32>
    %167 = vector.shape_cast %166 : vector<1x1x64xf32> to vector<1x64xf32>
    %168 = vector.broadcast %167 : vector<1x64xf32> to vector<16x64xf32>
    %169 = arith.addf %165, %168 : vector<16x64xf32>
    %170 = arith.addf %125, %169 : vector<16x64xf32>
    %c1 = arith.constant 1 : index
    %c0_73 = arith.constant 0 : index
    %c0_74 = arith.constant 0 : index
    %171 = vector.load %arg3[%c1, %c0_73, %c0_74] : memref<2x1x64xf32, #tpu.memory_space<vmem>>, vector<1x1x64xf32>
    %172 = vector.shape_cast %171 : vector<1x1x64xf32> to vector<1x64xf32>
    %c1_75 = arith.constant 1 : index
    %c0_76 = arith.constant 0 : index
    %c0_77 = arith.constant 0 : index
    %173 = vector.load %arg4[%c1_75, %c0_76, %c0_77] : memref<2x1x64xf32, #tpu.memory_space<vmem>>, vector<1x1x64xf32>
    %174 = vector.shape_cast %173 : vector<1x1x64xf32> to vector<1x64xf32>
    %cst_78 = arith.constant dense<0.000000e+00> : vector<16xf32>
    %175 = vector.multi_reduction <add>, %170, %cst_78 [1] : vector<16x64xf32> to vector<16xf32>
    %176 = vector.shape_cast %175 : vector<16xf32> to vector<16x1xf32>
    %cst_79 = arith.constant 6.400000e+01 : f32
    %177 = vector.broadcast %cst_79 : f32 to vector<16x1xf32>
    %178 = arith.divf %176, %177 : vector<16x1xf32>
    %179 = vector.broadcast %178 : vector<16x1xf32> to vector<16x64xf32>
    %180 = arith.subf %170, %179 : vector<16x64xf32>
    %181 = arith.mulf %180, %180 : vector<16x64xf32>
    %cst_80 = arith.constant dense<0.000000e+00> : vector<16xf32>
    %182 = vector.multi_reduction <add>, %181, %cst_80 [1] : vector<16x64xf32> to vector<16xf32>
    %183 = vector.shape_cast %182 : vector<16xf32> to vector<16x1xf32>
    %cst_81 = arith.constant 6.400000e+01 : f32
    %184 = vector.broadcast %cst_81 : f32 to vector<16x1xf32>
    %185 = arith.divf %183, %184 : vector<16x1xf32>
    %186 = vector.broadcast %178 : vector<16x1xf32> to vector<16x64xf32>
    %187 = arith.subf %170, %186 : vector<16x64xf32>
    %cst_82 = arith.constant 9.99999974E-6 : f32
    %188 = vector.broadcast %cst_82 : f32 to vector<16x1xf32>
    %189 = arith.addf %185, %188 : vector<16x1xf32>
    %190 = math.rsqrt %189 : vector<16x1xf32>
    %191 = vector.broadcast %190 : vector<16x1xf32> to vector<16x64xf32>
    %192 = arith.mulf %187, %191 : vector<16x64xf32>
    %193 = vector.broadcast %172 : vector<1x64xf32> to vector<16x64xf32>
    %194 = arith.mulf %192, %193 : vector<16x64xf32>
    %195 = vector.broadcast %174 : vector<1x64xf32> to vector<16x64xf32>
    %196 = arith.addf %194, %195 : vector<16x64xf32>
    %197 = arith.truncf %196 : vector<16x64xf32> to vector<16x64xbf16>
    %c1_83 = arith.constant 1 : index
    %c0_84 = arith.constant 0 : index
    %c0_85 = arith.constant 0 : index
    %198 = vector.load %arg5[%c1_83, %c0_84, %c0_85] : memref<2x64x192xbf16, #tpu.memory_space<vmem>>, vector<1x64x192xbf16>
    %199 = vector.shape_cast %198 : vector<1x64x192xbf16> to vector<64x192xbf16>
    %cst_86 = arith.constant dense<0.000000e+00> : vector<16x192xf32>
    %200 = tpu.matmul %197, %199, %cst_86 {dimension_numbers = #tpu.dot_dimension_numbers<[1], [0], [0], [1], [0, 0, 1, 1], [], []>} : vector<16x64xbf16>, vector<64x192xbf16>, vector<16x192xf32> -> vector<16x192xf32>
    %201 = vector.extract_strided_slice %200 {offsets = [0, 0], sizes = [16, 16], strides = [1, 1]} : vector<16x192xf32> to vector<16x16xf32>
    %202 = vector.extract_strided_slice %200 {offsets = [0, 64], sizes = [16, 16], strides = [1, 1]} : vector<16x192xf32> to vector<16x16xf32>
    %203 = vector.extract_strided_slice %200 {offsets = [0, 128], sizes = [16, 16], strides = [1, 1]} : vector<16x192xf32> to vector<16x16xf32>
    %204 = tpu.transpose %202, [1, 0] : vector<16x16xf32> -> vector<16x16xf32>
    %cst_87 = arith.constant dense<0.000000e+00> : vector<16x16xf32>
    %205 = tpu.matmul %201, %204, %cst_87 {dimension_numbers = #tpu.dot_dimension_numbers<[1], [0], [0], [1], [0, 0, 1, 1], [], []>} : vector<16x16xf32>, vector<16x16xf32>, vector<16x16xf32> -> vector<16x16xf32>
    %cst_88 = arith.constant 1.250000e-01 : f32
    %206 = vector.broadcast %cst_88 : f32 to vector<16x16xf32>
    %207 = arith.mulf %205, %206 : vector<16x16xf32>
    %208 = arith.addf %207, %9 : vector<16x16xf32>
    %cst_89 = arith.constant dense<0xFF800000> : vector<16xf32>
    %209 = vector.multi_reduction <maximumf>, %208, %cst_89 [1] : vector<16x16xf32> to vector<16xf32>
    %210 = vector.shape_cast %209 : vector<16xf32> to vector<16x1xf32>
    %211 = vector.broadcast %210 : vector<16x1xf32> to vector<16x16xf32>
    %212 = arith.subf %208, %211 : vector<16x16xf32>
    %213 = math.exp %212 : vector<16x16xf32>
    %cst_90 = arith.constant dense<0.000000e+00> : vector<16xf32>
    %214 = vector.multi_reduction <add>, %213, %cst_90 [1] : vector<16x16xf32> to vector<16xf32>
    %215 = vector.shape_cast %214 : vector<16xf32> to vector<16x1xf32>
    %216 = tpu.reciprocal %215 {approx = true} : vector<16x1xf32> -> vector<16x1xf32>
    %217 = vector.broadcast %216 : vector<16x1xf32> to vector<16x16xf32>
    %218 = arith.mulf %213, %217 : vector<16x16xf32>
    %cst_91 = arith.constant dense<0.000000e+00> : vector<16x16xf32>
    %219 = tpu.matmul %218, %203, %cst_91 {dimension_numbers = #tpu.dot_dimension_numbers<[1], [0], [0], [1], [0, 0, 1, 1], [], []>} : vector<16x16xf32>, vector<16x16xf32>, vector<16x16xf32> -> vector<16x16xf32>
    %220 = vector.extract_strided_slice %200 {offsets = [0, 16], sizes = [16, 16], strides = [1, 1]} : vector<16x192xf32> to vector<16x16xf32>
    %221 = vector.extract_strided_slice %200 {offsets = [0, 80], sizes = [16, 16], strides = [1, 1]} : vector<16x192xf32> to vector<16x16xf32>
    %222 = vector.extract_strided_slice %200 {offsets = [0, 144], sizes = [16, 16], strides = [1, 1]} : vector<16x192xf32> to vector<16x16xf32>
    %223 = tpu.transpose %221, [1, 0] : vector<16x16xf32> -> vector<16x16xf32>
    %cst_92 = arith.constant dense<0.000000e+00> : vector<16x16xf32>
    %224 = tpu.matmul %220, %223, %cst_92 {dimension_numbers = #tpu.dot_dimension_numbers<[1], [0], [0], [1], [0, 0, 1, 1], [], []>} : vector<16x16xf32>, vector<16x16xf32>, vector<16x16xf32> -> vector<16x16xf32>
    %cst_93 = arith.constant 1.250000e-01 : f32
    %225 = vector.broadcast %cst_93 : f32 to vector<16x16xf32>
    %226 = arith.mulf %224, %225 : vector<16x16xf32>
    %227 = arith.addf %226, %9 : vector<16x16xf32>
    %cst_94 = arith.constant dense<0xFF800000> : vector<16xf32>
    %228 = vector.multi_reduction <maximumf>, %227, %cst_94 [1] : vector<16x16xf32> to vector<16xf32>
    %229 = vector.shape_cast %228 : vector<16xf32> to vector<16x1xf32>
    %230 = vector.broadcast %229 : vector<16x1xf32> to vector<16x16xf32>
    %231 = arith.subf %227, %230 : vector<16x16xf32>
    %232 = math.exp %231 : vector<16x16xf32>
    %cst_95 = arith.constant dense<0.000000e+00> : vector<16xf32>
    %233 = vector.multi_reduction <add>, %232, %cst_95 [1] : vector<16x16xf32> to vector<16xf32>
    %234 = vector.shape_cast %233 : vector<16xf32> to vector<16x1xf32>
    %235 = tpu.reciprocal %234 {approx = true} : vector<16x1xf32> -> vector<16x1xf32>
    %236 = vector.broadcast %235 : vector<16x1xf32> to vector<16x16xf32>
    %237 = arith.mulf %232, %236 : vector<16x16xf32>
    %cst_96 = arith.constant dense<0.000000e+00> : vector<16x16xf32>
    %238 = tpu.matmul %237, %222, %cst_96 {dimension_numbers = #tpu.dot_dimension_numbers<[1], [0], [0], [1], [0, 0, 1, 1], [], []>} : vector<16x16xf32>, vector<16x16xf32>, vector<16x16xf32> -> vector<16x16xf32>
    %239 = vector.extract_strided_slice %200 {offsets = [0, 32], sizes = [16, 16], strides = [1, 1]} : vector<16x192xf32> to vector<16x16xf32>
    %240 = vector.extract_strided_slice %200 {offsets = [0, 96], sizes = [16, 16], strides = [1, 1]} : vector<16x192xf32> to vector<16x16xf32>
    %241 = vector.extract_strided_slice %200 {offsets = [0, 160], sizes = [16, 16], strides = [1, 1]} : vector<16x192xf32> to vector<16x16xf32>
    %242 = tpu.transpose %240, [1, 0] : vector<16x16xf32> -> vector<16x16xf32>
    %cst_97 = arith.constant dense<0.000000e+00> : vector<16x16xf32>
    %243 = tpu.matmul %239, %242, %cst_97 {dimension_numbers = #tpu.dot_dimension_numbers<[1], [0], [0], [1], [0, 0, 1, 1], [], []>} : vector<16x16xf32>, vector<16x16xf32>, vector<16x16xf32> -> vector<16x16xf32>
    %cst_98 = arith.constant 1.250000e-01 : f32
    %244 = vector.broadcast %cst_98 : f32 to vector<16x16xf32>
    %245 = arith.mulf %243, %244 : vector<16x16xf32>
    %246 = arith.addf %245, %9 : vector<16x16xf32>
    %cst_99 = arith.constant dense<0xFF800000> : vector<16xf32>
    %247 = vector.multi_reduction <maximumf>, %246, %cst_99 [1] : vector<16x16xf32> to vector<16xf32>
    %248 = vector.shape_cast %247 : vector<16xf32> to vector<16x1xf32>
    %249 = vector.broadcast %248 : vector<16x1xf32> to vector<16x16xf32>
    %250 = arith.subf %246, %249 : vector<16x16xf32>
    %251 = math.exp %250 : vector<16x16xf32>
    %cst_100 = arith.constant dense<0.000000e+00> : vector<16xf32>
    %252 = vector.multi_reduction <add>, %251, %cst_100 [1] : vector<16x16xf32> to vector<16xf32>
    %253 = vector.shape_cast %252 : vector<16xf32> to vector<16x1xf32>
    %254 = tpu.reciprocal %253 {approx = true} : vector<16x1xf32> -> vector<16x1xf32>
    %255 = vector.broadcast %254 : vector<16x1xf32> to vector<16x16xf32>
    %256 = arith.mulf %251, %255 : vector<16x16xf32>
    %cst_101 = arith.constant dense<0.000000e+00> : vector<16x16xf32>
    %257 = tpu.matmul %256, %241, %cst_101 {dimension_numbers = #tpu.dot_dimension_numbers<[1], [0], [0], [1], [0, 0, 1, 1], [], []>} : vector<16x16xf32>, vector<16x16xf32>, vector<16x16xf32> -> vector<16x16xf32>
    %258 = vector.extract_strided_slice %200 {offsets = [0, 48], sizes = [16, 16], strides = [1, 1]} : vector<16x192xf32> to vector<16x16xf32>
    %259 = vector.extract_strided_slice %200 {offsets = [0, 112], sizes = [16, 16], strides = [1, 1]} : vector<16x192xf32> to vector<16x16xf32>
    %260 = vector.extract_strided_slice %200 {offsets = [0, 176], sizes = [16, 16], strides = [1, 1]} : vector<16x192xf32> to vector<16x16xf32>
    %261 = tpu.transpose %259, [1, 0] : vector<16x16xf32> -> vector<16x16xf32>
    %cst_102 = arith.constant dense<0.000000e+00> : vector<16x16xf32>
    %262 = tpu.matmul %258, %261, %cst_102 {dimension_numbers = #tpu.dot_dimension_numbers<[1], [0], [0], [1], [0, 0, 1, 1], [], []>} : vector<16x16xf32>, vector<16x16xf32>, vector<16x16xf32> -> vector<16x16xf32>
    %cst_103 = arith.constant 1.250000e-01 : f32
    %263 = vector.broadcast %cst_103 : f32 to vector<16x16xf32>
    %264 = arith.mulf %262, %263 : vector<16x16xf32>
    %265 = arith.addf %264, %9 : vector<16x16xf32>
    %cst_104 = arith.constant dense<0xFF800000> : vector<16xf32>
    %266 = vector.multi_reduction <maximumf>, %265, %cst_104 [1] : vector<16x16xf32> to vector<16xf32>
    %267 = vector.shape_cast %266 : vector<16xf32> to vector<16x1xf32>
    %268 = vector.broadcast %267 : vector<16x1xf32> to vector<16x16xf32>
    %269 = arith.subf %265, %268 : vector<16x16xf32>
    %270 = math.exp %269 : vector<16x16xf32>
    %cst_105 = arith.constant dense<0.000000e+00> : vector<16xf32>
    %271 = vector.multi_reduction <add>, %270, %cst_105 [1] : vector<16x16xf32> to vector<16xf32>
    %272 = vector.shape_cast %271 : vector<16xf32> to vector<16x1xf32>
    %273 = tpu.reciprocal %272 {approx = true} : vector<16x1xf32> -> vector<16x1xf32>
    %274 = vector.broadcast %273 : vector<16x1xf32> to vector<16x16xf32>
    %275 = arith.mulf %270, %274 : vector<16x16xf32>
    %cst_106 = arith.constant dense<0.000000e+00> : vector<16x16xf32>
    %276 = tpu.matmul %275, %260, %cst_106 {dimension_numbers = #tpu.dot_dimension_numbers<[1], [0], [0], [1], [0, 0, 1, 1], [], []>} : vector<16x16xf32>, vector<16x16xf32>, vector<16x16xf32> -> vector<16x16xf32>
    %277 = tpu.concatenate %219, %238, %257, %276 in 1 : vector<16x16xf32>, vector<16x16xf32>, vector<16x16xf32>, vector<16x16xf32> -> vector<16x64xf32>
    %278 = arith.truncf %277 : vector<16x64xf32> to vector<16x64xbf16>
    %c1_107 = arith.constant 1 : index
    %c0_108 = arith.constant 0 : index
    %c0_109 = arith.constant 0 : index
    %279 = vector.load %arg6[%c1_107, %c0_108, %c0_109] : memref<2x64x64xbf16, #tpu.memory_space<vmem>>, vector<1x64x64xbf16>
    %280 = vector.shape_cast %279 : vector<1x64x64xbf16> to vector<64x64xbf16>
    %cst_110 = arith.constant dense<0.000000e+00> : vector<16x64xf32>
    %281 = tpu.matmul %278, %280, %cst_110 {dimension_numbers = #tpu.dot_dimension_numbers<[1], [0], [0], [1], [0, 0, 1, 1], [], []>} : vector<16x64xbf16>, vector<64x64xbf16>, vector<16x64xf32> -> vector<16x64xf32>
    %c1_111 = arith.constant 1 : index
    %c0_112 = arith.constant 0 : index
    %c0_113 = arith.constant 0 : index
    %282 = vector.load %arg7[%c1_111, %c0_112, %c0_113] : memref<2x1x64xf32, #tpu.memory_space<vmem>>, vector<1x1x64xf32>
    %283 = vector.shape_cast %282 : vector<1x1x64xf32> to vector<1x64xf32>
    %284 = vector.broadcast %283 : vector<1x64xf32> to vector<16x64xf32>
    %285 = arith.addf %281, %284 : vector<16x64xf32>
    %286 = arith.addf %170, %285 : vector<16x64xf32>
    %c1_114 = arith.constant 1 : index
    %c0_115 = arith.constant 0 : index
    %c0_116 = arith.constant 0 : index
    %287 = vector.load %arg8[%c1_114, %c0_115, %c0_116] : memref<2x1x64xf32, #tpu.memory_space<vmem>>, vector<1x1x64xf32>
    %288 = vector.shape_cast %287 : vector<1x1x64xf32> to vector<1x64xf32>
    %c1_117 = arith.constant 1 : index
    %c0_118 = arith.constant 0 : index
    %c0_119 = arith.constant 0 : index
    %289 = vector.load %arg9[%c1_117, %c0_118, %c0_119] : memref<2x1x64xf32, #tpu.memory_space<vmem>>, vector<1x1x64xf32>
    %290 = vector.shape_cast %289 : vector<1x1x64xf32> to vector<1x64xf32>
    %cst_120 = arith.constant dense<0.000000e+00> : vector<16xf32>
    %291 = vector.multi_reduction <add>, %286, %cst_120 [1] : vector<16x64xf32> to vector<16xf32>
    %292 = vector.shape_cast %291 : vector<16xf32> to vector<16x1xf32>
    %cst_121 = arith.constant 6.400000e+01 : f32
    %293 = vector.broadcast %cst_121 : f32 to vector<16x1xf32>
    %294 = arith.divf %292, %293 : vector<16x1xf32>
    %295 = vector.broadcast %294 : vector<16x1xf32> to vector<16x64xf32>
    %296 = arith.subf %286, %295 : vector<16x64xf32>
    %297 = arith.mulf %296, %296 : vector<16x64xf32>
    %cst_122 = arith.constant dense<0.000000e+00> : vector<16xf32>
    %298 = vector.multi_reduction <add>, %297, %cst_122 [1] : vector<16x64xf32> to vector<16xf32>
    %299 = vector.shape_cast %298 : vector<16xf32> to vector<16x1xf32>
    %cst_123 = arith.constant 6.400000e+01 : f32
    %300 = vector.broadcast %cst_123 : f32 to vector<16x1xf32>
    %301 = arith.divf %299, %300 : vector<16x1xf32>
    %302 = vector.broadcast %294 : vector<16x1xf32> to vector<16x64xf32>
    %303 = arith.subf %286, %302 : vector<16x64xf32>
    %cst_124 = arith.constant 9.99999974E-6 : f32
    %304 = vector.broadcast %cst_124 : f32 to vector<16x1xf32>
    %305 = arith.addf %301, %304 : vector<16x1xf32>
    %306 = math.rsqrt %305 : vector<16x1xf32>
    %307 = vector.broadcast %306 : vector<16x1xf32> to vector<16x64xf32>
    %308 = arith.mulf %303, %307 : vector<16x64xf32>
    %309 = vector.broadcast %288 : vector<1x64xf32> to vector<16x64xf32>
    %310 = arith.mulf %308, %309 : vector<16x64xf32>
    %311 = vector.broadcast %290 : vector<1x64xf32> to vector<16x64xf32>
    %312 = arith.addf %310, %311 : vector<16x64xf32>
    %313 = arith.truncf %312 : vector<16x64xf32> to vector<16x64xbf16>
    %c1_125 = arith.constant 1 : index
    %c0_126 = arith.constant 0 : index
    %c0_127 = arith.constant 0 : index
    %314 = vector.load %arg10[%c1_125, %c0_126, %c0_127] : memref<2x64x256xbf16, #tpu.memory_space<vmem>>, vector<1x64x256xbf16>
    %315 = vector.shape_cast %314 : vector<1x64x256xbf16> to vector<64x256xbf16>
    %cst_128 = arith.constant dense<0.000000e+00> : vector<16x256xf32>
    %316 = tpu.matmul %313, %315, %cst_128 {dimension_numbers = #tpu.dot_dimension_numbers<[1], [0], [0], [1], [0, 0, 1, 1], [], []>} : vector<16x64xbf16>, vector<64x256xbf16>, vector<16x256xf32> -> vector<16x256xf32>
    %c1_129 = arith.constant 1 : index
    %c0_130 = arith.constant 0 : index
    %c0_131 = arith.constant 0 : index
    %317 = vector.load %arg11[%c1_129, %c0_130, %c0_131] : memref<2x1x256xf32, #tpu.memory_space<vmem>>, vector<1x1x256xf32>
    %318 = vector.shape_cast %317 : vector<1x1x256xf32> to vector<1x256xf32>
    %319 = vector.broadcast %318 : vector<1x256xf32> to vector<16x256xf32>
    %320 = arith.addf %316, %319 : vector<16x256xf32>
    %cst_132 = arith.constant 0.000000e+00 : f32
    %321 = vector.broadcast %cst_132 : f32 to vector<16x256xf32>
    %322 = arith.maximumf %320, %321 : vector<16x256xf32>
    %323 = arith.truncf %322 : vector<16x256xf32> to vector<16x256xbf16>
    %c1_133 = arith.constant 1 : index
    %c0_134 = arith.constant 0 : index
    %c0_135 = arith.constant 0 : index
    %324 = vector.load %arg12[%c1_133, %c0_134, %c0_135] : memref<2x256x64xbf16, #tpu.memory_space<vmem>>, vector<1x256x64xbf16>
    %325 = vector.shape_cast %324 : vector<1x256x64xbf16> to vector<256x64xbf16>
    %cst_136 = arith.constant dense<0.000000e+00> : vector<16x64xf32>
    %326 = tpu.matmul %323, %325, %cst_136 {dimension_numbers = #tpu.dot_dimension_numbers<[1], [0], [0], [1], [0, 0, 1, 1], [], []>} : vector<16x256xbf16>, vector<256x64xbf16>, vector<16x64xf32> -> vector<16x64xf32>
    %c1_137 = arith.constant 1 : index
    %c0_138 = arith.constant 0 : index
    %c0_139 = arith.constant 0 : index
    %327 = vector.load %arg13[%c1_137, %c0_138, %c0_139] : memref<2x1x64xf32, #tpu.memory_space<vmem>>, vector<1x1x64xf32>
    %328 = vector.shape_cast %327 : vector<1x1x64xf32> to vector<1x64xf32>
    %329 = vector.broadcast %328 : vector<1x64xf32> to vector<16x64xf32>
    %330 = arith.addf %326, %329 : vector<16x64xf32>
    %331 = arith.addf %286, %330 : vector<16x64xf32>
    %c0_140 = arith.constant 0 : index
    %c0_141 = arith.constant 0 : index
    %332 = vector.load %arg14[%c0_140, %c0_141] : memref<1x64xf32, #tpu.memory_space<vmem>>, vector<1x64xf32>
    %c0_142 = arith.constant 0 : index
    %c0_143 = arith.constant 0 : index
    %333 = vector.load %arg15[%c0_142, %c0_143] : memref<1x64xf32, #tpu.memory_space<vmem>>, vector<1x64xf32>
    %cst_144 = arith.constant dense<0.000000e+00> : vector<16xf32>
    %334 = vector.multi_reduction <add>, %331, %cst_144 [1] : vector<16x64xf32> to vector<16xf32>
    %335 = vector.shape_cast %334 : vector<16xf32> to vector<16x1xf32>
    %cst_145 = arith.constant 6.400000e+01 : f32
    %336 = vector.broadcast %cst_145 : f32 to vector<16x1xf32>
    %337 = arith.divf %335, %336 : vector<16x1xf32>
    %338 = vector.broadcast %337 : vector<16x1xf32> to vector<16x64xf32>
    %339 = arith.subf %331, %338 : vector<16x64xf32>
    %340 = arith.mulf %339, %339 : vector<16x64xf32>
    %cst_146 = arith.constant dense<0.000000e+00> : vector<16xf32>
    %341 = vector.multi_reduction <add>, %340, %cst_146 [1] : vector<16x64xf32> to vector<16xf32>
    %342 = vector.shape_cast %341 : vector<16xf32> to vector<16x1xf32>
    %cst_147 = arith.constant 6.400000e+01 : f32
    %343 = vector.broadcast %cst_147 : f32 to vector<16x1xf32>
    %344 = arith.divf %342, %343 : vector<16x1xf32>
    %345 = vector.broadcast %337 : vector<16x1xf32> to vector<16x64xf32>
    %346 = arith.subf %331, %345 : vector<16x64xf32>
    %cst_148 = arith.constant 9.99999974E-6 : f32
    %347 = vector.broadcast %cst_148 : f32 to vector<16x1xf32>
    %348 = arith.addf %344, %347 : vector<16x1xf32>
    %349 = math.rsqrt %348 : vector<16x1xf32>
    %350 = vector.broadcast %349 : vector<16x1xf32> to vector<16x64xf32>
    %351 = arith.mulf %346, %350 : vector<16x64xf32>
    %352 = vector.broadcast %332 : vector<1x64xf32> to vector<16x64xf32>
    %353 = arith.mulf %351, %352 : vector<16x64xf32>
    %354 = vector.broadcast %333 : vector<1x64xf32> to vector<16x64xf32>
    %355 = arith.addf %353, %354 : vector<16x64xf32>
    %356 = arith.truncf %355 : vector<16x64xf32> to vector<16x64xbf16>
    %c0_149 = arith.constant 0 : index
    %c0_150 = arith.constant 0 : index
    %357 = vector.load %arg16[%c0_149, %c0_150] : memref<64x128xbf16, #tpu.memory_space<vmem>>, vector<64x128xbf16>
    %cst_151 = arith.constant dense<0.000000e+00> : vector<16x128xf32>
    %358 = tpu.matmul %356, %357, %cst_151 {dimension_numbers = #tpu.dot_dimension_numbers<[1], [0], [0], [1], [0, 0, 1, 1], [], []>} : vector<16x64xbf16>, vector<64x128xbf16>, vector<16x128xf32> -> vector<16x128xf32>
    %c0_152 = arith.constant 0 : index
    %c0_153 = arith.constant 0 : index
    %359 = vector.load %arg17[%c0_152, %c0_153] : memref<1x128xf32, #tpu.memory_space<vmem>>, vector<1x128xf32>
    %360 = vector.broadcast %359 : vector<1x128xf32> to vector<16x128xf32>
    %361 = arith.addf %358, %360 : vector<16x128xf32>
    %c0_154 = arith.constant 0 : index
    %c0_155 = arith.constant 0 : index
    %c0_156 = arith.constant 0 : index
    %362 = vector.load %arg18[%c0_154, %c0_155, %c0_156] : memref<1x16x128xf32, #tpu.memory_space<vmem>>, vector<1x16x128xf32>
    %363 = vector.shape_cast %362 : vector<1x16x128xf32> to vector<16x128xf32>
    %364 = vector.shape_cast %361 : vector<16x128xf32> to vector<1x16x128xf32>
    tpu.vector_store %arg18[%c0_154, %c0_155, %c0_156], %364 {strides = array<i32>} : memref<1x16x128xf32, #tpu.memory_space<vmem>>, vector<1x16x128xf32>,
    return
  }
  func.func @transform_0(%arg0: i32) -> (i32, i32, i32) {
    %c0_i32 = arith.constant 0 : i32
    %c0_i32_0 = arith.constant 0 : i32
    %c0_i32_1 = arith.constant 0 : i32
    return %arg0, %c0_i32, %c0_i32_0 : i32, i32, i32
  }
  func.func @transform_1(%arg0: i32) -> (i32, i32) {
    %c0_i32 = arith.constant 0 : i32
    %c0_i32_0 = arith.constant 0 : i32
    %c0_i32_1 = arith.constant 0 : i32
    return %c0_i32, %c0_i32_0 : i32, i32
  }
  func.func @transform_2(%arg0: i32) -> (i32, i32, i32) {
    %c0_i32 = arith.constant 0 : i32
    %c0_i32_0 = arith.constant 0 : i32
    %c0_i32_1 = arith.constant 0 : i32
    %c0_i32_2 = arith.constant 0 : i32
    return %c0_i32, %c0_i32_0, %c0_i32_1 : i32, i32, i32
  }
  func.func @transform_3(%arg0: i32) -> (i32, i32, i32) {
    %c0_i32 = arith.constant 0 : i32
    %c0_i32_0 = arith.constant 0 : i32
    %c0_i32_1 = arith.constant 0 : i32
    %c0_i32_2 = arith.constant 0 : i32
    return %c0_i32, %c0_i32_0, %c0_i32_1 : i32, i32, i32
  }
  func.func @transform_4(%arg0: i32) -> (i32, i32, i32) {
    %c0_i32 = arith.constant 0 : i32
    %c0_i32_0 = arith.constant 0 : i32
    %c0_i32_1 = arith.constant 0 : i32
    %c0_i32_2 = arith.constant 0 : i32
    return %c0_i32, %c0_i32_0, %c0_i32_1 : i32, i32, i32
  }
  func.func @transform_5(%arg0: i32) -> (i32, i32, i32) {
    %c0_i32 = arith.constant 0 : i32
    %c0_i32_0 = arith.constant 0 : i32
    %c0_i32_1 = arith.constant 0 : i32
    %c0_i32_2 = arith.constant 0 : i32
    return %c0_i32, %c0_i32_0, %c0_i32_1 : i32, i32, i32
  }
  func.func @transform_6(%arg0: i32) -> (i32, i32, i32) {
    %c0_i32 = arith.constant 0 : i32
    %c0_i32_0 = arith.constant 0 : i32
    %c0_i32_1 = arith.constant 0 : i32
    %c0_i32_2 = arith.constant 0 : i32
    return %c0_i32, %c0_i32_0, %c0_i32_1 : i32, i32, i32
  }
  func.func @transform_7(%arg0: i32) -> (i32, i32, i32) {
    %c0_i32 = arith.constant 0 : i32
    %c0_i32_0 = arith.constant 0 : i32
    %c0_i32_1 = arith.constant 0 : i32
    %c0_i32_2 = arith.constant 0 : i32
    return %c0_i32, %c0_i32_0, %c0_i32_1 : i32, i32, i32
  }
  func.func @transform_8(%arg0: i32) -> (i32, i32, i32) {
    %c0_i32 = arith.constant 0 : i32
    %c0_i32_0 = arith.constant 0 : i32
    %c0_i32_1 = arith.constant 0 : i32
    %c0_i32_2 = arith.constant 0 : i32
    return %c0_i32, %c0_i32_0, %c0_i32_1 : i32, i32, i32
  }
  func.func @transform_9(%arg0: i32) -> (i32, i32, i32) {
    %c0_i32 = arith.constant 0 : i32
    %c0_i32_0 = arith.constant 0 : i32
    %c0_i32_1 = arith.constant 0 : i32
    %c0_i32_2 = arith.constant 0 : i32
    return %c0_i32, %c0_i32_0, %c0_i32_1 : i32, i32, i32
  }
  func.func @transform_10(%arg0: i32) -> (i32, i32, i32) {
    %c0_i32 = arith.constant 0 : i32
    %c0_i32_0 = arith.constant 0 : i32
    %c0_i32_1 = arith.constant 0 : i32
    %c0_i32_2 = arith.constant 0 : i32
    return %c0_i32, %c0_i32_0, %c0_i32_1 : i32, i32, i32
  }
  func.func @transform_11(%arg0: i32) -> (i32, i32, i32) {
    %c0_i32 = arith.constant 0 : i32
    %c0_i32_0 = arith.constant 0 : i32
    %c0_i32_1 = arith.constant 0 : i32
    %c0_i32_2 = arith.constant 0 : i32
    return %c0_i32, %c0_i32_0, %c0_i32_1 : i32, i32, i32
  }
  func.func @transform_12(%arg0: i32) -> (i32, i32, i32) {
    %c0_i32 = arith.constant 0 : i32
    %c0_i32_0 = arith.constant 0 : i32
    %c0_i32_1 = arith.constant 0 : i32
    %c0_i32_2 = arith.constant 0 : i32
    return %c0_i32, %c0_i32_0, %c0_i32_1 : i32, i32, i32
  }
  func.func @transform_13(%arg0: i32) -> (i32, i32) {
    %c0_i32 = arith.constant 0 : i32
    %c0_i32_0 = arith.constant 0 : i32
    %c0_i32_1 = arith.constant 0 : i32
    return %c0_i32, %c0_i32_0 : i32, i32
  }
  func.func @transform_14(%arg0: i32) -> (i32, i32) {
    %c0_i32 = arith.constant 0 : i32
    %c0_i32_0 = arith.constant 0 : i32
    %c0_i32_1 = arith.constant 0 : i32
    return %c0_i32, %c0_i32_0 : i32, i32
  }
  func.func @transform_15(%arg0: i32) -> (i32, i32) {
    %c0_i32 = arith.constant 0 : i32
    %c0_i32_0 = arith.constant 0 : i32
    %c0_i32_1 = arith.constant 0 : i32
    return %c0_i32, %c0_i32_0 : i32, i32
  }
  func.func @transform_16(%arg0: i32) -> (i32, i32) {
    %c0_i32 = arith.constant 0 : i32
    %c0_i32_0 = arith.constant 0 : i32
    %c0_i32_1 = arith.constant 0 : i32
    return %c0_i32, %c0_i32_0 : i32, i32
  }
  func.func @transform_17(%arg0: i32) -> (i32, i32, i32) {
    %c0_i32 = arith.constant 0 : i32
    %c0_i32_0 = arith.constant 0 : i32
    %c0_i32_1 = arith.constant 0 : i32
    return %arg0, %c0_i32, %c0_i32_0 : i32, i32, i32
  }
}

</mosaic_0001>

<llo_original>
// kernel: bigram_lm_forward.1
$region0: #{bigram_lm_forward.1}
  #allocation0 [shape = 'u32[]', space=smem, size = 0x4, offset = 0x4, fixed_abs, tag = 'smem constant byte address 0x4 - core index']
  #allocation1 [shape = 'u32[144,128]{1,0:T(1,128)}', space=vmem, size = 0x12000, scoped, tag = 'internal scratch']
  %s0 = inlined_call_operand.vmem [shape: f32[2,16,64], index: 0, kind: input, shape index: {}]
  %s1 = inlined_call_operand.vmem [shape: f32[16,64], index: 1, kind: input, shape index: {}]
  %s2 = inlined_call_operand.vmem [shape: f32[2,1,64], index: 2, kind: input, shape index: {}]
  %s3 = inlined_call_operand.vmem [shape: f32[2,1,64], index: 3, kind: input, shape index: {}]
  %s4 = inlined_call_operand.vmem [shape: bf16[2,64,192], index: 4, kind: input, shape index: {}]
  %s5 = inlined_call_operand.vmem [shape: bf16[2,64,64], index: 5, kind: input, shape index: {}]
  %s6 = inlined_call_operand.vmem [shape: f32[2,1,64], index: 6, kind: input, shape index: {}]
  %s7 = inlined_call_operand.vmem [shape: f32[2,1,64], index: 7, kind: input, shape index: {}]
  %s8 = inlined_call_operand.vmem [shape: f32[2,1,64], index: 8, kind: input, shape index: {}]
  %s9 = inlined_call_operand.vmem [shape: bf16[2,64,256], index: 9, kind: input, shape index: {}]
  %s10 = inlined_call_operand.vmem [shape: f32[2,1,256], index: 10, kind: input, shape index: {}]
  %s11 = inlined_call_operand.vmem [shape: bf16[2,256,64], index: 11, kind: input, shape index: {}]
  %s12 = inlined_call_operand.vmem [shape: f32[2,1,64], index: 12, kind: input, shape index: {}]
  %s13 = inlined_call_operand.vmem [shape: f32[1,64], index: 13, kind: input, shape index: {}]
  %s14 = inlined_call_operand.vmem [shape: f32[1,64], index: 14, kind: input, shape index: {}]
  %s15 = inlined_call_operand.vmem [shape: bf16[64,128], index: 15, kind: input, shape index: {}]
  %s16 = inlined_call_operand.vmem [shape: f32[1,128], index: 16, kind: input, shape index: {}]
  %s17 = inlined_call_operand.vmem [shape: f32[2,16,128], index: 17, kind: output, shape index: {}]
  %s18 = sld [smem:[#allocation0]]
  $region101: #{bigram_lm_forward.1} parent=0
    _
  %s20 = ssub.s32 1, %s18
  %s21 = scalar_select 0, %s20, %s18
  loop: start=0, step=1, limit=4
  $region2: #{bigram_lm_forward.1} parent=0 // loop_pre_header
    _
  $region3: #{bigram_lm_forward.1} parent=0 // loop_header
    %s23 = sphi 0, %s27
    %p24 = scmp.ge.s32.totalorder %s23, 4
    %s33 = sphi 0, %s35
    %s36 = sphi 0, %s33
    %s37 = sphi 0, %s36
    %s53 = sphi 0, %s37
    %s57 = sphi 0, %s57
    %s59 = sphi 0, %s57
    %s60 = sphi 0, %s59
    %s74 = sphi 0, %s60
    %s78 = sphi 0, %s78
    %s80 = sphi 0, %s78
    %s81 = sphi 0, %s80
    %s95 = sphi 0, %s81
    %s99 = sphi 0, %s99
    %s101 = sphi 0, %s99
    %s102 = sphi 0, %s101
    %s116 = sphi 0, %s102
    %s120 = sphi 0, %s120
    %s122 = sphi 0, %s120
    %s123 = sphi 0, %s122
    %s137 = sphi 0, %s123
    %s141 = sphi 0, %s141
    %s143 = sphi 0, %s141
    %s144 = sphi 0, %s143
    %s158 = sphi 0, %s144
    %s162 = sphi 0, %s162
    %s164 = sphi 0, %s162
    %s165 = sphi 0, %s164
    %s179 = sphi 0, %s165
    %s183 = sphi 0, %s183
    %s185 = sphi 0, %s183
    %s186 = sphi 0, %s185
    %s200 = sphi 0, %s186
    %s204 = sphi 0, %s204
    %s206 = sphi 0, %s204
    %s207 = sphi 0, %s206
    %s221 = sphi 0, %s207
    %s225 = sphi 0, %s225
    %s227 = sphi 0, %s225
    %s228 = sphi 0, %s227
    %s242 = sphi 0, %s228
    %s246 = sphi 0, %s246
    %s248 = sphi 0, %s246
    %s249 = sphi 0, %s248
    %s263 = sphi 0, %s249
    %s267 = sphi 0, %s267
    %s269 = sphi 0, %s267
    %s270 = sphi 0, %s269
    %s284 = sphi 0, %s270
    %s288 = sphi 0, %s288
    %s290 = sphi 0, %s288
    %s291 = sphi 0, %s290
    %s305 = sphi 0, %s291
    %s309 = sphi 0, %s309
    %s311 = sphi 0, %s309
    %s312 = sphi 0, %s311
    %s326 = sphi 0, %s312
    %s330 = sphi 0, %s330
    %s332 = sphi 0, %s330
    %s333 = sphi 0, %s332
    %s347 = sphi 0, %s333
    %s351 = sphi 0, %s351
    %s353 = sphi 0, %s351
    %s354 = sphi 0, %s353
    %s368 = sphi 0, %s354
    %s372 = sphi 0, %s372
    %s374 = sphi 0, %s372
    %s375 = sphi 0, %s374
    %s389 = sphi 0, %s375
    %s395 = sphi 0, %s397
    %s398 = sphi 0, %s395
    %s399 = sphi 0, %s398
    %s415 = sphi 0, %s399
  $region4: #{bigram_lm_forward.1} parent=0 // loop_header_branch
    %26 = sbr.rel (%p24) target = $region8
  $region5: #{bigram_lm_forward.1} parent=0 // loop_body
    %s28 = ssub.s32 %s23, 1
    %s29 = ssub.s32 %s23, 2
    %s30 = sadd.s32 %s23, 1
    %s31 = ssub.s32 %s23, %s30
    %p32 = scmp.eq.s32.totalorder %s31, 0
    %s34 = sadd.s32 %s33, 1
    %s35 = scalar_select %p32, %s33, %s34
    %p38 = pneg %p32
    %p39 = scmp.eq.s32.totalorder %s23, 1
    %p40 = por %p38, %p39
    %p41 = scmp.ne.s32.totalorder %s33, %s36
    %p42 = scmp.eq.s32.totalorder %s23, 0
    %p43 = por %p41, %p42
    %p44 = scmp.ne.s32.totalorder %s33, %s36
    %p45 = scmp.eq.s32.totalorder %s28, 1
    %p46 = por %p44, %p45
    %p47 = scmp.ne.s32.totalorder %s36, %s37
    %p48 = scmp.eq.s32.totalorder %s28, 0
    %p49 = por %p47, %p48
    %p50 = scmp.ne.s32.totalorder %s36, %s37
    %p51 = scmp.eq.s32.totalorder %s29, 1
    %p52 = por %p50, %p51
    %p54 = scmp.ne.s32.totalorder %s37, %s53
    %p55 = scmp.eq.s32.totalorder %s29, 0
    %p56 = por %p54, %p55
    %s58 = sadd.s32 %s57, 1
    %p61 = scmp.eq.s32.totalorder %s23, 1
    %p62 = scmp.ne.s32.totalorder %s57, %s59
    %p63 = scmp.eq.s32.totalorder %s23, 0
    %p64 = por %p62, %p63
    %p65 = scmp.ne.s32.totalorder %s57, %s59
    %p66 = scmp.eq.s32.totalorder %s28, 1
    %p67 = por %p65, %p66
    %p68 = scmp.ne.s32.totalorder %s59, %s60
    %p69 = scmp.eq.s32.totalorder %s28, 0
    %p70 = por %p68, %p69
    %p71 = scmp.ne.s32.totalorder %s59, %s60
    %p72 = scmp.eq.s32.totalorder %s29, 1
    %p73 = por %p71, %p72
    %p75 = scmp.ne.s32.totalorder %s60, %s74
    %p76 = scmp.eq.s32.totalorder %s29, 0
    %p77 = por %p75, %p76
    %s79 = sadd.s32 %s78, 1
    %p82 = scmp.eq.s32.totalorder %s23, 1
    %p83 = scmp.ne.s32.totalorder %s78, %s80
    %p84 = scmp.eq.s32.totalorder %s23, 0
    %p85 = por %p83, %p84
    %p86 = scmp.ne.s32.totalorder %s78, %s80
    %p87 = scmp.eq.s32.totalorder %s28, 1
    %p88 = por %p86, %p87
    %p89 = scmp.ne.s32.totalorder %s80, %s81
    %p90 = scmp.eq.s32.totalorder %s28, 0
    %p91 = por %p89, %p90
    %p92 = scmp.ne.s32.totalorder %s80, %s81
    %p93 = scmp.eq.s32.totalorder %s29, 1
    %p94 = por %p92, %p93
    %p96 = scmp.ne.s32.totalorder %s81, %s95
    %p97 = scmp.eq.s32.totalorder %s29, 0
    %p98 = por %p96, %p97
    %s100 = sadd.s32 %s99, 1
    %p103 = scmp.eq.s32.totalorder %s23, 1
    %p104 = scmp.ne.s32.totalorder %s99, %s101
    %p105 = scmp.eq.s32.totalorder %s23, 0
    %p106 = por %p104, %p105
    %p107 = scmp.ne.s32.totalorder %s99, %s101
    %p108 = scmp.eq.s32.totalorder %s28, 1
    %p109 = por %p107, %p108
    %p110 = scmp.ne.s32.totalorder %s101, %s102
    %p111 = scmp.eq.s32.totalorder %s28, 0
    %p112 = por %p110, %p111
    %p113 = scmp.ne.s32.totalorder %s101, %s102
    %p114 = scmp.eq.s32.totalorder %s29, 1
    %p115 = por %p113, %p114
    %p117 = scmp.ne.s32.totalorder %s102, %s116
    %p118 = scmp.eq.s32.totalorder %s29, 0
    %p119 = por %p117, %p118
    %s121 = sadd.s32 %s120, 1
    %p124 = scmp.eq.s32.totalorder %s23, 1
    %p125 = scmp.ne.s32.totalorder %s120, %s122
    %p126 = scmp.eq.s32.totalorder %s23, 0
    %p127 = por %p125, %p126
    %p128 = scmp.ne.s32.totalorder %s120, %s122
    %p129 = scmp.eq.s32.totalorder %s28, 1
    %p130 = por %p128, %p129
    %p131 = scmp.ne.s32.totalorder %s122, %s123
    %p132 = scmp.eq.s32.totalorder %s28, 0
    %p133 = por %p131, %p132
    %p134 = scmp.ne.s32.totalorder %s122, %s123
    %p135 = scmp.eq.s32.totalorder %s29, 1
    %p136 = por %p134, %p135
    %p138 = scmp.ne.s32.totalorder %s123, %s137
    %p139 = scmp.eq.s32.totalorder %s29, 0
    %p140 = por %p138, %p139
    %s142 = sadd.s32 %s141, 1
    %p145 = scmp.eq.s32.totalorder %s23, 1
    %p146 = scmp.ne.s32.totalorder %s141, %s143
    %p147 = scmp.eq.s32.totalorder %s23, 0
    %p148 = por %p146, %p147
    %p149 = scmp.ne.s32.totalorder %s141, %s143
    %p150 = scmp.eq.s32.totalorder %s28, 1
    %p151 = por %p149, %p150
    %p152 = scmp.ne.s32.totalorder %s143, %s144
    %p153 = scmp.eq.s32.totalorder %s28, 0
    %p154 = por %p152, %p153
    %p155 = scmp.ne.s32.totalorder %s143, %s144
    %p156 = scmp.eq.s32.totalorder %s29, 1
    %p157 = por %p155, %p156
    %p159 = scmp.ne.s32.totalorder %s144, %s158
    %p160 = scmp.eq.s32.totalorder %s29, 0
    %p161 = por %p159, %p160
    %s163 = sadd.s32 %s162, 1
    %p166 = scmp.eq.s32.totalorder %s23, 1
    %p167 = scmp.ne.s32.totalorder %s162, %s164
    %p168 = scmp.eq.s32.totalorder %s23, 0
    %p169 = por %p167, %p168
    %p170 = scmp.ne.s32.totalorder %s162, %s164
    %p171 = scmp.eq.s32.totalorder %s28, 1
    %p172 = por %p170, %p171
    %p173 = scmp.ne.s32.totalorder %s164, %s165
    %p174 = scmp.eq.s32.totalorder %s28, 0
    %p175 = por %p173, %p174
    %p176 = scmp.ne.s32.totalorder %s164, %s165
    %p177 = scmp.eq.s32.totalorder %s29, 1
    %p178 = por %p176, %p177
    %p180 = scmp.ne.s32.totalorder %s165, %s179
    %p181 = scmp.eq.s32.totalorder %s29, 0
    %p182 = por %p180, %p181
    %s184 = sadd.s32 %s183, 1
    %p187 = scmp.eq.s32.totalorder %s23, 1
    %p188 = scmp.ne.s32.totalorder %s183, %s185
    %p189 = scmp.eq.s32.totalorder %s23, 0
    %p190 = por %p188, %p189
    %p191 = scmp.ne.s32.totalorder %s183, %s185
    %p192 = scmp.eq.s32.totalorder %s28, 1
    %p193 = por %p191, %p192
    %p194 = scmp.ne.s32.totalorder %s185, %s186
    %p195 = scmp.eq.s32.totalorder %s28, 0
    %p196 = por %p194, %p195
    %p197 = scmp.ne.s32.totalorder %s185, %s186
    %p198 = scmp.eq.s32.totalorder %s29, 1
    %p199 = por %p197, %p198
    %p201 = scmp.ne.s32.totalorder %s186, %s200
    %p202 = scmp.eq.s32.totalorder %s29, 0
    %p203 = por %p201, %p202
    %s205 = sadd.s32 %s204, 1
    %p208 = scmp.eq.s32.totalorder %s23, 1
    %p209 = scmp.ne.s32.totalorder %s204, %s206
    %p210 = scmp.eq.s32.totalorder %s23, 0
    %p211 = por %p209, %p210
    %p212 = scmp.ne.s32.totalorder %s204, %s206
    %p213 = scmp.eq.s32.totalorder %s28, 1
    %p214 = por %p212, %p213
    %p215 = scmp.ne.s32.totalorder %s206, %s207
    %p216 = scmp.eq.s32.totalorder %s28, 0
    %p217 = por %p215, %p216
    %p218 = scmp.ne.s32.totalorder %s206, %s207
    %p219 = scmp.eq.s32.totalorder %s29, 1
    %p220 = por %p218, %p219
    %p222 = scmp.ne.s32.totalorder %s207, %s221
    %p223 = scmp.eq.s32.totalorder %s29, 0
    %p224 = por %p222, %p223
    %s226 = sadd.s32 %s225, 1
    %p229 = scmp.eq.s32.totalorder %s23, 1
    %p230 = scmp.ne.s32.totalorder %s225, %s227
    %p231 = scmp.eq.s32.totalorder %s23, 0
    %p232 = por %p230, %p231
    %p233 = scmp.ne.s32.totalorder %s225, %s227
    %p234 = scmp.eq.s32.totalorder %s28, 1
    %p235 = por %p233, %p234
    %p236 = scmp.ne.s32.totalorder %s227, %s228
    %p237 = scmp.eq.s32.totalorder %s28, 0
    %p238 = por %p236, %p237
    %p239 = scmp.ne.s32.totalorder %s227, %s228
    %p240 = scmp.eq.s32.totalorder %s29, 1
    %p241 = por %p239, %p240
    %p243 = scmp.ne.s32.totalorder %s228, %s242
    %p244 = scmp.eq.s32.totalorder %s29, 0
    %p245 = por %p243, %p244
    %s247 = sadd.s32 %s246, 1
    %p250 = scmp.eq.s32.totalorder %s23, 1
    %p251 = scmp.ne.s32.totalorder %s246, %s248
    %p252 = scmp.eq.s32.totalorder %s23, 0
    %p253 = por %p251, %p252
    %p254 = scmp.ne.s32.totalorder %s246, %s248
    %p255 = scmp.eq.s32.totalorder %s28, 1
    %p256 = por %p254, %p255
    %p257 = scmp.ne.s32.totalorder %s248, %s249
    %p258 = scmp.eq.s32.totalorder %s28, 0
    %p259 = por %p257, %p258
    %p260 = scmp.ne.s32.totalorder %s248, %s249
    %p261 = scmp.eq.s32.totalorder %s29, 1
    %p262 = por %p260, %p261
    %p264 = scmp.ne.s32.totalorder %s249, %s263
    %p265 = scmp.eq.s32.totalorder %s29, 0
    %p266 = por %p264, %p265
    %s268 = sadd.s32 %s267, 1
    %p271 = scmp.eq.s32.totalorder %s23, 1
    %p272 = scmp.ne.s32.totalorder %s267, %s269
    %p273 = scmp.eq.s32.totalorder %s23, 0
    %p274 = por %p272, %p273
    %p275 = scmp.ne.s32.totalorder %s267, %s269
    %p276 = scmp.eq.s32.totalorder %s28, 1
    %p277 = por %p275, %p276
    %p278 = scmp.ne.s32.totalorder %s269, %s270
    %p279 = scmp.eq.s32.totalorder %s28, 0
    %p280 = por %p278, %p279
    %p281 = scmp.ne.s32.totalorder %s269, %s270
    %p282 = scmp.eq.s32.totalorder %s29, 1
    %p283 = por %p281, %p282
    %p285 = scmp.ne.s32.totalorder %s270, %s284
    %p286 = scmp.eq.s32.totalorder %s29, 0
    %p287 = por %p285, %p286
    %s289 = sadd.s32 %s288, 1
    %p292 = scmp.eq.s32.totalorder %s23, 1
    %p293 = scmp.ne.s32.totalorder %s288, %s290
    %p294 = scmp.eq.s32.totalorder %s23, 0
    %p295 = por %p293, %p294
    %p296 = scmp.ne.s32.totalorder %s288, %s290
    %p297 = scmp.eq.s32.totalorder %s28, 1
    %p298 = por %p296, %p297
    %p299 = scmp.ne.s32.totalorder %s290, %s291
    %p300 = scmp.eq.s32.totalorder %s28, 0
    %p301 = por %p299, %p300
    %p302 = scmp.ne.s32.totalorder %s290, %s291
    %p303 = scmp.eq.s32.totalorder %s29, 1
    %p304 = por %p302, %p303
    %p306 = scmp.ne.s32.totalorder %s291, %s305
    %p307 = scmp.eq.s32.totalorder %s29, 0
    %p308 = por %p306, %p307
    %s310 = sadd.s32 %s309, 1
    %p313 = scmp.eq.s32.totalorder %s23, 1
    %p314 = scmp.ne.s32.totalorder %s309, %s311
    %p315 = scmp.eq.s32.totalorder %s23, 0
    %p316 = por %p314, %p315
    %p317 = scmp.ne.s32.totalorder %s309, %s311
    %p318 = scmp.eq.s32.totalorder %s28, 1
    %p319 = por %p317, %p318
    %p320 = scmp.ne.s32.totalorder %s311, %s312
    %p321 = scmp.eq.s32.totalorder %s28, 0
    %p322 = por %p320, %p321
    %p323 = scmp.ne.s32.totalorder %s311, %s312
    %p324 = scmp.eq.s32.totalorder %s29, 1
    %p325 = por %p323, %p324
    %p327 = scmp.ne.s32.totalorder %s312, %s326
    %p328 = scmp.eq.s32.totalorder %s29, 0
    %p329 = por %p327, %p328
    %s331 = sadd.s32 %s330, 1
    %p334 = scmp.eq.s32.totalorder %s23, 1
    %p335 = scmp.ne.s32.totalorder %s330, %s332
    %p336 = scmp.eq.s32.totalorder %s23, 0
    %p337 = por %p335, %p336
    %p338 = scmp.ne.s32.totalorder %s330, %s332
    %p339 = scmp.eq.s32.totalorder %s28, 1
    %p340 = por %p338, %p339
    %p341 = scmp.ne.s32.totalorder %s332, %s333
    %p342 = scmp.eq.s32.totalorder %s28, 0
    %p343 = por %p341, %p342
    %p344 = scmp.ne.s32.totalorder %s332, %s333
    %p345 = scmp.eq.s32.totalorder %s29, 1
    %p346 = por %p344, %p345
    %p348 = scmp.ne.s32.totalorder %s333, %s347
    %p349 = scmp.eq.s32.totalorder %s29, 0
    %p350 = por %p348, %p349
    %s352 = sadd.s32 %s351, 1
    %p355 = scmp.eq.s32.totalorder %s23, 1
    %p356 = scmp.ne.s32.totalorder %s351, %s353
    %p357 = scmp.eq.s32.totalorder %s23, 0
    %p358 = por %p356, %p357
    %p359 = scmp.ne.s32.totalorder %s351, %s353
    %p360 = scmp.eq.s32.totalorder %s28, 1
    %p361 = por %p359, %p360
    %p362 = scmp.ne.s32.totalorder %s353, %s354
    %p363 = scmp.eq.s32.totalorder %s28, 0
    %p364 = por %p362, %p363
    %p365 = scmp.ne.s32.totalorder %s353, %s354
    %p366 = scmp.eq.s32.totalorder %s29, 1
    %p367 = por %p365, %p366
    %p369 = scmp.ne.s32.totalorder %s354, %s368
    %p370 = scmp.eq.s32.totalorder %s29, 0
    %p371 = por %p369, %p370
    %s373 = sadd.s32 %s372, 1
    %p376 = scmp.eq.s32.totalorder %s23, 1
    %p377 = scmp.ne.s32.totalorder %s372, %s374
    %p378 = scmp.eq.s32.totalorder %s23, 0
    %p379 = por %p377, %p378
    %p380 = scmp.ne.s32.totalorder %s372, %s374
    %p381 = scmp.eq.s32.totalorder %s28, 1
    %p382 = por %p380, %p381
    %p383 = scmp.ne.s32.totalorder %s374, %s375
    %p384 = scmp.eq.s32.totalorder %s28, 0
    %p385 = por %p383, %p384
    %p386 = scmp.ne.s32.totalorder %s374, %s375
    %p387 = scmp.eq.s32.totalorder %s29, 1
    %p388 = por %p386, %p387
    %p390 = scmp.ne.s32.totalorder %s375, %s389
    %p391 = scmp.eq.s32.totalorder %s29, 0
    %p392 = por %p390, %p391
    %s393 = ssub.s32 %s23, %s30
    %p394 = scmp.eq.s32.totalorder %s393, 0
    %s396 = sadd.s32 %s395, 1
    %s397 = scalar_select %p394, %s395, %s396
    %p400 = pneg %p394
    %p401 = scmp.eq.s32.totalorder %s23, 1
    %p402 = por %p400, %p401
    %p403 = scmp.ne.s32.totalorder %s395, %s398
    %p404 = scmp.eq.s32.totalorder %s23, 0
    %p405 = por %p403, %p404
    %p406 = scmp.ne.s32.totalorder %s395, %s398
    %p407 = scmp.eq.s32.totalorder %s28, 1
    %p408 = por %p406, %p407
    %p409 = scmp.ne.s32.totalorder %s398, %s399
    %p410 = scmp.eq.s32.totalorder %s28, 0
    %p411 = por %p409, %p410
    %p412 = scmp.ne.s32.totalorder %s398, %s399
    %p413 = scmp.eq.s32.totalorder %s29, 1
    %p414 = por %p412, %p413
    %p416 = scmp.ne.s32.totalorder %s399, %s415
    %p417 = scmp.eq.s32.totalorder %s29, 0
    %p418 = por %p416, %p417
    %p419 = scmp.le.s32.totalorder 1, %s23
    %p420 = scmp.lt.s32.totalorder %s23, 3
    %p421 = pnand %p419, %p420
    %p422 = pneg %p421
    // Predicated region
    $region9: #{bigram_lm_forward.1} parent=5 // pred_check
      _
    $region10: #{bigram_lm_forward.1} parent=5 // pred_check_branch
      %424 = sbr.rel (%p421) target = $region12
    $region11: #{bigram_lm_forward.1} parent=5 // pred_region
      %s425 = ssub.s32 %s23, 1
      // Predicated region
      $region13: #{bigram_lm_forward.1} parent=11 // pred_check
        %p426 = pneg %p70
      $region14: #{bigram_lm_forward.1} parent=11 // pred_check_branch
        %428 = sbr.rel (%p426) target = $region16
      $region15: #{bigram_lm_forward.1} parent=11 // pred_region
        _
      $region16: #{bigram_lm_forward.1} parent=11 // pred_fallthru
        _
      // Predicated region
      $region17: #{bigram_lm_forward.1} parent=11 // pred_check
        %p429 = pneg %p91
      $region18: #{bigram_lm_forward.1} parent=11 // pred_check_branch
        %431 = sbr.rel (%p429) target = $region20
      $region19: #{bigram_lm_forward.1} parent=11 // pred_region
        _
      $region20: #{bigram_lm_forward.1} parent=11 // pred_fallthru
        _
      // Predicated region
      $region21: #{bigram_lm_forward.1} parent=11 // pred_check
        %p432 = pneg %p112
      $region22: #{bigram_lm_forward.1} parent=11 // pred_check_branch
        %434 = sbr.rel (%p432) target = $region24
      $region23: #{bigram_lm_forward.1} parent=11 // pred_region
        _
      $region24: #{bigram_lm_forward.1} parent=11 // pred_fallthru
        _
      // Predicated region
      $region25: #{bigram_lm_forward.1} parent=11 // pred_check
        %p435 = pneg %p133
      $region26: #{bigram_lm_forward.1} parent=11 // pred_check_branch
        %437 = sbr.rel (%p435) target = $region28
      $region27: #{bigram_lm_forward.1} parent=11 // pred_region
        _
      $region28: #{bigram_lm_forward.1} parent=11 // pred_fallthru
        _
      // Predicated region
      $region29: #{bigram_lm_forward.1} parent=11 // pred_check
        %p438 = pneg %p154
      $region30: #{bigram_lm_forward.1} parent=11 // pred_check_branch
        %440 = sbr.rel (%p438) target = $region32
      $region31: #{bigram_lm_forward.1} parent=11 // pred_region
        _
      $region32: #{bigram_lm_forward.1} parent=11 // pred_fallthru
        _
      // Predicated region
      $region33: #{bigram_lm_forward.1} parent=11 // pred_check
        %p441 = pneg %p175
      $region34: #{bigram_lm_forward.1} parent=11 // pred_check_branch
        %443 = sbr.rel (%p441) target = $region36
      $region35: #{bigram_lm_forward.1} parent=11 // pred_region
        _
      $region36: #{bigram_lm_forward.1} parent=11 // pred_fallthru
        _
      // Predicated region
      $region37: #{bigram_lm_forward.1} parent=11 // pred_check
        %p444 = pneg %p196
      $region38: #{bigram_lm_forward.1} parent=11 // pred_check_branch
        %446 = sbr.rel (%p444) target = $region40
      $region39: #{bigram_lm_forward.1} parent=11 // pred_region
        _
      $region40: #{bigram_lm_forward.1} parent=11 // pred_fallthru
        _
      // Predicated region
      $region41: #{bigram_lm_forward.1} parent=11 // pred_check
        %p447 = pneg %p217
      $region42: #{bigram_lm_forward.1} parent=11 // pred_check_branch
        %449 = sbr.rel (%p447) target = $region44
      $region43: #{bigram_lm_forward.1} parent=11 // pred_region
        _
      $region44: #{bigram_lm_forward.1} parent=11 // pred_fallthru
        _
      // Predicated region
      $region45: #{bigram_lm_forward.1} parent=11 // pred_check
        %p450 = pneg %p238
      $region46: #{bigram_lm_forward.1} parent=11 // pred_check_branch
        %452 = sbr.rel (%p450) target = $region48
      $region47: #{bigram_lm_forward.1} parent=11 // pred_region
        _
      $region48: #{bigram_lm_forward.1} parent=11 // pred_fallthru
        _
      // Predicated region
      $region49: #{bigram_lm_forward.1} parent=11 // pred_check
        %p453 = pneg %p259
      $region50: #{bigram_lm_forward.1} parent=11 // pred_check_branch
        %455 = sbr.rel (%p453) target = $region52
      $region51: #{bigram_lm_forward.1} parent=11 // pred_region
        _
      $region52: #{bigram_lm_forward.1} parent=11 // pred_fallthru
        _
      // Predicated region
      $region53: #{bigram_lm_forward.1} parent=11 // pred_check
        %p456 = pneg %p280
      $region54: #{bigram_lm_forward.1} parent=11 // pred_check_branch
        %458 = sbr.rel (%p456) target = $region56
      $region55: #{bigram_lm_forward.1} parent=11 // pred_region
        _
      $region56: #{bigram_lm_forward.1} parent=11 // pred_fallthru
        _
      // Predicated region
      $region57: #{bigram_lm_forward.1} parent=11 // pred_check
        %p459 = pneg %p301
      $region58: #{bigram_lm_forward.1} parent=11 // pred_check_branch
        %461 = sbr.rel (%p459) target = $region60
      $region59: #{bigram_lm_forward.1} parent=11 // pred_region
        _
      $region60: #{bigram_lm_forward.1} parent=11 // pred_fallthru
        _
      // Predicated region
      $region61: #{bigram_lm_forward.1} parent=11 // pred_check
        %p462 = pneg %p322
      $region62: #{bigram_lm_forward.1} parent=11 // pred_check_branch
        %464 = sbr.rel (%p462) target = $region64
      $region63: #{bigram_lm_forward.1} parent=11 // pred_region
        _
      $region64: #{bigram_lm_forward.1} parent=11 // pred_fallthru
        _
      // Predicated region
      $region65: #{bigram_lm_forward.1} parent=11 // pred_check
        %p465 = pneg %p343
      $region66: #{bigram_lm_forward.1} parent=11 // pred_check_branch
        %467 = sbr.rel (%p465) target = $region68
      $region67: #{bigram_lm_forward.1} parent=11 // pred_region
        _
      $region68: #{bigram_lm_forward.1} parent=11 // pred_fallthru
        _
      // Predicated region
      $region69: #{bigram_lm_forward.1} parent=11 // pred_check
        %p468 = pneg %p364
      $region70: #{bigram_lm_forward.1} parent=11 // pred_check_branch
        %470 = sbr.rel (%p468) target = $region72
      $region71: #{bigram_lm_forward.1} parent=11 // pred_region
        _
      $region72: #{bigram_lm_forward.1} parent=11 // pred_fallthru
        _
      // Predicated region
      $region73: #{bigram_lm_forward.1} parent=11 // pred_check
        %p471 = pneg %p385
      $region74: #{bigram_lm_forward.1} parent=11 // pred_check_branch
        %473 = sbr.rel (%p471) target = $region76
      $region75: #{bigram_lm_forward.1} parent=11 // pred_region
        _
      $region76: #{bigram_lm_forward.1} parent=11 // pred_fallthru
        _
    $region12: #{bigram_lm_forward.1} parent=5 // pred_fallthru
      _
    %p474 = scmp.lt.s32.totalorder %s23, 2
    // Predicated region
    $region77: #{bigram_lm_forward.1} parent=5 // pred_check
      %p475 = pneg %p474
    $region78: #{bigram_lm_forward.1} parent=5 // pred_check_branch
      %477 = sbr.rel (%p475) target = $region80
    $region79: #{bigram_lm_forward.1} parent=5 // pred_region
      // Predicated region
      $region81: #{bigram_lm_forward.1} parent=79 // pred_check
        %p478 = pneg %p43
      $region82: #{bigram_lm_forward.1} parent=79 // pred_check_branch
        %480 = sbr.rel (%p478) target = $region84
      $region83: #{bigram_lm_forward.1} parent=79 // pred_region
        %p481 = scmp.lt.s32.totalorder %s23, 1
        %s482 = scalar_select %p481, %s23, 1
        %s483 = smul.addr %s482, 2
        %s484 = smul.addr %s483, 8
        %s485 = scalar_lea.vmem %s0, %s484
      $region84: #{bigram_lm_forward.1} parent=79 // pred_fallthru
        _
    $region80: #{bigram_lm_forward.1} parent=5 // pred_fallthru
      _
    %p486 = scmp.le.s32.totalorder 1, %s23
    %p487 = scmp.lt.s32.totalorder %s23, 3
    %p488 = pnand %p486, %p487
    %p489 = pneg %p488
    // Predicated region
    $region85: #{bigram_lm_forward.1} parent=5 // pred_check
      _
    $region86: #{bigram_lm_forward.1} parent=5 // pred_check_branch
      %491 = sbr.rel (%p488) target = $region88
    $region87: #{bigram_lm_forward.1} parent=5 // pred_region
      %s492 = ssub.s32 %s23, 1
      %p493 = scmp.lt.s32.totalorder %s28, 1
      %s494 = scalar_select %p493, %s28, 1
      %s495 = smul.addr %s494, 2
      %s496 = smul.addr %s495, 8
      %s497 = scalar_lea.vmem %s0, %s496
      %p498 = pneg %p49
      %p499 = pneg %p46
      %p500 = pneg %p70
      %p501 = pneg %p67
      %p502 = pneg %p91
      %p503 = pneg %p88
      %p504 = pneg %p112
      %p505 = pneg %p109
      %p506 = pneg %p133
      %p507 = pneg %p130
      %p508 = pneg %p154
      %p509 = pneg %p151
      %p510 = pneg %p175
      %p511 = pneg %p172
      %p512 = pneg %p196
      %p513 = pneg %p193
      %p514 = pneg %p217
      %p515 = pneg %p214
      %p516 = pneg %p238
      %p517 = pneg %p235
      %p518 = pneg %p259
      %p519 = pneg %p256
      %p520 = pneg %p280
      %p521 = pneg %p277
      %p522 = pneg %p301
      %p523 = pneg %p298
      %p524 = pneg %p322
      %p525 = pneg %p319
      %p526 = pneg %p343
      %p527 = pneg %p340
      %p528 = pneg %p364
      %p529 = pneg %p361
      %p530 = pneg %p385
      %p531 = pneg %p382
      %p532 = pneg %p411
      %p533 = pneg %p408
      %p534 = scmp.lt.s32.totalorder %s28, 1
      %s535 = scalar_select %p534, %s28, 1
      %s536 = smul.addr %s535, 2
      %s537 = smul.addr %s536, 8
      %s538 = scalar_lea.vmem %s17, %s537
      %p539 = scmp.lt.s32.totalorder %s28, 1
      %s540 = scalar_select %p539, %s28, 1
      %s541 = smul.addr %s540, 2
      %s542 = smul.addr %s541, 8
      %s543 = scalar_lea.vmem %s0, %s542
      %p544 = scmp.lt.s32.totalorder %s28, 1
      %s545 = scalar_select %p544, %s28, 1
      %s546 = smul.addr %s545, 2
      %s547 = smul.addr %s546, 8
      %s548 = scalar_lea.vmem %s17, %s547
      %v550 = vld [vmem:[%s543] sm:$0xff]
      %v551 = vld [vmem:[%s543 + $0x8] sm:$0xff]
      %v552 = vld [vmem:[%s1] sm:$0xff]
      %v553 = vld [vmem:[%s1 + $0x8] sm:$0xff]
      %v554 = vadd.f32 %v550, %v552
      %v555 = vadd.f32 %v551, %v553
      %v556 = vlaneseq
      %v557 = vshrl.u32 %v556, 7
      %v558 = vadd.s32 %v557, 8
      %v559 = vlaneseq
      %v560 = vand.u32 %v559, 127
      %vm561 = vcmp.le.s32.totalorder %v560, %v557
      %vm562 = vcmp.le.s32.totalorder %v560, %v558
      %v563 = vsel %vm561, 0.0, -1e+30
      %v564 = vsel %vm562, 0.0, -1e+30
      %v565 = vld [vmem:[%s2] sm:$0x1]
      %v566 = vld [vmem:[%s3] sm:$0x1]
      %vm567 = vcmask 523264
      %v568 = vsel %vm567, %v554, 0.0
      %569 = vadd.xlane.f32.xlu0 %v568
      %v570 = vpop.xlane.xlu0 %569
      %v571 = vsel %vm567, %v555, 0.0
      %572 = vadd.xlane.f32.xlu0 %v571
      %v573 = vpop.xlane.xlu0 %572
      %v574 = vrcp.pop 64.0
      %v575 = vmul.f32 %v570, %v574
      %v576 = vmul.f32 %v573, %v574
      %v577 = vsub.f32 %v554, %v575
      %v578 = vsub.f32 %v555, %v576
      %v579 = vmul.f32 %v577, %v577
      %v580 = vmul.f32 %v578, %v578
      %v581 = vsel %vm567, %v579, 0.0
      %582 = vadd.xlane.f32.xlu0 %v581
      %v583 = vpop.xlane.xlu0 %582
      %v584 = vsel %vm567, %v580, 0.0
      %585 = vadd.xlane.f32.xlu0 %v584
      %v586 = vpop.xlane.xlu0 %585
      %v587 = vmul.f32 %v583, %v574
      %v588 = vmul.f32 %v586, %v574
      %v589 = vadd.f32 %v587, 1e-05
      %v590 = vadd.f32 %v588, 1e-05
      %v591 = vrsqrt.pop %v589
      %v592 = vrsqrt.pop %v590
      %v593 = vmul.f32 %v577, %v591
      %v594 = vmul.f32 %v578, %v592
      %v596 = vlaneseq
      %v597 = vshrl.u32 %v596, 7
      %v598 = vsub.s32 0, %v597
      %v599 = vrot.slane %v565, %v598
      %v601 = vmul.f32 %v593, %v599
      %v602 = vmul.f32 %v594, %v599
      %v604 = vlaneseq
      %v605 = vshrl.u32 %v604, 7
      %v606 = vsub.s32 0, %v605
      %v607 = vrot.slane %v566, %v606
      %v609 = vadd.f32 %v601, %v607
      %v610 = vadd.f32 %v602, %v607
      %v611 = vpack.c.bf16 %v610, %v609
      %v612 = vld [vmem:[%s4] sm:$0xff]
      %v613 = vld [vmem:[%s4 + $0x8] sm:$0xff]
      %v614 = vld [vmem:[%s4 + $0x10] sm:$0xff]
      %v615 = vld [vmem:[%s4 + $0x18] sm:$0xff]
      %v616 = vld [vmem:[%s4 + $0x20] sm:$0xff]
      %v617 = vld [vmem:[%s4 + $0x28] sm:$0xff]
      %v618 = vld [vmem:[%s4 + $0x30] sm:$0xff]
      %v619 = vld [vmem:[%s4 + $0x38] sm:$0xff]
      %v628 = vunpack.c.l.b16 %v612
      %v629 = vunpack.c.h.b16 %v612
      %v630 = vunpack.c.l.b16 %v613
      %v631 = vunpack.c.h.b16 %v613
      %v632 = vunpack.c.l.b16 %v614
      %v633 = vunpack.c.h.b16 %v614
      %v634 = vunpack.c.l.b16 %v615
      %v635 = vunpack.c.h.b16 %v615
      %v636 = vunpack.c.l.b16 %v616
      %v637 = vunpack.c.h.b16 %v616
      %v638 = vunpack.c.l.b16 %v617
      %v639 = vunpack.c.h.b16 %v617
      %v640 = vunpack.c.l.b16 %v618
      %v641 = vunpack.c.h.b16 %v618
      %v642 = vunpack.c.l.b16 %v619
      %v643 = vunpack.c.h.b16 %v619
      %v644 = vpack.c.b16 %v630, %v628
      %v645 = vpack.c.b16 %v631, %v629
      %v646 = vpack.c.b16 %v634, %v632
      %v647 = vpack.c.b16 %v635, %v633
      %v648 = vpack.c.b16 %v638, %v636
      %v649 = vpack.c.b16 %v639, %v637
      %v650 = vpack.c.b16 %v642, %v640
      %v651 = vpack.c.b16 %v643, %v641
      %v661 = vsel %vm567, %v611, 0
      %663 = vmatprep.subr.bf16.mxu0 0
      %664 = vmatpush1.bf16.msra.mxu0 0
      %665 = vmatprep.subr.bf16.mxu0 0
      %666 = vmatpush1.bf16.msra.mxu0 0
      %667 = vmatprep.subr.bf16.mxu0 0
      %668 = vmatpush1.bf16.msra.mxu0 0
      %669 = vmatprep.subr.bf16.mxu0 0
      %670 = vmatpush1.bf16.msra.mxu0 0
      %671 = vmatprep.subr.bf16.mxu0 %v651
      %672 = vmatpush1.bf16.msra.mxu0 %v650
      %673 = vmatprep.subr.bf16.mxu0 %v649
      %674 = vmatpush1.bf16.msra.mxu0 %v648
      %675 = vmatprep.subr.bf16.mxu0 %v647
      %676 = vmatpush1.bf16.msra.mxu0 %v646
      %677 = vmatprep.subr.bf16.mxu0 %v645
      %678 = vmatpush1.bf16.msra.mxu0 %v644
      %679 = vmatprep.subr.bf16.mxu0 0
      %680 = vmatpush2.bf16.msra.mxu0 0
      %681 = vmatprep.subr.bf16.mxu0 0
      %682 = vmatpush2.bf16.msra.mxu0 0
      %683 = vmatprep.subr.bf16.mxu0 0
      %684 = vmatpush2.bf16.msra.mxu0 0
      %685 = vmatprep.subr.bf16.mxu0 0
      %686 = vmatpush2.bf16.msra.mxu0 0
      %687 = vmatprep.subr.bf16.mxu0 0
      %688 = vmatpush2.bf16.msra.mxu0 0
      %689 = vmatprep.subr.bf16.mxu0 0
      %690 = vmatpush2.bf16.msra.mxu0 0
      %691 = vmatprep.subr.bf16.mxu0 0
      %692 = vmatpush2.bf16.msra.mxu0 0
      %693 = vmatprep.subr.bf16.mxu0 0
      %694 = vmatpush2.bf16.msra.mxu0 0
      %695 = vmatprep.mubr.bf16.mxu0 0
      %696 = vmatmul.mubr.bf16.gmra.mxu0 %v661
      %v697 = vpop.f32.mrf.mxu0
      %v698 = vadd.f32 0.0, %v697
      %v699 = vpop.f32.mrf.mxu0
      %v700 = vadd.f32 0.0, %v699
      %v701 = vpop.f32.mrf.mxu0
      %v702 = vadd.f32 0.0, %v701
      %v703 = vpop.f32.mrf.mxu0
      %v704 = vadd.f32 0.0, %v703
      %705 = vdwg.mxu0
      %708 = vrot.lane.b32.xlu0 %v698, 64
      %v709 = vpop.permute.xlu0 %708
      %710 = vrot.lane.b32.xlu0 %v702, 64
      %v711 = vpop.permute.xlu0 %710
      %vm712 = vcmask 130048
      %v713 = vsel %vm712, %v698, 0
      %v715 = vsel %vm712, %v702, 0
      %v717 = vsel %vm712, %v709, 0
      %v719 = vsel %vm712, %v711, 0
      %721 = vmatprep.subr.mxu0 0.0
      %722 = vmatpush1.xpose.msra.mxu0 0.0
      %723 = vmatprep.subr.mxu0 0.0
      %724 = vmatpush1.xpose.msra.mxu0 0.0
      %725 = vmatprep.subr.mxu0 0.0
      %726 = vmatpush1.xpose.msra.mxu0 0.0
      %727 = vmatprep.subr.mxu0 0.0
      %728 = vmatpush1.xpose.msra.mxu0 0.0
      %729 = vmatprep.subr.mxu0 0.0
      %730 = vmatpush1.xpose.msra.mxu0 0.0
      %731 = vmatprep.subr.mxu0 0.0
      %732 = vmatpush1.xpose.msra.mxu0 0.0
      %733 = vmatprep.subr.mxu0 0.0
      %734 = vmatpush1.xpose.msra.mxu0 0.0
      %735 = vmatprep.subr.mxu0 0.0
      %736 = vmatpush1.xpose.msra.mxu0 0.0
      %737 = vmatprep.subr.mxu0 0.0
      %738 = vmatpush1.xpose.msra.mxu0 0.0
      %739 = vmatprep.subr.mxu0 0.0
      %740 = vmatpush1.xpose.msra.mxu0 0.0
      %741 = vmatprep.subr.mxu0 0.0
      %742 = vmatpush1.xpose.msra.mxu0 0.0
      %743 = vmatprep.subr.mxu0 0.0
      %744 = vmatpush1.xpose.msra.mxu0 0.0
      %745 = vmatprep.subr.mxu0 0.0
      %746 = vmatpush1.xpose.msra.mxu0 0.0
      %747 = vmatprep.subr.mxu0 0.0
      %748 = vmatpush1.xpose.msra.mxu0 0.0
      %749 = vmatprep.subr.mxu0 0.0
      %750 = vmatpush1.xpose.msra.mxu0 %v719
      %751 = vmatprep.subr.mxu0 0.0
      %752 = vmatpush1.xpose.msra.mxu0 %v717
      %753 = vmatprep.subr.mxu0 0.0
      %754 = vmatpush2.xpose.msra.mxu0 0.0
      %755 = vmatprep.subr.mxu0 0.0
      %756 = vmatpush2.xpose.msra.mxu0 0.0
      %757 = vmatprep.subr.mxu0 0.0
      %758 = vmatpush2.xpose.msra.mxu0 0.0
      %759 = vmatprep.subr.mxu0 0.0
      %760 = vmatpush2.xpose.msra.mxu0 0.0
      %761 = vmatprep.subr.mxu0 0.0
      %762 = vmatpush2.xpose.msra.mxu0 0.0
      %763 = vmatprep.subr.mxu0 0.0
      %764 = vmatpush2.xpose.msra.mxu0 0.0
      %765 = vmatprep.subr.mxu0 0.0
      %766 = vmatpush2.xpose.msra.mxu0 0.0
      %767 = vmatprep.subr.mxu0 0.0
      %768 = vmatpush2.xpose.msra.mxu0 0.0
      %769 = vmatprep.subr.mxu0 0.0
      %770 = vmatpush2.xpose.msra.mxu0 0.0
      %771 = vmatprep.subr.mxu0 0.0
      %772 = vmatpush2.xpose.msra.mxu0 0.0
      %773 = vmatprep.subr.mxu0 0.0
      %774 = vmatpush2.xpose.msra.mxu0 0.0
      %775 = vmatprep.subr.mxu0 0.0
      %776 = vmatpush2.xpose.msra.mxu0 0.0
      %777 = vmatprep.subr.mxu0 0.0
      %778 = vmatpush2.xpose.msra.mxu0 0.0
      %779 = vmatprep.subr.mxu0 0.0
      %780 = vmatpush2.xpose.msra.mxu0 0.0
      %781 = vmatprep.subr.mxu0 0.0
      %782 = vmatpush2.xpose.msra.mxu0 0.0
      %783 = vmatprep.subr.mxu0 0.0
      %784 = vmatpush2.xpose.msra.mxu0 0.0
      %785 = vmatprep.mubr.f32.mxu0 0.0
      %786 = vmatmul.mubr.f32.gmra.mxu0 %v713
      %v787 = vpop.f32.mrf.mxu0
      %v788 = vadd.f32 0.0, %v787
      %v789 = vpop.f32.mrf.mxu0
      %790 = vmatprep.mubr.f32.mxu0 0.0
      %791 = vmatmul.mubr.f32.gmra.mxu0 %v715
      %v792 = vpop.f32.mrf.mxu0
      %v793 = vadd.f32 0.0, %v792
      %v794 = vpop.f32.mrf.mxu0
      %795 = vdwg.mxu0
      %v796 = vmul.f32 %v788, 0.125
      %v797 = vmul.f32 %v793, 0.125
      %v798 = vadd.f32 %v796, %v563
      %v799 = vadd.f32 %v797, %v564
      %v800 = vsel %vm712, %v798, -inf
      %801 = vmax.xlane.f32.xlu0 %v800
      %v802 = vpop.xlane.xlu0 %801
      %v803 = vsel %vm712, %v799, -inf
      %804 = vmax.xlane.f32.xlu0 %v803
      %v805 = vpop.xlane.xlu0 %804
      %v806 = vsub.f32 %v798, %v802
      %v807 = vsub.f32 %v799, %v805
      %v808 = vmul.f32 %v806, 1.442695
      %v809 = vpow.pop %v808
      %v810 = vmul.f32 %v807, 1.442695
      %v811 = vpow.pop %v810
      %v812 = vsel %vm712, %v809, 0.0
      %813 = vadd.xlane.f32.xlu0 %v812
      %v814 = vpop.xlane.xlu0 %813
      %v815 = vsel %vm712, %v811, 0.0
      %816 = vadd.xlane.f32.xlu0 %v815
      %v817 = vpop.xlane.xlu0 %816
      %v818 = vrcp.pop %v814
      %v819 = vrcp.pop %v817
      %v820 = vmul.f32 %v809, %v818
      %v821 = vmul.f32 %v811, %v819
      %v823 = vsel %vm712, %v820, 0
      %v826 = vsel %vm712, %v821, 0
      %828 = vmatprep.subr.mxu0 0.0
      %829 = vmatpush1.msra.mxu0 0.0
      %830 = vmatprep.subr.mxu0 0.0
      %831 = vmatpush1.msra.mxu0 0.0
      %832 = vmatprep.subr.mxu0 0.0
      %833 = vmatpush1.msra.mxu0 0.0
      %834 = vmatprep.subr.mxu0 0.0
      %835 = vmatpush1.msra.mxu0 0.0
      %836 = vmatprep.subr.mxu0 0.0
      %837 = vmatpush1.msra.mxu0 0.0
      %838 = vmatprep.subr.mxu0 0.0
      %839 = vmatpush1.msra.mxu0 0.0
      %840 = vmatprep.subr.mxu0 0.0
      %841 = vmatpush1.msra.mxu0 0.0
      %842 = vmatprep.subr.mxu0 0.0
      %843 = vmatpush1.msra.mxu0 0.0
      %844 = vmatprep.subr.mxu0 0.0
      %845 = vmatpush1.msra.mxu0 0.0
      %846 = vmatprep.subr.mxu0 0.0
      %847 = vmatpush1.msra.mxu0 0.0
      %848 = vmatprep.subr.mxu0 0.0
      %849 = vmatpush1.msra.mxu0 0.0
      %850 = vmatprep.subr.mxu0 0.0
      %851 = vmatpush1.msra.mxu0 0.0
      %852 = vmatprep.subr.mxu0 0.0
      %853 = vmatpush1.msra.mxu0 0.0
      %854 = vmatprep.subr.mxu0 0.0
      %855 = vmatpush1.msra.mxu0 0.0
      %856 = vmatprep.subr.mxu0 0.0
      %857 = vmatpush1.msra.mxu0 %v704
      %858 = vmatprep.subr.mxu0 0.0
      %859 = vmatpush1.msra.mxu0 %v700
      %860 = vmatprep.subr.mxu0 0.0
      %861 = vmatpush2.msra.mxu0 0.0
      %862 = vmatprep.subr.mxu0 0.0
      %863 = vmatpush2.msra.mxu0 0.0
      %864 = vmatprep.subr.mxu0 0.0
      %865 = vmatpush2.msra.mxu0 0.0
      %866 = vmatprep.subr.mxu0 0.0
      %867 = vmatpush2.msra.mxu0 0.0
      %868 = vmatprep.subr.mxu0 0.0
      %869 = vmatpush2.msra.mxu0 0.0
      %870 = vmatprep.subr.mxu0 0.0
      %871 = vmatpush2.msra.mxu0 0.0
      %872 = vmatprep.subr.mxu0 0.0
      %873 = vmatpush2.msra.mxu0 0.0
      %874 = vmatprep.subr.mxu0 0.0
      %875 = vmatpush2.msra.mxu0 0.0
      %876 = vmatprep.subr.mxu0 0.0
      %877 = vmatpush2.msra.mxu0 0.0
      %878 = vmatprep.subr.mxu0 0.0
      %879 = vmatpush2.msra.mxu0 0.0
      %880 = vmatprep.subr.mxu0 0.0
      %881 = vmatpush2.msra.mxu0 0.0
      %882 = vmatprep.subr.mxu0 0.0
      %883 = vmatpush2.msra.mxu0 0.0
      %884 = vmatprep.subr.mxu0 0.0
      %885 = vmatpush2.msra.mxu0 0.0
      %886 = vmatprep.subr.mxu0 0.0
      %887 = vmatpush2.msra.mxu0 0.0
      %888 = vmatprep.subr.mxu0 0.0
      %889 = vmatpush2.msra.mxu0 0.0
      %890 = vmatprep.subr.mxu0 0.0
      %891 = vmatpush2.msra.mxu0 0.0
      %892 = vmatprep.mubr.f32.mxu0 0.0
      %893 = vmatmul.mubr.f32.gmra.mxu0 %v823
      %v894 = vpop.f32.mrf.mxu0
      %v895 = vadd.f32 0.0, %v894
      %v896 = vpop.f32.mrf.mxu0
      %897 = vmatprep.mubr.f32.mxu0 0.0
      %898 = vmatmul.mubr.f32.gmra.mxu0 %v826
      %v899 = vpop.f32.mrf.mxu0
      %v900 = vadd.f32 0.0, %v899
      %v901 = vpop.f32.mrf.mxu0
      %902 = vdwg.mxu0
      %903 = vrot.lane.b32.xlu0 %v698, 112
      %v904 = vpop.permute.xlu0 %903
      %905 = vrot.lane.b32.xlu0 %v702, 112
      %v906 = vpop.permute.xlu0 %905
      %907 = vrot.lane.b32.xlu0 %v698, 48
      %v908 = vpop.permute.xlu0 %907
      %909 = vrot.lane.b32.xlu0 %v702, 48
      %v910 = vpop.permute.xlu0 %909
      %v911 = vsel %vm712, %v904, 0
      %v913 = vsel %vm712, %v906, 0
      %v915 = vsel %vm712, %v908, 0
      %v917 = vsel %vm712, %v910, 0
      %919 = vmatprep.subr.mxu0 0.0
      %920 = vmatpush1.xpose.msra.mxu0 0.0
      %921 = vmatprep.subr.mxu0 0.0
      %922 = vmatpush1.xpose.msra.mxu0 0.0
      %923 = vmatprep.subr.mxu0 0.0
      %924 = vmatpush1.xpose.msra.mxu0 0.0
      %925 = vmatprep.subr.mxu0 0.0
      %926 = vmatpush1.xpose.msra.mxu0 0.0
      %927 = vmatprep.subr.mxu0 0.0
      %928 = vmatpush1.xpose.msra.mxu0 0.0
      %929 = vmatprep.subr.mxu0 0.0
      %930 = vmatpush1.xpose.msra.mxu0 0.0
      %931 = vmatprep.subr.mxu0 0.0
      %932 = vmatpush1.xpose.msra.mxu0 0.0
      %933 = vmatprep.subr.mxu0 0.0
      %934 = vmatpush1.xpose.msra.mxu0 0.0
      %935 = vmatprep.subr.mxu0 0.0
      %936 = vmatpush1.xpose.msra.mxu0 0.0
      %937 = vmatprep.subr.mxu0 0.0
      %938 = vmatpush1.xpose.msra.mxu0 0.0
      %939 = vmatprep.subr.mxu0 0.0
      %940 = vmatpush1.xpose.msra.mxu0 0.0
      %941 = vmatprep.subr.mxu0 0.0
      %942 = vmatpush1.xpose.msra.mxu0 0.0
      %943 = vmatprep.subr.mxu0 0.0
      %944 = vmatpush1.xpose.msra.mxu0 0.0
      %945 = vmatprep.subr.mxu0 0.0
      %946 = vmatpush1.xpose.msra.mxu0 0.0
      %947 = vmatprep.subr.mxu0 0.0
      %948 = vmatpush1.xpose.msra.mxu0 %v917
      %949 = vmatprep.subr.mxu0 0.0
      %950 = vmatpush1.xpose.msra.mxu0 %v915
      %951 = vmatprep.subr.mxu0 0.0
      %952 = vmatpush2.xpose.msra.mxu0 0.0
      %953 = vmatprep.subr.mxu0 0.0
      %954 = vmatpush2.xpose.msra.mxu0 0.0
      %955 = vmatprep.subr.mxu0 0.0
      %956 = vmatpush2.xpose.msra.mxu0 0.0
      %957 = vmatprep.subr.mxu0 0.0
      %958 = vmatpush2.xpose.msra.mxu0 0.0
      %959 = vmatprep.subr.mxu0 0.0
      %960 = vmatpush2.xpose.msra.mxu0 0.0
      %961 = vmatprep.subr.mxu0 0.0
      %962 = vmatpush2.xpose.msra.mxu0 0.0
      %963 = vmatprep.subr.mxu0 0.0
      %964 = vmatpush2.xpose.msra.mxu0 0.0
      %965 = vmatprep.subr.mxu0 0.0
      %966 = vmatpush2.xpose.msra.mxu0 0.0
      %967 = vmatprep.subr.mxu0 0.0
      %968 = vmatpush2.xpose.msra.mxu0 0.0
      %969 = vmatprep.subr.mxu0 0.0
      %970 = vmatpush2.xpose.msra.mxu0 0.0
      %971 = vmatprep.subr.mxu0 0.0
      %972 = vmatpush2.xpose.msra.mxu0 0.0
      %973 = vmatprep.subr.mxu0 0.0
      %974 = vmatpush2.xpose.msra.mxu0 0.0
      %975 = vmatprep.subr.mxu0 0.0
      %976 = vmatpush2.xpose.msra.mxu0 0.0
      %977 = vmatprep.subr.mxu0 0.0
      %978 = vmatpush2.xpose.msra.mxu0 0.0
      %979 = vmatprep.subr.mxu0 0.0
      %980 = vmatpush2.xpose.msra.mxu0 0.0
      %981 = vmatprep.subr.mxu0 0.0
      %982 = vmatpush2.xpose.msra.mxu0 0.0
      %983 = vmatprep.mubr.f32.mxu0 0.0
      %984 = vmatmul.mubr.f32.gmra.mxu0 %v911
      %v985 = vpop.f32.mrf.mxu0
      %v986 = vadd.f32 0.0, %v985
      %v987 = vpop.f32.mrf.mxu0
      %988 = vmatprep.mubr.f32.mxu0 0.0
      %989 = vmatmul.mubr.f32.gmra.mxu0 %v913
      %v990 = vpop.f32.mrf.mxu0
      %v991 = vadd.f32 0.0, %v990
      %v992 = vpop.f32.mrf.mxu0
      %993 = vdwg.mxu0
      %v994 = vmul.f32 %v986, 0.125
      %v995 = vmul.f32 %v991, 0.125
      %v996 = vadd.f32 %v994, %v563
      %v997 = vadd.f32 %v995, %v564
      %v998 = vsel %vm712, %v996, -inf
      %999 = vmax.xlane.f32.xlu0 %v998
      %v1000 = vpop.xlane.xlu0 %999
      %v1001 = vsel %vm712, %v997, -inf
      %1002 = vmax.xlane.f32.xlu0 %v1001
      %v1003 = vpop.xlane.xlu0 %1002
      %v1004 = vsub.f32 %v996, %v1000
      %v1005 = vsub.f32 %v997, %v1003
      %v1006 = vmul.f32 %v1004, 1.442695
      %v1007 = vpow.pop %v1006
      %v1008 = vmul.f32 %v1005, 1.442695
      %v1009 = vpow.pop %v1008
      %v1010 = vsel %vm712, %v1007, 0.0
      %1011 = vadd.xlane.f32.xlu0 %v1010
      %v1012 = vpop.xlane.xlu0 %1011
      %v1013 = vsel %vm712, %v1009, 0.0
      %1014 = vadd.xlane.f32.xlu0 %v1013
      %v1015 = vpop.xlane.xlu0 %1014
      %v1016 = vrcp.pop %v1012
      %v1017 = vrcp.pop %v1015
      %v1018 = vmul.f32 %v1007, %v1016
      %v1019 = vmul.f32 %v1009, %v1017
      %1022 = vrot.lane.b32.xlu0 %v700, 112
      %v1023 = vpop.permute.xlu0 %1022
      %1024 = vrot.lane.b32.xlu0 %v704, 112
      %v1025 = vpop.permute.xlu0 %1024
      %v1029 = vsel %vm712, %v1018, 0
      %v1032 = vsel %vm712, %v1019, 0
      %1034 = vmatprep.subr.mxu0 0.0
      %1035 = vmatpush1.msra.mxu0 0.0
      %1036 = vmatprep.subr.mxu0 0.0
      %1037 = vmatpush1.msra.mxu0 0.0
      %1038 = vmatprep.subr.mxu0 0.0
      %1039 = vmatpush1.msra.mxu0 0.0
      %1040 = vmatprep.subr.mxu0 0.0
      %1041 = vmatpush1.msra.mxu0 0.0
      %1042 = vmatprep.subr.mxu0 0.0
      %1043 = vmatpush1.msra.mxu0 0.0
      %1044 = vmatprep.subr.mxu0 0.0
      %1045 = vmatpush1.msra.mxu0 0.0
      %1046 = vmatprep.subr.mxu0 0.0
      %1047 = vmatpush1.msra.mxu0 0.0
      %1048 = vmatprep.subr.mxu0 0.0
      %1049 = vmatpush1.msra.mxu0 0.0
      %1050 = vmatprep.subr.mxu0 0.0
      %1051 = vmatpush1.msra.mxu0 0.0
      %1052 = vmatprep.subr.mxu0 0.0
      %1053 = vmatpush1.msra.mxu0 0.0
      %1054 = vmatprep.subr.mxu0 0.0
      %1055 = vmatpush1.msra.mxu0 0.0
      %1056 = vmatprep.subr.mxu0 0.0
      %1057 = vmatpush1.msra.mxu0 0.0
      %1058 = vmatprep.subr.mxu0 0.0
      %1059 = vmatpush1.msra.mxu0 0.0
      %1060 = vmatprep.subr.mxu0 0.0
      %1061 = vmatpush1.msra.mxu0 0.0
      %1062 = vmatprep.subr.mxu0 0.0
      %1063 = vmatpush1.msra.mxu0 %v1025
      %1064 = vmatprep.subr.mxu0 0.0
      %1065 = vmatpush1.msra.mxu0 %v1023
      %1066 = vmatprep.subr.mxu0 0.0
      %1067 = vmatpush2.msra.mxu0 0.0
      %1068 = vmatprep.subr.mxu0 0.0
      %1069 = vmatpush2.msra.mxu0 0.0
      %1070 = vmatprep.subr.mxu0 0.0
      %1071 = vmatpush2.msra.mxu0 0.0
      %1072 = vmatprep.subr.mxu0 0.0
      %1073 = vmatpush2.msra.mxu0 0.0
      %1074 = vmatprep.subr.mxu0 0.0
      %1075 = vmatpush2.msra.mxu0 0.0
      %1076 = vmatprep.subr.mxu0 0.0
      %1077 = vmatpush2.msra.mxu0 0.0
      %1078 = vmatprep.subr.mxu0 0.0
      %1079 = vmatpush2.msra.mxu0 0.0
      %1080 = vmatprep.subr.mxu0 0.0
      %1081 = vmatpush2.msra.mxu0 0.0
      %1082 = vmatprep.subr.mxu0 0.0
      %1083 = vmatpush2.msra.mxu0 0.0
      %1084 = vmatprep.subr.mxu0 0.0
      %1085 = vmatpush2.msra.mxu0 0.0
      %1086 = vmatprep.subr.mxu0 0.0
      %1087 = vmatpush2.msra.mxu0 0.0
      %1088 = vmatprep.subr.mxu0 0.0
      %1089 = vmatpush2.msra.mxu0 0.0
      %1090 = vmatprep.subr.mxu0 0.0
      %1091 = vmatpush2.msra.mxu0 0.0
      %1092 = vmatprep.subr.mxu0 0.0
      %1093 = vmatpush2.msra.mxu0 0.0
      %1094 = vmatprep.subr.mxu0 0.0
      %1095 = vmatpush2.msra.mxu0 0.0
      %1096 = vmatprep.subr.mxu0 0.0
      %1097 = vmatpush2.msra.mxu0 0.0
      %1098 = vmatprep.mubr.f32.mxu0 0.0
      %1099 = vmatmul.mubr.f32.gmra.mxu0 %v1029
      %v1100 = vpop.f32.mrf.mxu0
      %v1101 = vadd.f32 0.0, %v1100
      %v1102 = vpop.f32.mrf.mxu0
      %1103 = vmatprep.mubr.f32.mxu0 0.0
      %1104 = vmatmul.mubr.f32.gmra.mxu0 %v1032
      %v1105 = vpop.f32.mrf.mxu0
      %v1106 = vadd.f32 0.0, %v1105
      %v1107 = vpop.f32.mrf.mxu0
      %1108 = vdwg.mxu0
      %1109 = vrot.lane.b32.xlu0 %v698, 96
      %v1110 = vpop.permute.xlu0 %1109
      %1111 = vrot.lane.b32.xlu0 %v702, 96
      %v1112 = vpop.permute.xlu0 %1111
      %1113 = vrot.lane.b32.xlu0 %v698, 32
      %v1114 = vpop.permute.xlu0 %1113
      %1115 = vrot.lane.b32.xlu0 %v702, 32
      %v1116 = vpop.permute.xlu0 %1115
      %v1117 = vsel %vm712, %v1110, 0
      %v1119 = vsel %vm712, %v1112, 0
      %v1121 = vsel %vm712, %v1114, 0
      %v1123 = vsel %vm712, %v1116, 0
      %1125 = vmatprep.subr.mxu0 0.0
      %1126 = vmatpush1.xpose.msra.mxu0 0.0
      %1127 = vmatprep.subr.mxu0 0.0
      %1128 = vmatpush1.xpose.msra.mxu0 0.0
      %1129 = vmatprep.subr.mxu0 0.0
      %1130 = vmatpush1.xpose.msra.mxu0 0.0
      %1131 = vmatprep.subr.mxu0 0.0
      %1132 = vmatpush1.xpose.msra.mxu0 0.0
      %1133 = vmatprep.subr.mxu0 0.0
      %1134 = vmatpush1.xpose.msra.mxu0 0.0
      %1135 = vmatprep.subr.mxu0 0.0
      %1136 = vmatpush1.xpose.msra.mxu0 0.0
      %1137 = vmatprep.subr.mxu0 0.0
      %1138 = vmatpush1.xpose.msra.mxu0 0.0
      %1139 = vmatprep.subr.mxu0 0.0
      %1140 = vmatpush1.xpose.msra.mxu0 0.0
      %1141 = vmatprep.subr.mxu0 0.0
      %1142 = vmatpush1.xpose.msra.mxu0 0.0
      %1143 = vmatprep.subr.mxu0 0.0
      %1144 = vmatpush1.xpose.msra.mxu0 0.0
      %1145 = vmatprep.subr.mxu0 0.0
      %1146 = vmatpush1.xpose.msra.mxu0 0.0
      %1147 = vmatprep.subr.mxu0 0.0
      %1148 = vmatpush1.xpose.msra.mxu0 0.0
      %1149 = vmatprep.subr.mxu0 0.0
      %1150 = vmatpush1.xpose.msra.mxu0 0.0
      %1151 = vmatprep.subr.mxu0 0.0
      %1152 = vmatpush1.xpose.msra.mxu0 0.0
      %1153 = vmatprep.subr.mxu0 0.0
      %1154 = vmatpush1.xpose.msra.mxu0 %v1123
      %1155 = vmatprep.subr.mxu0 0.0
      %1156 = vmatpush1.xpose.msra.mxu0 %v1121
      %1157 = vmatprep.subr.mxu0 0.0
      %1158 = vmatpush2.xpose.msra.mxu0 0.0
      %1159 = vmatprep.subr.mxu0 0.0
      %1160 = vmatpush2.xpose.msra.mxu0 0.0
      %1161 = vmatprep.subr.mxu0 0.0
      %1162 = vmatpush2.xpose.msra.mxu0 0.0
      %1163 = vmatprep.subr.mxu0 0.0
      %1164 = vmatpush2.xpose.msra.mxu0 0.0
      %1165 = vmatprep.subr.mxu0 0.0
      %1166 = vmatpush2.xpose.msra.mxu0 0.0
      %1167 = vmatprep.subr.mxu0 0.0
      %1168 = vmatpush2.xpose.msra.mxu0 0.0
      %1169 = vmatprep.subr.mxu0 0.0
      %1170 = vmatpush2.xpose.msra.mxu0 0.0
      %1171 = vmatprep.subr.mxu0 0.0
      %1172 = vmatpush2.xpose.msra.mxu0 0.0
      %1173 = vmatprep.subr.mxu0 0.0
      %1174 = vmatpush2.xpose.msra.mxu0 0.0
      %1175 = vmatprep.subr.mxu0 0.0
      %1176 = vmatpush2.xpose.msra.mxu0 0.0
      %1177 = vmatprep.subr.mxu0 0.0
      %1178 = vmatpush2.xpose.msra.mxu0 0.0
      %1179 = vmatprep.subr.mxu0 0.0
      %1180 = vmatpush2.xpose.msra.mxu0 0.0
      %1181 = vmatprep.subr.mxu0 0.0
      %1182 = vmatpush2.xpose.msra.mxu0 0.0
      %1183 = vmatprep.subr.mxu0 0.0
      %1184 = vmatpush2.xpose.msra.mxu0 0.0
      %1185 = vmatprep.subr.mxu0 0.0
      %1186 = vmatpush2.xpose.msra.mxu0 0.0
      %1187 = vmatprep.subr.mxu0 0.0
      %1188 = vmatpush2.xpose.msra.mxu0 0.0
      %1189 = vmatprep.mubr.f32.mxu0 0.0
      %1190 = vmatmul.mubr.f32.gmra.mxu0 %v1117
      %v1191 = vpop.f32.mrf.mxu0
      %v1192 = vadd.f32 0.0, %v1191
      %v1193 = vpop.f32.mrf.mxu0
      %1194 = vmatprep.mubr.f32.mxu0 0.0
      %1195 = vmatmul.mubr.f32.gmra.mxu0 %v1119
      %v1196 = vpop.f32.mrf.mxu0
      %v1197 = vadd.f32 0.0, %v1196
      %v1198 = vpop.f32.mrf.mxu0
      %1199 = vdwg.mxu0
      %v1200 = vmul.f32 %v1192, 0.125
      %v1201 = vmul.f32 %v1197, 0.125
      %v1202 = vadd.f32 %v1200, %v563
      %v1203 = vadd.f32 %v1201, %v564
      %v1204 = vsel %vm712, %v1202, -inf
      %1205 = vmax.xlane.f32.xlu0 %v1204
      %v1206 = vpop.xlane.xlu0 %1205
      %v1207 = vsel %vm712, %v1203, -inf
      %1208 = vmax.xlane.f32.xlu0 %v1207
      %v1209 = vpop.xlane.xlu0 %1208
      %v1210 = vsub.f32 %v1202, %v1206
      %v1211 = vsub.f32 %v1203, %v1209
      %v1212 = vmul.f32 %v1210, 1.442695
      %v1213 = vpow.pop %v1212
      %v1214 = vmul.f32 %v1211, 1.442695
      %v1215 = vpow.pop %v1214
      %v1216 = vsel %vm712, %v1213, 0.0
      %1217 = vadd.xlane.f32.xlu0 %v1216
      %v1218 = vpop.xlane.xlu0 %1217
      %v1219 = vsel %vm712, %v1215, 0.0
      %1220 = vadd.xlane.f32.xlu0 %v1219
      %v1221 = vpop.xlane.xlu0 %1220
      %v1222 = vrcp.pop %v1218
      %v1223 = vrcp.pop %v1221
      %v1224 = vmul.f32 %v1213, %v1222
      %v1225 = vmul.f32 %v1215, %v1223
      %1226 = vrot.lane.b32.xlu0 %v700, 96
      %v1227 = vpop.permute.xlu0 %1226
      %1228 = vrot.lane.b32.xlu0 %v704, 96
      %v1229 = vpop.permute.xlu0 %1228
      %v1233 = vsel %vm712, %v1224, 0
      %v1236 = vsel %vm712, %v1225, 0
      %1238 = vmatprep.subr.mxu0 0.0
      %1239 = vmatpush1.msra.mxu0 0.0
      %1240 = vmatprep.subr.mxu0 0.0
      %1241 = vmatpush1.msra.mxu0 0.0
      %1242 = vmatprep.subr.mxu0 0.0
      %1243 = vmatpush1.msra.mxu0 0.0
      %1244 = vmatprep.subr.mxu0 0.0
      %1245 = vmatpush1.msra.mxu0 0.0
      %1246 = vmatprep.subr.mxu0 0.0
      %1247 = vmatpush1.msra.mxu0 0.0
      %1248 = vmatprep.subr.mxu0 0.0
      %1249 = vmatpush1.msra.mxu0 0.0
      %1250 = vmatprep.subr.mxu0 0.0
      %1251 = vmatpush1.msra.mxu0 0.0
      %1252 = vmatprep.subr.mxu0 0.0
      %1253 = vmatpush1.msra.mxu0 0.0
      %1254 = vmatprep.subr.mxu0 0.0
      %1255 = vmatpush1.msra.mxu0 0.0
      %1256 = vmatprep.subr.mxu0 0.0
      %1257 = vmatpush1.msra.mxu0 0.0
      %1258 = vmatprep.subr.mxu0 0.0
      %1259 = vmatpush1.msra.mxu0 0.0
      %1260 = vmatprep.subr.mxu0 0.0
      %1261 = vmatpush1.msra.mxu0 0.0
      %1262 = vmatprep.subr.mxu0 0.0
      %1263 = vmatpush1.msra.mxu0 0.0
      %1264 = vmatprep.subr.mxu0 0.0
      %1265 = vmatpush1.msra.mxu0 0.0
      %1266 = vmatprep.subr.mxu0 0.0
      %1267 = vmatpush1.msra.mxu0 %v1229
      %1268 = vmatprep.subr.mxu0 0.0
      %1269 = vmatpush1.msra.mxu0 %v1227
      %1270 = vmatprep.subr.mxu0 0.0
      %1271 = vmatpush2.msra.mxu0 0.0
      %1272 = vmatprep.subr.mxu0 0.0
      %1273 = vmatpush2.msra.mxu0 0.0
      %1274 = vmatprep.subr.mxu0 0.0
      %1275 = vmatpush2.msra.mxu0 0.0
      %1276 = vmatprep.subr.mxu0 0.0
      %1277 = vmatpush2.msra.mxu0 0.0
      %1278 = vmatprep.subr.mxu0 0.0
      %1279 = vmatpush2.msra.mxu0 0.0
      %1280 = vmatprep.subr.mxu0 0.0
      %1281 = vmatpush2.msra.mxu0 0.0
      %1282 = vmatprep.subr.mxu0 0.0
      %1283 = vmatpush2.msra.mxu0 0.0
      %1284 = vmatprep.subr.mxu0 0.0
      %1285 = vmatpush2.msra.mxu0 0.0
      %1286 = vmatprep.subr.mxu0 0.0
      %1287 = vmatpush2.msra.mxu0 0.0
      %1288 = vmatprep.subr.mxu0 0.0
      %1289 = vmatpush2.msra.mxu0 0.0
      %1290 = vmatprep.subr.mxu0 0.0
      %1291 = vmatpush2.msra.mxu0 0.0
      %1292 = vmatprep.subr.mxu0 0.0
      %1293 = vmatpush2.msra.mxu0 0.0
      %1294 = vmatprep.subr.mxu0 0.0
      %1295 = vmatpush2.msra.mxu0 0.0
      %1296 = vmatprep.subr.mxu0 0.0
      %1297 = vmatpush2.msra.mxu0 0.0
      %1298 = vmatprep.subr.mxu0 0.0
      %1299 = vmatpush2.msra.mxu0 0.0
      %1300 = vmatprep.subr.mxu0 0.0
      %1301 = vmatpush2.msra.mxu0 0.0
      %1302 = vmatprep.mubr.f32.mxu0 0.0
      %1303 = vmatmul.mubr.f32.gmra.mxu0 %v1233
      %v1304 = vpop.f32.mrf.mxu0
      %v1305 = vadd.f32 0.0, %v1304
      %v1306 = vpop.f32.mrf.mxu0
      %1307 = vmatprep.mubr.f32.mxu0 0.0
      %1308 = vmatmul.mubr.f32.gmra.mxu0 %v1236
      %v1309 = vpop.f32.mrf.mxu0
      %v1310 = vadd.f32 0.0, %v1309
      %v1311 = vpop.f32.mrf.mxu0
      %1312 = vdwg.mxu0
      %1313 = vrot.lane.b32.xlu0 %v698, 80
      %v1314 = vpop.permute.xlu0 %1313
      %1315 = vrot.lane.b32.xlu0 %v702, 80
      %v1316 = vpop.permute.xlu0 %1315
      %1317 = vrot.lane.b32.xlu0 %v698, 16
      %v1318 = vpop.permute.xlu0 %1317
      %1319 = vrot.lane.b32.xlu0 %v702, 16
      %v1320 = vpop.permute.xlu0 %1319
      %v1321 = vsel %vm712, %v1314, 0
      %v1323 = vsel %vm712, %v1316, 0
      %v1325 = vsel %vm712, %v1318, 0
      %v1327 = vsel %vm712, %v1320, 0
      %1329 = vmatprep.subr.mxu0 0.0
      %1330 = vmatpush1.xpose.msra.mxu0 0.0
      %1331 = vmatprep.subr.mxu0 0.0
      %1332 = vmatpush1.xpose.msra.mxu0 0.0
      %1333 = vmatprep.subr.mxu0 0.0
      %1334 = vmatpush1.xpose.msra.mxu0 0.0
      %1335 = vmatprep.subr.mxu0 0.0
      %1336 = vmatpush1.xpose.msra.mxu0 0.0
      %1337 = vmatprep.subr.mxu0 0.0
      %1338 = vmatpush1.xpose.msra.mxu0 0.0
      %1339 = vmatprep.subr.mxu0 0.0
      %1340 = vmatpush1.xpose.msra.mxu0 0.0
      %1341 = vmatprep.subr.mxu0 0.0
      %1342 = vmatpush1.xpose.msra.mxu0 0.0
      %1343 = vmatprep.subr.mxu0 0.0
      %1344 = vmatpush1.xpose.msra.mxu0 0.0
      %1345 = vmatprep.subr.mxu0 0.0
      %1346 = vmatpush1.xpose.msra.mxu0 0.0
      %1347 = vmatprep.subr.mxu0 0.0
      %1348 = vmatpush1.xpose.msra.mxu0 0.0
      %1349 = vmatprep.subr.mxu0 0.0
      %1350 = vmatpush1.xpose.msra.mxu0 0.0
      %1351 = vmatprep.subr.mxu0 0.0
      %1352 = vmatpush1.xpose.msra.mxu0 0.0
      %1353 = vmatprep.subr.mxu0 0.0
      %1354 = vmatpush1.xpose.msra.mxu0 0.0
      %1355 = vmatprep.subr.mxu0 0.0
      %1356 = vmatpush1.xpose.msra.mxu0 0.0
      %1357 = vmatprep.subr.mxu0 0.0
      %1358 = vmatpush1.xpose.msra.mxu0 %v1327
      %1359 = vmatprep.subr.mxu0 0.0
      %1360 = vmatpush1.xpose.msra.mxu0 %v1325
      %1361 = vmatprep.subr.mxu0 0.0
      %1362 = vmatpush2.xpose.msra.mxu0 0.0
      %1363 = vmatprep.subr.mxu0 0.0
      %1364 = vmatpush2.xpose.msra.mxu0 0.0
      %1365 = vmatprep.subr.mxu0 0.0
      %1366 = vmatpush2.xpose.msra.mxu0 0.0
      %1367 = vmatprep.subr.mxu0 0.0
      %1368 = vmatpush2.xpose.msra.mxu0 0.0
      %1369 = vmatprep.subr.mxu0 0.0
      %1370 = vmatpush2.xpose.msra.mxu0 0.0
      %1371 = vmatprep.subr.mxu0 0.0
      %1372 = vmatpush2.xpose.msra.mxu0 0.0
      %1373 = vmatprep.subr.mxu0 0.0
      %1374 = vmatpush2.xpose.msra.mxu0 0.0
      %1375 = vmatprep.subr.mxu0 0.0
      %1376 = vmatpush2.xpose.msra.mxu0 0.0
      %1377 = vmatprep.subr.mxu0 0.0
      %1378 = vmatpush2.xpose.msra.mxu0 0.0
      %1379 = vmatprep.subr.mxu0 0.0
      %1380 = vmatpush2.xpose.msra.mxu0 0.0
      %1381 = vmatprep.subr.mxu0 0.0
      %1382 = vmatpush2.xpose.msra.mxu0 0.0
      %1383 = vmatprep.subr.mxu0 0.0
      %1384 = vmatpush2.xpose.msra.mxu0 0.0
      %1385 = vmatprep.subr.mxu0 0.0
      %1386 = vmatpush2.xpose.msra.mxu0 0.0
      %1387 = vmatprep.subr.mxu0 0.0
      %1388 = vmatpush2.xpose.msra.mxu0 0.0
      %1389 = vmatprep.subr.mxu0 0.0
      %1390 = vmatpush2.xpose.msra.mxu0 0.0
      %1391 = vmatprep.subr.mxu0 0.0
      %1392 = vmatpush2.xpose.msra.mxu0 0.0
      %1393 = vmatprep.mubr.f32.mxu0 0.0
      %1394 = vmatmul.mubr.f32.gmra.mxu0 %v1321
      %v1395 = vpop.f32.mrf.mxu0
      %v1396 = vadd.f32 0.0, %v1395
      %v1397 = vpop.f32.mrf.mxu0
      %1398 = vmatprep.mubr.f32.mxu0 0.0
      %1399 = vmatmul.mubr.f32.gmra.mxu0 %v1323
      %v1400 = vpop.f32.mrf.mxu0
      %v1401 = vadd.f32 0.0, %v1400
      %v1402 = vpop.f32.mrf.mxu0
      %1403 = vdwg.mxu0
      %v1404 = vmul.f32 %v1396, 0.125
      %v1405 = vmul.f32 %v1401, 0.125
      %v1406 = vadd.f32 %v1404, %v563
      %v1407 = vadd.f32 %v1405, %v564
      %v1408 = vsel %vm712, %v1406, -inf
      %1409 = vmax.xlane.f32.xlu0 %v1408
      %v1410 = vpop.xlane.xlu0 %1409
      %v1411 = vsel %vm712, %v1407, -inf
      %1412 = vmax.xlane.f32.xlu0 %v1411
      %v1413 = vpop.xlane.xlu0 %1412
      %v1414 = vsub.f32 %v1406, %v1410
      %v1415 = vsub.f32 %v1407, %v1413
      %v1416 = vmul.f32 %v1414, 1.442695
      %v1417 = vpow.pop %v1416
      %v1418 = vmul.f32 %v1415, 1.442695
      %v1419 = vpow.pop %v1418
      %v1420 = vsel %vm712, %v1417, 0.0
      %1421 = vadd.xlane.f32.xlu0 %v1420
      %v1422 = vpop.xlane.xlu0 %1421
      %v1423 = vsel %vm712, %v1419, 0.0
      %1424 = vadd.xlane.f32.xlu0 %v1423
      %v1425 = vpop.xlane.xlu0 %1424
      %v1426 = vrcp.pop %v1422
      %v1427 = vrcp.pop %v1425
      %v1428 = vmul.f32 %v1417, %v1426
      %v1429 = vmul.f32 %v1419, %v1427
      %1430 = vrot.lane.b32.xlu0 %v700, 80
      %v1431 = vpop.permute.xlu0 %1430
      %1432 = vrot.lane.b32.xlu0 %v704, 80
      %v1433 = vpop.permute.xlu0 %1432
      %v1437 = vsel %vm712, %v1428, 0
      %v1440 = vsel %vm712, %v1429, 0
      %1442 = vmatprep.subr.mxu0 0.0
      %1443 = vmatpush1.msra.mxu0 0.0
      %1444 = vmatprep.subr.mxu0 0.0
      %1445 = vmatpush1.msra.mxu0 0.0
      %1446 = vmatprep.subr.mxu0 0.0
      %1447 = vmatpush1.msra.mxu0 0.0
      %1448 = vmatprep.subr.mxu0 0.0
      %1449 = vmatpush1.msra.mxu0 0.0
      %1450 = vmatprep.subr.mxu0 0.0
      %1451 = vmatpush1.msra.mxu0 0.0
      %1452 = vmatprep.subr.mxu0 0.0
      %1453 = vmatpush1.msra.mxu0 0.0
      %1454 = vmatprep.subr.mxu0 0.0
      %1455 = vmatpush1.msra.mxu0 0.0
      %1456 = vmatprep.subr.mxu0 0.0
      %1457 = vmatpush1.msra.mxu0 0.0
      %1458 = vmatprep.subr.mxu0 0.0
      %1459 = vmatpush1.msra.mxu0 0.0
      %1460 = vmatprep.subr.mxu0 0.0
      %1461 = vmatpush1.msra.mxu0 0.0
      %1462 = vmatprep.subr.mxu0 0.0
      %1463 = vmatpush1.msra.mxu0 0.0
      %1464 = vmatprep.subr.mxu0 0.0
      %1465 = vmatpush1.msra.mxu0 0.0
      %1466 = vmatprep.subr.mxu0 0.0
      %1467 = vmatpush1.msra.mxu0 0.0
      %1468 = vmatprep.subr.mxu0 0.0
      %1469 = vmatpush1.msra.mxu0 0.0
      %1470 = vmatprep.subr.mxu0 0.0
      %1471 = vmatpush1.msra.mxu0 %v1433
      %1472 = vmatprep.subr.mxu0 0.0
      %1473 = vmatpush1.msra.mxu0 %v1431
      %1474 = vmatprep.subr.mxu0 0.0
      %1475 = vmatpush2.msra.mxu0 0.0
      %1476 = vmatprep.subr.mxu0 0.0
      %1477 = vmatpush2.msra.mxu0 0.0
      %1478 = vmatprep.subr.mxu0 0.0
      %1479 = vmatpush2.msra.mxu0 0.0
      %1480 = vmatprep.subr.mxu0 0.0
      %1481 = vmatpush2.msra.mxu0 0.0
      %1482 = vmatprep.subr.mxu0 0.0
      %1483 = vmatpush2.msra.mxu0 0.0
      %1484 = vmatprep.subr.mxu0 0.0
      %1485 = vmatpush2.msra.mxu0 0.0
      %1486 = vmatprep.subr.mxu0 0.0
      %1487 = vmatpush2.msra.mxu0 0.0
      %1488 = vmatprep.subr.mxu0 0.0
      %1489 = vmatpush2.msra.mxu0 0.0
      %1490 = vmatprep.subr.mxu0 0.0
      %1491 = vmatpush2.msra.mxu0 0.0
      %1492 = vmatprep.subr.mxu0 0.0
      %1493 = vmatpush2.msra.mxu0 0.0
      %1494 = vmatprep.subr.mxu0 0.0
      %1495 = vmatpush2.msra.mxu0 0.0
      %1496 = vmatprep.subr.mxu0 0.0
      %1497 = vmatpush2.msra.mxu0 0.0
      %1498 = vmatprep.subr.mxu0 0.0
      %1499 = vmatpush2.msra.mxu0 0.0
      %1500 = vmatprep.subr.mxu0 0.0
      %1501 = vmatpush2.msra.mxu0 0.0
      %1502 = vmatprep.subr.mxu0 0.0
      %1503 = vmatpush2.msra.mxu0 0.0
      %1504 = vmatprep.subr.mxu0 0.0
      %1505 = vmatpush2.msra.mxu0 0.0
      %1506 = vmatprep.mubr.f32.mxu0 0.0
      %1507 = vmatmul.mubr.f32.gmra.mxu0 %v1437
      %v1508 = vpop.f32.mrf.mxu0
      %v1509 = vadd.f32 0.0, %v1508
      %v1510 = vpop.f32.mrf.mxu0
      %1511 = vmatprep.mubr.f32.mxu0 0.0
      %1512 = vmatmul.mubr.f32.gmra.mxu0 %v1440
      %v1513 = vpop.f32.mrf.mxu0
      %v1514 = vadd.f32 0.0, %v1513
      %v1515 = vpop.f32.mrf.mxu0
      %1516 = vdwg.mxu0
      %1519 = vrot.lane.b32.xlu0 %v1101, 16
      %v1520 = vpop.permute.xlu0 %1519
      %1521 = vrot.lane.b32.xlu0 %v1106, 16
      %v1522 = vpop.permute.xlu0 %1521
      %1527 = vrot.lane.b32.xlu0 %v1305, 32
      %v1528 = vpop.permute.xlu0 %1527
      %1529 = vrot.lane.b32.xlu0 %v1310, 32
      %v1530 = vpop.permute.xlu0 %1529
      %1535 = vrot.lane.b32.xlu0 %v1509, 48
      %v1536 = vpop.permute.xlu0 %1535
      %1537 = vrot.lane.b32.xlu0 %v1514, 48
      %v1538 = vpop.permute.xlu0 %1537
      %v1541 = vsel %vm712, %v895, %v1520
      %v1542 = vsel %vm712, %v900, %v1522
      %vm1543 = vcmask 261120
      %v1544 = vsel %vm1543, %v1541, %v1528
      %v1545 = vsel %vm1543, %v1542, %v1530
      %vm1546 = vcmask 392192
      %v1547 = vsel %vm1546, %v1544, %v1536
      %v1548 = vsel %vm1546, %v1545, %v1538
      %v1549 = vpack.c.bf16 %v1548, %v1547
      %v1550 = vld [vmem:[%s5] sm:$0xf]
      %v1551 = vld [vmem:[%s5 + $0x4] sm:$0xf]
      %v1552 = vld [vmem:[%s5 + $0x8] sm:$0xf]
      %v1553 = vld [vmem:[%s5 + $0xc] sm:$0xf]
      %v1554 = vld [vmem:[%s5 + $0x10] sm:$0xf]
      %v1555 = vld [vmem:[%s5 + $0x14] sm:$0xf]
      %v1556 = vld [vmem:[%s5 + $0x18] sm:$0xf]
      %v1557 = vld [vmem:[%s5 + $0x1c] sm:$0xf]
      %v1558 = vld [vmem:[%s6] sm:$0x1]
      %v1560 = vlaneseq
      %v1561 = vshrl.u32 %v1560, 7
      %v1562 = vsub.s32 0, %v1561
      %v1563 = vrot.slane %v1558, %v1562
      %v1573 = vunpack.c.l.b16 %v1550
      %v1574 = vunpack.c.l.b16 %v1551
      %v1575 = vunpack.c.l.b16 %v1552
      %v1576 = vunpack.c.l.b16 %v1553
      %v1577 = vunpack.c.l.b16 %v1554
      %v1578 = vunpack.c.l.b16 %v1555
      %v1579 = vunpack.c.l.b16 %v1556
      %v1580 = vunpack.c.l.b16 %v1557
      %v1581 = vpack.c.b16 %v1574, %v1573
      %v1582 = vpack.c.b16 %v1576, %v1575
      %v1583 = vpack.c.b16 %v1578, %v1577
      %v1584 = vpack.c.b16 %v1580, %v1579
      %v1590 = vsel %vm567, %v1549, 0
      %1592 = vmatprep.subr.bf16.mxu0 0
      %1593 = vmatpush1.bf16.msra.mxu0 0
      %1594 = vmatprep.subr.bf16.mxu0 0
      %1595 = vmatpush1.bf16.msra.mxu0 0
      %1596 = vmatprep.subr.bf16.mxu0 0
      %1597 = vmatpush1.bf16.msra.mxu0 0
      %1598 = vmatprep.subr.bf16.mxu0 0
      %1599 = vmatpush1.bf16.msra.mxu0 0
      %1600 = vmatprep.subr.bf16.mxu0 0
      %1601 = vmatpush1.bf16.msra.mxu0 %v1584
      %1602 = vmatprep.subr.bf16.mxu0 0
      %1603 = vmatpush1.bf16.msra.mxu0 %v1583
      %1604 = vmatprep.subr.bf16.mxu0 0
      %1605 = vmatpush1.bf16.msra.mxu0 %v1582
      %1606 = vmatprep.subr.bf16.mxu0 0
      %1607 = vmatpush1.bf16.msra.mxu0 %v1581
      %1608 = vmatprep.subr.bf16.mxu0 0
      %1609 = vmatpush2.bf16.msra.mxu0 0
      %1610 = vmatprep.subr.bf16.mxu0 0
      %1611 = vmatpush2.bf16.msra.mxu0 0
      %1612 = vmatprep.subr.bf16.mxu0 0
      %1613 = vmatpush2.bf16.msra.mxu0 0
      %1614 = vmatprep.subr.bf16.mxu0 0
      %1615 = vmatpush2.bf16.msra.mxu0 0
      %1616 = vmatprep.subr.bf16.mxu0 0
      %1617 = vmatpush2.bf16.msra.mxu0 0
      %1618 = vmatprep.subr.bf16.mxu0 0
      %1619 = vmatpush2.bf16.msra.mxu0 0
      %1620 = vmatprep.subr.bf16.mxu0 0
      %1621 = vmatpush2.bf16.msra.mxu0 0
      %1622 = vmatprep.subr.bf16.mxu0 0
      %1623 = vmatpush2.bf16.msra.mxu0 0
      %1624 = vmatprep.mubr.bf16.mxu0 0
      %1625 = vmatmul.mubr.bf16.gmra.mxu0 %v1590
      %v1626 = vpop.f32.mrf.mxu0
      %v1627 = vadd.f32 %v1563, %v1626
      %v1628 = vpop.f32.mrf.mxu0
      %v1629 = vpop.f32.mrf.mxu0
      %v1630 = vadd.f32 %v1563, %v1629
      %v1631 = vpop.f32.mrf.mxu0
      %1632 = vdwg.mxu0
      %v1633 = vadd.f32 %v554, %v1627
      %v1634 = vadd.f32 %v555, %v1630
      %v1635 = vld [vmem:[%s7] sm:$0x1]
      %v1636 = vld [vmem:[%s8] sm:$0x1]
      %v1637 = vsel %vm567, %v1633, 0.0
      %1638 = vadd.xlane.f32.xlu0 %v1637
      %v1639 = vpop.xlane.xlu0 %1638
      %v1640 = vsel %vm567, %v1634, 0.0
      %1641 = vadd.xlane.f32.xlu0 %v1640
      %v1642 = vpop.xlane.xlu0 %1641
      %v1643 = vmul.f32 %v1639, %v574
      %v1644 = vmul.f32 %v1642, %v574
      %v1645 = vsub.f32 %v1633, %v1643
      %v1646 = vsub.f32 %v1634, %v1644
      %v1647 = vmul.f32 %v1645, %v1645
      %v1648 = vmul.f32 %v1646, %v1646
      %v1649 = vsel %vm567, %v1647, 0.0
      %1650 = vadd.xlane.f32.xlu0 %v1649
      %v1651 = vpop.xlane.xlu0 %1650
      %v1652 = vsel %vm567, %v1648, 0.0
      %1653 = vadd.xlane.f32.xlu0 %v1652
      %v1654 = vpop.xlane.xlu0 %1653
      %v1655 = vmul.f32 %v1651, %v574
      %v1656 = vmul.f32 %v1654, %v574
      %v1657 = vadd.f32 %v1655, 1e-05
      %v1658 = vadd.f32 %v1656, 1e-05
      %v1659 = vrsqrt.pop %v1657
      %v1660 = vrsqrt.pop %v1658
      %v1661 = vmul.f32 %v1645, %v1659
      %v1662 = vmul.f32 %v1646, %v1660
      %v1664 = vlaneseq
      %v1665 = vshrl.u32 %v1664, 7
      %v1666 = vsub.s32 0, %v1665
      %v1667 = vrot.slane %v1635, %v1666
      %v1669 = vmul.f32 %v1661, %v1667
      %v1670 = vmul.f32 %v1662, %v1667
      %v1672 = vlaneseq
      %v1673 = vshrl.u32 %v1672, 7
      %v1674 = vsub.s32 0, %v1673
      %v1675 = vrot.slane %v1636, %v1674
      %v1677 = vadd.f32 %v1669, %v1675
      %v1678 = vadd.f32 %v1670, %v1675
      %v1679 = vpack.c.bf16 %v1678, %v1677
      %v1680 = vld [vmem:[%s9] sm:$0xff]
      %v1681 = vld [vmem:[%s9 + $0x8] sm:$0xff]
      %v1682 = vld [vmem:[%s9 + $0x10] sm:$0xff]
      %v1683 = vld [vmem:[%s9 + $0x18] sm:$0xff]
      %v1684 = vld [vmem:[%s9 + $0x20] sm:$0xff]
      %v1685 = vld [vmem:[%s9 + $0x28] sm:$0xff]
      %v1686 = vld [vmem:[%s9 + $0x30] sm:$0xff]
      %v1687 = vld [vmem:[%s9 + $0x38] sm:$0xff]
      %v1688 = vld [vmem:[%s10] sm:$0x3]
      %v1690 = vlaneseq
      %v1691 = vshrl.u32 %v1690, 7
      %v1692 = vsub.s32 0, %v1691
      %v1693 = vrot.slane %v1688, %v1692
      %v1694 = vlaneseq
      %v1695 = vshrl.u32 %v1694, 7
      %v1696 = vsub.s32 1, %v1695
      %v1697 = vrot.slane %v1688, %v1696
      %v1708 = vunpack.c.l.b16 %v1680
      %v1709 = vunpack.c.h.b16 %v1680
      %v1710 = vunpack.c.l.b16 %v1681
      %v1711 = vunpack.c.h.b16 %v1681
      %v1712 = vunpack.c.l.b16 %v1682
      %v1713 = vunpack.c.h.b16 %v1682
      %v1714 = vunpack.c.l.b16 %v1683
      %v1715 = vunpack.c.h.b16 %v1683
      %v1716 = vunpack.c.l.b16 %v1684
      %v1717 = vunpack.c.h.b16 %v1684
      %v1718 = vunpack.c.l.b16 %v1685
      %v1719 = vunpack.c.h.b16 %v1685
      %v1720 = vunpack.c.l.b16 %v1686
      %v1721 = vunpack.c.h.b16 %v1686
      %v1722 = vunpack.c.l.b16 %v1687
      %v1723 = vunpack.c.h.b16 %v1687
      %v1724 = vpack.c.b16 %v1710, %v1708
      %v1725 = vpack.c.b16 %v1711, %v1709
      %v1726 = vpack.c.b16 %v1714, %v1712
      %v1727 = vpack.c.b16 %v1715, %v1713
      %v1728 = vpack.c.b16 %v1718, %v1716
      %v1729 = vpack.c.b16 %v1719, %v1717
      %v1730 = vpack.c.b16 %v1722, %v1720
      %v1731 = vpack.c.b16 %v1723, %v1721
      %v1741 = vsel %vm567, %v1679, 0
      %1743 = vmatprep.subr.bf16.mxu0 0
      %1744 = vmatpush1.bf16.msra.mxu0 0
      %1745 = vmatprep.subr.bf16.mxu0 0
      %1746 = vmatpush1.bf16.msra.mxu0 0
      %1747 = vmatprep.subr.bf16.mxu0 0
      %1748 = vmatpush1.bf16.msra.mxu0 0
      %1749 = vmatprep.subr.bf16.mxu0 0
      %1750 = vmatpush1.bf16.msra.mxu0 0
      %1751 = vmatprep.subr.bf16.mxu0 %v1731
      %1752 = vmatpush1.bf16.msra.mxu0 %v1730
      %1753 = vmatprep.subr.bf16.mxu0 %v1729
      %1754 = vmatpush1.bf16.msra.mxu0 %v1728
      %1755 = vmatprep.subr.bf16.mxu0 %v1727
      %1756 = vmatpush1.bf16.msra.mxu0 %v1726
      %1757 = vmatprep.subr.bf16.mxu0 %v1725
      %1758 = vmatpush1.bf16.msra.mxu0 %v1724
      %1759 = vmatprep.subr.bf16.mxu0 0
      %1760 = vmatpush2.bf16.msra.mxu0 0
      %1761 = vmatprep.subr.bf16.mxu0 0
      %1762 = vmatpush2.bf16.msra.mxu0 0
      %1763 = vmatprep.subr.bf16.mxu0 0
      %1764 = vmatpush2.bf16.msra.mxu0 0
      %1765 = vmatprep.subr.bf16.mxu0 0
      %1766 = vmatpush2.bf16.msra.mxu0 0
      %1767 = vmatprep.subr.bf16.mxu0 0
      %1768 = vmatpush2.bf16.msra.mxu0 0
      %1769 = vmatprep.subr.bf16.mxu0 0
      %1770 = vmatpush2.bf16.msra.mxu0 0
      %1771 = vmatprep.subr.bf16.mxu0 0
      %1772 = vmatpush2.bf16.msra.mxu0 0
      %1773 = vmatprep.subr.bf16.mxu0 0
      %1774 = vmatpush2.bf16.msra.mxu0 0
      %1775 = vmatprep.mubr.bf16.mxu0 0
      %1776 = vmatmul.mubr.bf16.gmra.mxu0 %v1741
      %v1777 = vpop.f32.mrf.mxu0
      %v1778 = vadd.f32 %v1693, %v1777
      %v1779 = vpop.f32.mrf.mxu0
      %v1780 = vadd.f32 %v1697, %v1779
      %v1781 = vpop.f32.mrf.mxu0
      %v1782 = vadd.f32 %v1693, %v1781
      %v1783 = vpop.f32.mrf.mxu0
      %v1784 = vadd.f32 %v1697, %v1783
      %1785 = vdwg.mxu0
      %v1786 = vmax.f32 %v1778, 0.0
      %v1787 = vmax.f32 %v1780, 0.0
      %v1788 = vmax.f32 %v1782, 0.0
      %v1789 = vmax.f32 %v1784, 0.0
      %v1790 = vpack.c.bf16 %v1788, %v1786
      %v1791 = vpack.c.bf16 %v1789, %v1787
      %v1792 = vld [vmem:[%s11] sm:$0xf]
      %v1793 = vld [vmem:[%s11 + $0x4] sm:$0xf]
      %v1794 = vld [vmem:[%s11 + $0x8] sm:$0xf]
      %v1795 = vld [vmem:[%s11 + $0xc] sm:$0xf]
      %v1796 = vld [vmem:[%s11 + $0x10] sm:$0xf]
      %v1797 = vld [vmem:[%s11 + $0x14] sm:$0xf]
      %v1798 = vld [vmem:[%s11 + $0x18] sm:$0xf]
      %v1799 = vld [vmem:[%s11 + $0x1c] sm:$0xf]
      %v1800 = vld [vmem:[%s11 + $0x20] sm:$0xf]
      %v1801 = vld [vmem:[%s11 + $0x24] sm:$0xf]
      %v1802 = vld [vmem:[%s11 + $0x28] sm:$0xf]
      %v1803 = vld [vmem:[%s11 + $0x2c] sm:$0xf]
      %v1804 = vld [vmem:[%s11 + $0x30] sm:$0xf]
      %v1805 = vld [vmem:[%s11 + $0x34] sm:$0xf]
      %v1806 = vld [vmem:[%s11 + $0x38] sm:$0xf]
      %v1807 = vld [vmem:[%s11 + $0x3c] sm:$0xf]
      %v1808 = vld [vmem:[%s11 + $0x40] sm:$0xf]
      %v1809 = vld [vmem:[%s11 + $0x44] sm:$0xf]
      %v1810 = vld [vmem:[%s11 + $0x48] sm:$0xf]
      %v1811 = vld [vmem:[%s11 + $0x4c] sm:$0xf]
      %v1812 = vld [vmem:[%s11 + $0x50] sm:$0xf]
      %v1813 = vld [vmem:[%s11 + $0x54] sm:$0xf]
      %v1814 = vld [vmem:[%s11 + $0x58] sm:$0xf]
      %v1815 = vld [vmem:[%s11 + $0x5c] sm:$0xf]
      %v1816 = vld [vmem:[%s11 + $0x60] sm:$0xf]
      %v1817 = vld [vmem:[%s11 + $0x64] sm:$0xf]
      %v1818 = vld [vmem:[%s11 + $0x68] sm:$0xf]
      %v1819 = vld [vmem:[%s11 + $0x6c] sm:$0xf]
      %v1820 = vld [vmem:[%s11 + $0x70] sm:$0xf]
      %v1821 = vld [vmem:[%s11 + $0x74] sm:$0xf]
      %v1822 = vld [vmem:[%s11 + $0x78] sm:$0xf]
      %v1823 = vld [vmem:[%s11 + $0x7c] sm:$0xf]
      %v1824 = vld [vmem:[%s12] sm:$0x1]
      %v1826 = vlaneseq
      %v1827 = vshrl.u32 %v1826, 7
      %v1828 = vsub.s32 0, %v1827
      %v1829 = vrot.slane %v1824, %v1828
      %v1863 = vunpack.c.l.b16 %v1792
      %v1864 = vunpack.c.l.b16 %v1793
      %v1865 = vunpack.c.l.b16 %v1794
      %v1866 = vunpack.c.l.b16 %v1795
      %v1867 = vunpack.c.l.b16 %v1796
      %v1868 = vunpack.c.l.b16 %v1797
      %v1869 = vunpack.c.l.b16 %v1798
      %v1870 = vunpack.c.l.b16 %v1799
      %v1871 = vunpack.c.l.b16 %v1800
      %v1872 = vunpack.c.l.b16 %v1801
      %v1873 = vunpack.c.l.b16 %v1802
      %v1874 = vunpack.c.l.b16 %v1803
      %v1875 = vunpack.c.l.b16 %v1804
      %v1876 = vunpack.c.l.b16 %v1805
      %v1877 = vunpack.c.l.b16 %v1806
      %v1878 = vunpack.c.l.b16 %v1807
      %v1879 = vunpack.c.l.b16 %v1808
      %v1880 = vunpack.c.l.b16 %v1809
      %v1881 = vunpack.c.l.b16 %v1810
      %v1882 = vunpack.c.l.b16 %v1811
      %v1883 = vunpack.c.l.b16 %v1812
      %v1884 = vunpack.c.l.b16 %v1813
      %v1885 = vunpack.c.l.b16 %v1814
      %v1886 = vunpack.c.l.b16 %v1815
      %v1887 = vunpack.c.l.b16 %v1816
      %v1888 = vunpack.c.l.b16 %v1817
      %v1889 = vunpack.c.l.b16 %v1818
      %v1890 = vunpack.c.l.b16 %v1819
      %v1891 = vunpack.c.l.b16 %v1820
      %v1892 = vunpack.c.l.b16 %v1821
      %v1893 = vunpack.c.l.b16 %v1822
      %v1894 = vunpack.c.l.b16 %v1823
      %v1895 = vpack.c.b16 %v1864, %v1863
      %v1896 = vpack.c.b16 %v1866, %v1865
      %v1897 = vpack.c.b16 %v1868, %v1867
      %v1898 = vpack.c.b16 %v1870, %v1869
      %v1899 = vpack.c.b16 %v1872, %v1871
      %v1900 = vpack.c.b16 %v1874, %v1873
      %v1901 = vpack.c.b16 %v1876, %v1875
      %v1902 = vpack.c.b16 %v1878, %v1877
      %v1903 = vpack.c.b16 %v1880, %v1879
      %v1904 = vpack.c.b16 %v1882, %v1881
      %v1905 = vpack.c.b16 %v1884, %v1883
      %v1906 = vpack.c.b16 %v1886, %v1885
      %v1907 = vpack.c.b16 %v1888, %v1887
      %v1908 = vpack.c.b16 %v1890, %v1889
      %v1909 = vpack.c.b16 %v1892, %v1891
      %v1910 = vpack.c.b16 %v1894, %v1893
      %1927 = vmatprep.subr.bf16.mxu0 0
      %1928 = vmatpush1.bf16.msra.mxu0 %v1902
      %1929 = vmatprep.subr.bf16.mxu0 0
      %1930 = vmatpush1.bf16.msra.mxu0 %v1901
      %1931 = vmatprep.subr.bf16.mxu0 0
      %1932 = vmatpush1.bf16.msra.mxu0 %v1900
      %1933 = vmatprep.subr.bf16.mxu0 0
      %1934 = vmatpush1.bf16.msra.mxu0 %v1899
      %1935 = vmatprep.subr.bf16.mxu0 0
      %1936 = vmatpush1.bf16.msra.mxu0 %v1898
      %1937 = vmatprep.subr.bf16.mxu0 0
      %1938 = vmatpush1.bf16.msra.mxu0 %v1897
      %1939 = vmatprep.subr.bf16.mxu0 0
      %1940 = vmatpush1.bf16.msra.mxu0 %v1896
      %1941 = vmatprep.subr.bf16.mxu0 0
      %1942 = vmatpush1.bf16.msra.mxu0 %v1895
      %1943 = vmatprep.subr.bf16.mxu0 0
      %1944 = vmatpush2.bf16.msra.mxu0 %v1910
      %1945 = vmatprep.subr.bf16.mxu0 0
      %1946 = vmatpush2.bf16.msra.mxu0 %v1909
      %1947 = vmatprep.subr.bf16.mxu0 0
      %1948 = vmatpush2.bf16.msra.mxu0 %v1908
      %1949 = vmatprep.subr.bf16.mxu0 0
      %1950 = vmatpush2.bf16.msra.mxu0 %v1907
      %1951 = vmatprep.subr.bf16.mxu0 0
      %1952 = vmatpush2.bf16.msra.mxu0 %v1906
      %1953 = vmatprep.subr.bf16.mxu0 0
      %1954 = vmatpush2.bf16.msra.mxu0 %v1905
      %1955 = vmatprep.subr.bf16.mxu0 0
      %1956 = vmatpush2.bf16.msra.mxu0 %v1904
      %1957 = vmatprep.subr.bf16.mxu0 0
      %1958 = vmatpush2.bf16.msra.mxu0 %v1903
      %1959 = vmatprep.mubr.bf16.mxu0 %v1791
      %1960 = vmatmul.mubr.bf16.gmra.mxu0 %v1790
      %v1961 = vpop.f32.mrf.mxu0
      %v1962 = vadd.f32 %v1829, %v1961
      %v1963 = vpop.f32.mrf.mxu0
      %v1964 = vpop.f32.mrf.mxu0
      %v1965 = vadd.f32 %v1829, %v1964
      %v1966 = vpop.f32.mrf.mxu0
      %1967 = vdwg.mxu0
      %v1968 = vadd.f32 %v1633, %v1962
      %v1969 = vadd.f32 %v1634, %v1965
      %s1970 = scalar_lea.vmem %s2, 1
      %v1971 = vld [vmem:[%s1970] sm:$0x1]
      %s1972 = scalar_lea.vmem %s3, 1
      %v1973 = vld [vmem:[%s1972] sm:$0x1]
      %v1974 = vsel %vm567, %v1968, 0.0
      %1975 = vadd.xlane.f32.xlu0 %v1974
      %v1976 = vpop.xlane.xlu0 %1975
      %v1977 = vsel %vm567, %v1969, 0.0
      %1978 = vadd.xlane.f32.xlu0 %v1977
      %v1979 = vpop.xlane.xlu0 %1978
      %v1980 = vmul.f32 %v1976, %v574
      %v1981 = vmul.f32 %v1979, %v574
      %v1982 = vsub.f32 %v1968, %v1980
      %v1983 = vsub.f32 %v1969, %v1981
      %v1984 = vmul.f32 %v1982, %v1982
      %v1985 = vmul.f32 %v1983, %v1983
      %v1986 = vsel %vm567, %v1984, 0.0
      %1987 = vadd.xlane.f32.xlu0 %v1986
      %v1988 = vpop.xlane.xlu0 %1987
      %v1989 = vsel %vm567, %v1985, 0.0
      %1990 = vadd.xlane.f32.xlu0 %v1989
      %v1991 = vpop.xlane.xlu0 %1990
      %v1992 = vmul.f32 %v1988, %v574
      %v1993 = vmul.f32 %v1991, %v574
      %v1994 = vadd.f32 %v1992, 1e-05
      %v1995 = vadd.f32 %v1993, 1e-05
      %v1996 = vrsqrt.pop %v1994
      %v1997 = vrsqrt.pop %v1995
      %v1998 = vmul.f32 %v1982, %v1996
      %v1999 = vmul.f32 %v1983, %v1997
      %v2001 = vlaneseq
      %v2002 = vshrl.u32 %v2001, 7
      %v2003 = vsub.s32 0, %v2002
      %v2004 = vrot.slane %v1971, %v2003
      %v2006 = vmul.f32 %v1998, %v2004
      %v2007 = vmul.f32 %v1999, %v2004
      %v2009 = vlaneseq
      %v2010 = vshrl.u32 %v2009, 7
      %v2011 = vsub.s32 0, %v2010
      %v2012 = vrot.slane %v1973, %v2011
      %v2014 = vadd.f32 %v2006, %v2012
      %v2015 = vadd.f32 %v2007, %v2012
      %v2016 = vpack.c.bf16 %v2015, %v2014
      %s2017 = scalar_lea.vmem %s4, 64
      %v2018 = vld [vmem:[%s2017] sm:$0xff]
      %v2019 = vld [vmem:[%s2017 + $0x8] sm:$0xff]
      %v2020 = vld [vmem:[%s2017 + $0x10] sm:$0xff]
      %v2021 = vld [vmem:[%s2017 + $0x18] sm:$0xff]
      %v2022 = vld [vmem:[%s2017 + $0x20] sm:$0xff]
      %v2023 = vld [vmem:[%s2017 + $0x28] sm:$0xff]
      %v2024 = vld [vmem:[%s2017 + $0x30] sm:$0xff]
      %v2025 = vld [vmem:[%s2017 + $0x38] sm:$0xff]
      %v2034 = vunpack.c.l.b16 %v2018
      %v2035 = vunpack.c.h.b16 %v2018
      %v2036 = vunpack.c.l.b16 %v2019
      %v2037 = vunpack.c.h.b16 %v2019
      %v2038 = vunpack.c.l.b16 %v2020
      %v2039 = vunpack.c.h.b16 %v2020
      %v2040 = vunpack.c.l.b16 %v2021
      %v2041 = vunpack.c.h.b16 %v2021
      %v2042 = vunpack.c.l.b16 %v2022
      %v2043 = vunpack.c.h.b16 %v2022
      %v2044 = vunpack.c.l.b16 %v2023
      %v2045 = vunpack.c.h.b16 %v2023
      %v2046 = vunpack.c.l.b16 %v2024
      %v2047 = vunpack.c.h.b16 %v2024
      %v2048 = vunpack.c.l.b16 %v2025
      %v2049 = vunpack.c.h.b16 %v2025
      %v2050 = vpack.c.b16 %v2036, %v2034
      %v2051 = vpack.c.b16 %v2037, %v2035
      %v2052 = vpack.c.b16 %v2040, %v2038
      %v2053 = vpack.c.b16 %v2041, %v2039
      %v2054 = vpack.c.b16 %v2044, %v2042
      %v2055 = vpack.c.b16 %v2045, %v2043
      %v2056 = vpack.c.b16 %v2048, %v2046
      %v2057 = vpack.c.b16 %v2049, %v2047
      %v2067 = vsel %vm567, %v2016, 0
      %2069 = vmatprep.subr.bf16.mxu0 0
      %2070 = vmatpush1.bf16.msra.mxu0 0
      %2071 = vmatprep.subr.bf16.mxu0 0
      %2072 = vmatpush1.bf16.msra.mxu0 0
      %2073 = vmatprep.subr.bf16.mxu0 0
      %2074 = vmatpush1.bf16.msra.mxu0 0
      %2075 = vmatprep.subr.bf16.mxu0 0
      %2076 = vmatpush1.bf16.msra.mxu0 0
      %2077 = vmatprep.subr.bf16.mxu0 %v2057
      %2078 = vmatpush1.bf16.msra.mxu0 %v2056
      %2079 = vmatprep.subr.bf16.mxu0 %v2055
      %2080 = vmatpush1.bf16.msra.mxu0 %v2054
      %2081 = vmatprep.subr.bf16.mxu0 %v2053
      %2082 = vmatpush1.bf16.msra.mxu0 %v2052
      %2083 = vmatprep.subr.bf16.mxu0 %v2051
      %2084 = vmatpush1.bf16.msra.mxu0 %v2050
      %2085 = vmatprep.subr.bf16.mxu0 0
      %2086 = vmatpush2.bf16.msra.mxu0 0
      %2087 = vmatprep.subr.bf16.mxu0 0
      %2088 = vmatpush2.bf16.msra.mxu0 0
      %2089 = vmatprep.subr.bf16.mxu0 0
      %2090 = vmatpush2.bf16.msra.mxu0 0
      %2091 = vmatprep.subr.bf16.mxu0 0
      %2092 = vmatpush2.bf16.msra.mxu0 0
      %2093 = vmatprep.subr.bf16.mxu0 0
      %2094 = vmatpush2.bf16.msra.mxu0 0
      %2095 = vmatprep.subr.bf16.mxu0 0
      %2096 = vmatpush2.bf16.msra.mxu0 0
      %2097 = vmatprep.subr.bf16.mxu0 0
      %2098 = vmatpush2.bf16.msra.mxu0 0
      %2099 = vmatprep.subr.bf16.mxu0 0
      %2100 = vmatpush2.bf16.msra.mxu0 0
      %2101 = vmatprep.mubr.bf16.mxu0 0
      %2102 = vmatmul.mubr.bf16.gmra.mxu0 %v2067
      %v2103 = vpop.f32.mrf.mxu0
      %v2104 = vadd.f32 0.0, %v2103
      %v2105 = vpop.f32.mrf.mxu0
      %v2106 = vadd.f32 0.0, %v2105
      %v2107 = vpop.f32.mrf.mxu0
      %v2108 = vadd.f32 0.0, %v2107
      %v2109 = vpop.f32.mrf.mxu0
      %v2110 = vadd.f32 0.0, %v2109
      %2111 = vdwg.mxu0
      %2114 = vrot.lane.b32.xlu0 %v2104, 64
      %v2115 = vpop.permute.xlu0 %2114
      %2116 = vrot.lane.b32.xlu0 %v2108, 64
      %v2117 = vpop.permute.xlu0 %2116
      %v2118 = vsel %vm712, %v2104, 0
      %v2120 = vsel %vm712, %v2108, 0
      %v2122 = vsel %vm712, %v2115, 0
      %v2124 = vsel %vm712, %v2117, 0
      %2126 = vmatprep.subr.mxu0 0.0
      %2127 = vmatpush1.xpose.msra.mxu0 0.0
      %2128 = vmatprep.subr.mxu0 0.0
      %2129 = vmatpush1.xpose.msra.mxu0 0.0
      %2130 = vmatprep.subr.mxu0 0.0
      %2131 = vmatpush1.xpose.msra.mxu0 0.0
      %2132 = vmatprep.subr.mxu0 0.0
      %2133 = vmatpush1.xpose.msra.mxu0 0.0
      %2134 = vmatprep.subr.mxu0 0.0
      %2135 = vmatpush1.xpose.msra.mxu0 0.0
      %2136 = vmatprep.subr.mxu0 0.0
      %2137 = vmatpush1.xpose.msra.mxu0 0.0
      %2138 = vmatprep.subr.mxu0 0.0
      %2139 = vmatpush1.xpose.msra.mxu0 0.0
      %2140 = vmatprep.subr.mxu0 0.0
      %2141 = vmatpush1.xpose.msra.mxu0 0.0
      %2142 = vmatprep.subr.mxu0 0.0
      %2143 = vmatpush1.xpose.msra.mxu0 0.0
      %2144 = vmatprep.subr.mxu0 0.0
      %2145 = vmatpush1.xpose.msra.mxu0 0.0
      %2146 = vmatprep.subr.mxu0 0.0
      %2147 = vmatpush1.xpose.msra.mxu0 0.0
      %2148 = vmatprep.subr.mxu0 0.0
      %2149 = vmatpush1.xpose.msra.mxu0 0.0
      %2150 = vmatprep.subr.mxu0 0.0
      %2151 = vmatpush1.xpose.msra.mxu0 0.0
      %2152 = vmatprep.subr.mxu0 0.0
      %2153 = vmatpush1.xpose.msra.mxu0 0.0
      %2154 = vmatprep.subr.mxu0 0.0
      %2155 = vmatpush1.xpose.msra.mxu0 %v2124
      %2156 = vmatprep.subr.mxu0 0.0
      %2157 = vmatpush1.xpose.msra.mxu0 %v2122
      %2158 = vmatprep.subr.mxu0 0.0
      %2159 = vmatpush2.xpose.msra.mxu0 0.0
      %2160 = vmatprep.subr.mxu0 0.0
      %2161 = vmatpush2.xpose.msra.mxu0 0.0
      %2162 = vmatprep.subr.mxu0 0.0
      %2163 = vmatpush2.xpose.msra.mxu0 0.0
      %2164 = vmatprep.subr.mxu0 0.0
      %2165 = vmatpush2.xpose.msra.mxu0 0.0
      %2166 = vmatprep.subr.mxu0 0.0
      %2167 = vmatpush2.xpose.msra.mxu0 0.0
      %2168 = vmatprep.subr.mxu0 0.0
      %2169 = vmatpush2.xpose.msra.mxu0 0.0
      %2170 = vmatprep.subr.mxu0 0.0
      %2171 = vmatpush2.xpose.msra.mxu0 0.0
      %2172 = vmatprep.subr.mxu0 0.0
      %2173 = vmatpush2.xpose.msra.mxu0 0.0
      %2174 = vmatprep.subr.mxu0 0.0
      %2175 = vmatpush2.xpose.msra.mxu0 0.0
      %2176 = vmatprep.subr.mxu0 0.0
      %2177 = vmatpush2.xpose.msra.mxu0 0.0
      %2178 = vmatprep.subr.mxu0 0.0
      %2179 = vmatpush2.xpose.msra.mxu0 0.0
      %2180 = vmatprep.subr.mxu0 0.0
      %2181 = vmatpush2.xpose.msra.mxu0 0.0
      %2182 = vmatprep.subr.mxu0 0.0
      %2183 = vmatpush2.xpose.msra.mxu0 0.0
      %2184 = vmatprep.subr.mxu0 0.0
      %2185 = vmatpush2.xpose.msra.mxu0 0.0
      %2186 = vmatprep.subr.mxu0 0.0
      %2187 = vmatpush2.xpose.msra.mxu0 0.0
      %2188 = vmatprep.subr.mxu0 0.0
      %2189 = vmatpush2.xpose.msra.mxu0 0.0
      %2190 = vmatprep.mubr.f32.mxu0 0.0
      %2191 = vmatmul.mubr.f32.gmra.mxu0 %v2118
      %v2192 = vpop.f32.mrf.mxu0
      %v2193 = vadd.f32 0.0, %v2192
      %v2194 = vpop.f32.mrf.mxu0
      %2195 = vmatprep.mubr.f32.mxu0 0.0
      %2196 = vmatmul.mubr.f32.gmra.mxu0 %v2120
      %v2197 = vpop.f32.mrf.mxu0
      %v2198 = vadd.f32 0.0, %v2197
      %v2199 = vpop.f32.mrf.mxu0
      %2200 = vdwg.mxu0
      %v2201 = vmul.f32 %v2193, 0.125
      %v2202 = vmul.f32 %v2198, 0.125
      %v2203 = vadd.f32 %v2201, %v563
      %v2204 = vadd.f32 %v2202, %v564
      %v2205 = vsel %vm712, %v2203, -inf
      %2206 = vmax.xlane.f32.xlu0 %v2205
      %v2207 = vpop.xlane.xlu0 %2206
      %v2208 = vsel %vm712, %v2204, -inf
      %2209 = vmax.xlane.f32.xlu0 %v2208
      %v2210 = vpop.xlane.xlu0 %2209
      %v2211 = vsub.f32 %v2203, %v2207
      %v2212 = vsub.f32 %v2204, %v2210
      %v2213 = vmul.f32 %v2211, 1.442695
      %v2214 = vpow.pop %v2213
      %v2215 = vmul.f32 %v2212, 1.442695
      %v2216 = vpow.pop %v2215
      %v2217 = vsel %vm712, %v2214, 0.0
      %2218 = vadd.xlane.f32.xlu0 %v2217
      %v2219 = vpop.xlane.xlu0 %2218
      %v2220 = vsel %vm712, %v2216, 0.0
      %2221 = vadd.xlane.f32.xlu0 %v2220
      %v2222 = vpop.xlane.xlu0 %2221
      %v2223 = vrcp.pop %v2219
      %v2224 = vrcp.pop %v2222
      %v2225 = vmul.f32 %v2214, %v2223
      %v2226 = vmul.f32 %v2216, %v2224
      %v2228 = vsel %vm712, %v2225, 0
      %v2231 = vsel %vm712, %v2226, 0
      %2233 = vmatprep.subr.mxu0 0.0
      %2234 = vmatpush1.msra.mxu0 0.0
      %2235 = vmatprep.subr.mxu0 0.0
      %2236 = vmatpush1.msra.mxu0 0.0
      %2237 = vmatprep.subr.mxu0 0.0
      %2238 = vmatpush1.msra.mxu0 0.0
      %2239 = vmatprep.subr.mxu0 0.0
      %2240 = vmatpush1.msra.mxu0 0.0
      %2241 = vmatprep.subr.mxu0 0.0
      %2242 = vmatpush1.msra.mxu0 0.0
      %2243 = vmatprep.subr.mxu0 0.0
      %2244 = vmatpush1.msra.mxu0 0.0
      %2245 = vmatprep.subr.mxu0 0.0
      %2246 = vmatpush1.msra.mxu0 0.0
      %2247 = vmatprep.subr.mxu0 0.0
      %2248 = vmatpush1.msra.mxu0 0.0
      %2249 = vmatprep.subr.mxu0 0.0
      %2250 = vmatpush1.msra.mxu0 0.0
      %2251 = vmatprep.subr.mxu0 0.0
      %2252 = vmatpush1.msra.mxu0 0.0
      %2253 = vmatprep.subr.mxu0 0.0
      %2254 = vmatpush1.msra.mxu0 0.0
      %2255 = vmatprep.subr.mxu0 0.0
      %2256 = vmatpush1.msra.mxu0 0.0
      %2257 = vmatprep.subr.mxu0 0.0
      %2258 = vmatpush1.msra.mxu0 0.0
      %2259 = vmatprep.subr.mxu0 0.0
      %2260 = vmatpush1.msra.mxu0 0.0
      %2261 = vmatprep.subr.mxu0 0.0
      %2262 = vmatpush1.msra.mxu0 %v2110
      %2263 = vmatprep.subr.mxu0 0.0
      %2264 = vmatpush1.msra.mxu0 %v2106
      %2265 = vmatprep.subr.mxu0 0.0
      %2266 = vmatpush2.msra.mxu0 0.0
      %2267 = vmatprep.subr.mxu0 0.0
      %2268 = vmatpush2.msra.mxu0 0.0
      %2269 = vmatprep.subr.mxu0 0.0
      %2270 = vmatpush2.msra.mxu0 0.0
      %2271 = vmatprep.subr.mxu0 0.0
      %2272 = vmatpush2.msra.mxu0 0.0
      %2273 = vmatprep.subr.mxu0 0.0
      %2274 = vmatpush2.msra.mxu0 0.0
      %2275 = vmatprep.subr.mxu0 0.0
      %2276 = vmatpush2.msra.mxu0 0.0
      %2277 = vmatprep.subr.mxu0 0.0
      %2278 = vmatpush2.msra.mxu0 0.0
      %2279 = vmatprep.subr.mxu0 0.0
      %2280 = vmatpush2.msra.mxu0 0.0
      %2281 = vmatprep.subr.mxu0 0.0
      %2282 = vmatpush2.msra.mxu0 0.0
      %2283 = vmatprep.subr.mxu0 0.0
      %2284 = vmatpush2.msra.mxu0 0.0
      %2285 = vmatprep.subr.mxu0 0.0
      %2286 = vmatpush2.msra.mxu0 0.0
      %2287 = vmatprep.subr.mxu0 0.0
      %2288 = vmatpush2.msra.mxu0 0.0
      %2289 = vmatprep.subr.mxu0 0.0
      %2290 = vmatpush2.msra.mxu0 0.0
      %2291 = vmatprep.subr.mxu0 0.0
      %2292 = vmatpush2.msra.mxu0 0.0
      %2293 = vmatprep.subr.mxu0 0.0
      %2294 = vmatpush2.msra.mxu0 0.0
      %2295 = vmatprep.subr.mxu0 0.0
      %2296 = vmatpush2.msra.mxu0 0.0
      %2297 = vmatprep.mubr.f32.mxu0 0.0
      %2298 = vmatmul.mubr.f32.gmra.mxu0 %v2228
      %v2299 = vpop.f32.mrf.mxu0
      %v2300 = vadd.f32 0.0, %v2299
      %v2301 = vpop.f32.mrf.mxu0
      %2302 = vmatprep.mubr.f32.mxu0 0.0
      %2303 = vmatmul.mubr.f32.gmra.mxu0 %v2231
      %v2304 = vpop.f32.mrf.mxu0
      %v2305 = vadd.f32 0.0, %v2304
      %v2306 = vpop.f32.mrf.mxu0
      %2307 = vdwg.mxu0
      %2308 = vrot.lane.b32.xlu0 %v2104, 112
      %v2309 = vpop.permute.xlu0 %2308
      %2310 = vrot.lane.b32.xlu0 %v2108, 112
      %v2311 = vpop.permute.xlu0 %2310
      %2312 = vrot.lane.b32.xlu0 %v2104, 48
      %v2313 = vpop.permute.xlu0 %2312
      %2314 = vrot.lane.b32.xlu0 %v2108, 48
      %v2315 = vpop.permute.xlu0 %2314
      %v2316 = vsel %vm712, %v2309, 0
      %v2318 = vsel %vm712, %v2311, 0
      %v2320 = vsel %vm712, %v2313, 0
      %v2322 = vsel %vm712, %v2315, 0
      %2324 = vmatprep.subr.mxu0 0.0
      %2325 = vmatpush1.xpose.msra.mxu0 0.0
      %2326 = vmatprep.subr.mxu0 0.0
      %2327 = vmatpush1.xpose.msra.mxu0 0.0
      %2328 = vmatprep.subr.mxu0 0.0
      %2329 = vmatpush1.xpose.msra.mxu0 0.0
      %2330 = vmatprep.subr.mxu0 0.0
      %2331 = vmatpush1.xpose.msra.mxu0 0.0
      %2332 = vmatprep.subr.mxu0 0.0
      %2333 = vmatpush1.xpose.msra.mxu0 0.0
      %2334 = vmatprep.subr.mxu0 0.0
      %2335 = vmatpush1.xpose.msra.mxu0 0.0
      %2336 = vmatprep.subr.mxu0 0.0
      %2337 = vmatpush1.xpose.msra.mxu0 0.0
      %2338 = vmatprep.subr.mxu0 0.0
      %2339 = vmatpush1.xpose.msra.mxu0 0.0
      %2340 = vmatprep.subr.mxu0 0.0
      %2341 = vmatpush1.xpose.msra.mxu0 0.0
      %2342 = vmatprep.subr.mxu0 0.0
      %2343 = vmatpush1.xpose.msra.mxu0 0.0
      %2344 = vmatprep.subr.mxu0 0.0
      %2345 = vmatpush1.xpose.msra.mxu0 0.0
      %2346 = vmatprep.subr.mxu0 0.0
      %2347 = vmatpush1.xpose.msra.mxu0 0.0
      %2348 = vmatprep.subr.mxu0 0.0
      %2349 = vmatpush1.xpose.msra.mxu0 0.0
      %2350 = vmatprep.subr.mxu0 0.0
      %2351 = vmatpush1.xpose.msra.mxu0 0.0
      %2352 = vmatprep.subr.mxu0 0.0
      %2353 = vmatpush1.xpose.msra.mxu0 %v2322
      %2354 = vmatprep.subr.mxu0 0.0
      %2355 = vmatpush1.xpose.msra.mxu0 %v2320
      %2356 = vmatprep.subr.mxu0 0.0
      %2357 = vmatpush2.xpose.msra.mxu0 0.0
      %2358 = vmatprep.subr.mxu0 0.0
      %2359 = vmatpush2.xpose.msra.mxu0 0.0
      %2360 = vmatprep.subr.mxu0 0.0
      %2361 = vmatpush2.xpose.msra.mxu0 0.0
      %2362 = vmatprep.subr.mxu0 0.0
      %2363 = vmatpush2.xpose.msra.mxu0 0.0
      %2364 = vmatprep.subr.mxu0 0.0
      %2365 = vmatpush2.xpose.msra.mxu0 0.0
      %2366 = vmatprep.subr.mxu0 0.0
      %2367 = vmatpush2.xpose.msra.mxu0 0.0
      %2368 = vmatprep.subr.mxu0 0.0
      %2369 = vmatpush2.xpose.msra.mxu0 0.0
      %2370 = vmatprep.subr.mxu0 0.0
      %2371 = vmatpush2.xpose.msra.mxu0 0.0
      %2372 = vmatprep.subr.mxu0 0.0
      %2373 = vmatpush2.xpose.msra.mxu0 0.0
      %2374 = vmatprep.subr.mxu0 0.0
      %2375 = vmatpush2.xpose.msra.mxu0 0.0
      %2376 = vmatprep.subr.mxu0 0.0
      %2377 = vmatpush2.xpose.msra.mxu0 0.0
      %2378 = vmatprep.subr.mxu0 0.0
      %2379 = vmatpush2.xpose.msra.mxu0 0.0
      %2380 = vmatprep.subr.mxu0 0.0
      %2381 = vmatpush2.xpose.msra.mxu0 0.0
      %2382 = vmatprep.subr.mxu0 0.0
      %2383 = vmatpush2.xpose.msra.mxu0 0.0
      %2384 = vmatprep.subr.mxu0 0.0
      %2385 = vmatpush2.xpose.msra.mxu0 0.0
      %2386 = vmatprep.subr.mxu0 0.0
      %2387 = vmatpush2.xpose.msra.mxu0 0.0
      %2388 = vmatprep.mubr.f32.mxu0 0.0
      %2389 = vmatmul.mubr.f32.gmra.mxu0 %v2316
      %v2390 = vpop.f32.mrf.mxu0
      %v2391 = vadd.f32 0.0, %v2390
      %v2392 = vpop.f32.mrf.mxu0
      %2393 = vmatprep.mubr.f32.mxu0 0.0
      %2394 = vmatmul.mubr.f32.gmra.mxu0 %v2318
      %v2395 = vpop.f32.mrf.mxu0
      %v2396 = vadd.f32 0.0, %v2395
      %v2397 = vpop.f32.mrf.mxu0
      %2398 = vdwg.mxu0
      %v2399 = vmul.f32 %v2391, 0.125
      %v2400 = vmul.f32 %v2396, 0.125
      %v2401 = vadd.f32 %v2399, %v563
      %v2402 = vadd.f32 %v2400, %v564
      %v2403 = vsel %vm712, %v2401, -inf
      %2404 = vmax.xlane.f32.xlu0 %v2403
      %v2405 = vpop.xlane.xlu0 %2404
      %v2406 = vsel %vm712, %v2402, -inf
      %2407 = vmax.xlane.f32.xlu0 %v2406
      %v2408 = vpop.xlane.xlu0 %2407
      %v2409 = vsub.f32 %v2401, %v2405
      %v2410 = vsub.f32 %v2402, %v2408
      %v2411 = vmul.f32 %v2409, 1.442695
      %v2412 = vpow.pop %v2411
      %v2413 = vmul.f32 %v2410, 1.442695
      %v2414 = vpow.pop %v2413
      %v2415 = vsel %vm712, %v2412, 0.0
      %2416 = vadd.xlane.f32.xlu0 %v2415
      %v2417 = vpop.xlane.xlu0 %2416
      %v2418 = vsel %vm712, %v2414, 0.0
      %2419 = vadd.xlane.f32.xlu0 %v2418
      %v2420 = vpop.xlane.xlu0 %2419
      %v2421 = vrcp.pop %v2417
      %v2422 = vrcp.pop %v2420
      %v2423 = vmul.f32 %v2412, %v2421
      %v2424 = vmul.f32 %v2414, %v2422
      %2427 = vrot.lane.b32.xlu0 %v2106, 112
      %v2428 = vpop.permute.xlu0 %2427
      %2429 = vrot.lane.b32.xlu0 %v2110, 112
      %v2430 = vpop.permute.xlu0 %2429
      %v2434 = vsel %vm712, %v2423, 0
      %v2437 = vsel %vm712, %v2424, 0
      %2439 = vmatprep.subr.mxu0 0.0
      %2440 = vmatpush1.msra.mxu0 0.0
      %2441 = vmatprep.subr.mxu0 0.0
      %2442 = vmatpush1.msra.mxu0 0.0
      %2443 = vmatprep.subr.mxu0 0.0
      %2444 = vmatpush1.msra.mxu0 0.0
      %2445 = vmatprep.subr.mxu0 0.0
      %2446 = vmatpush1.msra.mxu0 0.0
      %2447 = vmatprep.subr.mxu0 0.0
      %2448 = vmatpush1.msra.mxu0 0.0
      %2449 = vmatprep.subr.mxu0 0.0
      %2450 = vmatpush1.msra.mxu0 0.0
      %2451 = vmatprep.subr.mxu0 0.0
      %2452 = vmatpush1.msra.mxu0 0.0
      %2453 = vmatprep.subr.mxu0 0.0
      %2454 = vmatpush1.msra.mxu0 0.0
      %2455 = vmatprep.subr.mxu0 0.0
      %2456 = vmatpush1.msra.mxu0 0.0
      %2457 = vmatprep.subr.mxu0 0.0
      %2458 = vmatpush1.msra.mxu0 0.0
      %2459 = vmatprep.subr.mxu0 0.0
      %2460 = vmatpush1.msra.mxu0 0.0
      %2461 = vmatprep.subr.mxu0 0.0
      %2462 = vmatpush1.msra.mxu0 0.0
      %2463 = vmatprep.subr.mxu0 0.0
      %2464 = vmatpush1.msra.mxu0 0.0
      %2465 = vmatprep.subr.mxu0 0.0
      %2466 = vmatpush1.msra.mxu0 0.0
      %2467 = vmatprep.subr.mxu0 0.0
      %2468 = vmatpush1.msra.mxu0 %v2430
      %2469 = vmatprep.subr.mxu0 0.0
      %2470 = vmatpush1.msra.mxu0 %v2428
      %2471 = vmatprep.subr.mxu0 0.0
      %2472 = vmatpush2.msra.mxu0 0.0
      %2473 = vmatprep.subr.mxu0 0.0
      %2474 = vmatpush2.msra.mxu0 0.0
      %2475 = vmatprep.subr.mxu0 0.0
      %2476 = vmatpush2.msra.mxu0 0.0
      %2477 = vmatprep.subr.mxu0 0.0
      %2478 = vmatpush2.msra.mxu0 0.0
      %2479 = vmatprep.subr.mxu0 0.0
      %2480 = vmatpush2.msra.mxu0 0.0
      %2481 = vmatprep.subr.mxu0 0.0
      %2482 = vmatpush2.msra.mxu0 0.0
      %2483 = vmatprep.subr.mxu0 0.0
      %2484 = vmatpush2.msra.mxu0 0.0
      %2485 = vmatprep.subr.mxu0 0.0
      %2486 = vmatpush2.msra.mxu0 0.0
      %2487 = vmatprep.subr.mxu0 0.0
      %2488 = vmatpush2.msra.mxu0 0.0
      %2489 = vmatprep.subr.mxu0 0.0
      %2490 = vmatpush2.msra.mxu0 0.0
      %2491 = vmatprep.subr.mxu0 0.0
      %2492 = vmatpush2.msra.mxu0 0.0
      %2493 = vmatprep.subr.mxu0 0.0
      %2494 = vmatpush2.msra.mxu0 0.0
      %2495 = vmatprep.subr.mxu0 0.0
      %2496 = vmatpush2.msra.mxu0 0.0
      %2497 = vmatprep.subr.mxu0 0.0
      %2498 = vmatpush2.msra.mxu0 0.0
      %2499 = vmatprep.subr.mxu0 0.0
      %2500 = vmatpush2.msra.mxu0 0.0
      %2501 = vmatprep.subr.mxu0 0.0
      %2502 = vmatpush2.msra.mxu0 0.0
      %2503 = vmatprep.mubr.f32.mxu0 0.0
      %2504 = vmatmul.mubr.f32.gmra.mxu0 %v2434
      %v2505 = vpop.f32.mrf.mxu0
      %v2506 = vadd.f32 0.0, %v2505
      %v2507 = vpop.f32.mrf.mxu0
      %2508 = vmatprep.mubr.f32.mxu0 0.0
      %2509 = vmatmul.mubr.f32.gmra.mxu0 %v2437
      %v2510 = vpop.f32.mrf.mxu0
      %v2511 = vadd.f32 0.0, %v2510
      %v2512 = vpop.f32.mrf.mxu0
      %2513 = vdwg.mxu0
      %2514 = vrot.lane.b32.xlu0 %v2104, 96
      %v2515 = vpop.permute.xlu0 %2514
      %2516 = vrot.lane.b32.xlu0 %v2108, 96
      %v2517 = vpop.permute.xlu0 %2516
      %2518 = vrot.lane.b32.xlu0 %v2104, 32
      %v2519 = vpop.permute.xlu0 %2518
      %2520 = vrot.lane.b32.xlu0 %v2108, 32
      %v2521 = vpop.permute.xlu0 %2520
      %v2522 = vsel %vm712, %v2515, 0
      %v2524 = vsel %vm712, %v2517, 0
      %v2526 = vsel %vm712, %v2519, 0
      %v2528 = vsel %vm712, %v2521, 0
      %2530 = vmatprep.subr.mxu0 0.0
      %2531 = vmatpush1.xpose.msra.mxu0 0.0
      %2532 = vmatprep.subr.mxu0 0.0
      %2533 = vmatpush1.xpose.msra.mxu0 0.0
      %2534 = vmatprep.subr.mxu0 0.0
      %2535 = vmatpush1.xpose.msra.mxu0 0.0
      %2536 = vmatprep.subr.mxu0 0.0
      %2537 = vmatpush1.xpose.msra.mxu0 0.0
      %2538 = vmatprep.subr.mxu0 0.0
      %2539 = vmatpush1.xpose.msra.mxu0 0.0
      %2540 = vmatprep.subr.mxu0 0.0
      %2541 = vmatpush1.xpose.msra.mxu0 0.0
      %2542 = vmatprep.subr.mxu0 0.0
      %2543 = vmatpush1.xpose.msra.mxu0 0.0
      %2544 = vmatprep.subr.mxu0 0.0
      %2545 = vmatpush1.xpose.msra.mxu0 0.0
      %2546 = vmatprep.subr.mxu0 0.0
      %2547 = vmatpush1.xpose.msra.mxu0 0.0
      %2548 = vmatprep.subr.mxu0 0.0
      %2549 = vmatpush1.xpose.msra.mxu0 0.0
      %2550 = vmatprep.subr.mxu0 0.0
      %2551 = vmatpush1.xpose.msra.mxu0 0.0
      %2552 = vmatprep.subr.mxu0 0.0
      %2553 = vmatpush1.xpose.msra.mxu0 0.0
      %2554 = vmatprep.subr.mxu0 0.0
      %2555 = vmatpush1.xpose.msra.mxu0 0.0
      %2556 = vmatprep.subr.mxu0 0.0
      %2557 = vmatpush1.xpose.msra.mxu0 0.0
      %2558 = vmatprep.subr.mxu0 0.0
      %2559 = vmatpush1.xpose.msra.mxu0 %v2528
      %2560 = vmatprep.subr.mxu0 0.0
      %2561 = vmatpush1.xpose.msra.mxu0 %v2526
      %2562 = vmatprep.subr.mxu0 0.0
      %2563 = vmatpush2.xpose.msra.mxu0 0.0
      %2564 = vmatprep.subr.mxu0 0.0
      %2565 = vmatpush2.xpose.msra.mxu0 0.0
      %2566 = vmatprep.subr.mxu0 0.0
      %2567 = vmatpush2.xpose.msra.mxu0 0.0
      %2568 = vmatprep.subr.mxu0 0.0
      %2569 = vmatpush2.xpose.msra.mxu0 0.0
      %2570 = vmatprep.subr.mxu0 0.0
      %2571 = vmatpush2.xpose.msra.mxu0 0.0
      %2572 = vmatprep.subr.mxu0 0.0
      %2573 = vmatpush2.xpose.msra.mxu0 0.0
      %2574 = vmatprep.subr.mxu0 0.0
      %2575 = vmatpush2.xpose.msra.mxu0 0.0
      %2576 = vmatprep.subr.mxu0 0.0
      %2577 = vmatpush2.xpose.msra.mxu0 0.0
      %2578 = vmatprep.subr.mxu0 0.0
      %2579 = vmatpush2.xpose.msra.mxu0 0.0
      %2580 = vmatprep.subr.mxu0 0.0
      %2581 = vmatpush2.xpose.msra.mxu0 0.0
      %2582 = vmatprep.subr.mxu0 0.0
      %2583 = vmatpush2.xpose.msra.mxu0 0.0
      %2584 = vmatprep.subr.mxu0 0.0
      %2585 = vmatpush2.xpose.msra.mxu0 0.0
      %2586 = vmatprep.subr.mxu0 0.0
      %2587 = vmatpush2.xpose.msra.mxu0 0.0
      %2588 = vmatprep.subr.mxu0 0.0
      %2589 = vmatpush2.xpose.msra.mxu0 0.0
      %2590 = vmatprep.subr.mxu0 0.0
      %2591 = vmatpush2.xpose.msra.mxu0 0.0
      %2592 = vmatprep.subr.mxu0 0.0
      %2593 = vmatpush2.xpose.msra.mxu0 0.0
      %2594 = vmatprep.mubr.f32.mxu0 0.0
      %2595 = vmatmul.mubr.f32.gmra.mxu0 %v2522
      %v2596 = vpop.f32.mrf.mxu0
      %v2597 = vadd.f32 0.0, %v2596
      %v2598 = vpop.f32.mrf.mxu0
      %2599 = vmatprep.mubr.f32.mxu0 0.0
      %2600 = vmatmul.mubr.f32.gmra.mxu0 %v2524
      %v2601 = vpop.f32.mrf.mxu0
      %v2602 = vadd.f32 0.0, %v2601
      %v2603 = vpop.f32.mrf.mxu0
      %2604 = vdwg.mxu0
      %v2605 = vmul.f32 %v2597, 0.125
      %v2606 = vmul.f32 %v2602, 0.125
      %v2607 = vadd.f32 %v2605, %v563
      %v2608 = vadd.f32 %v2606, %v564
      %v2609 = vsel %vm712, %v2607, -inf
      %2610 = vmax.xlane.f32.xlu0 %v2609
      %v2611 = vpop.xlane.xlu0 %2610
      %v2612 = vsel %vm712, %v2608, -inf
      %2613 = vmax.xlane.f32.xlu0 %v2612
      %v2614 = vpop.xlane.xlu0 %2613
      %v2615 = vsub.f32 %v2607, %v2611
      %v2616 = vsub.f32 %v2608, %v2614
      %v2617 = vmul.f32 %v2615, 1.442695
      %v2618 = vpow.pop %v2617
      %v2619 = vmul.f32 %v2616, 1.442695
      %v2620 = vpow.pop %v2619
      %v2621 = vsel %vm712, %v2618, 0.0
      %2622 = vadd.xlane.f32.xlu0 %v2621
      %v2623 = vpop.xlane.xlu0 %2622
      %v2624 = vsel %vm712, %v2620, 0.0
      %2625 = vadd.xlane.f32.xlu0 %v2624
      %v2626 = vpop.xlane.xlu0 %2625
      %v2627 = vrcp.pop %v2623
      %v2628 = vrcp.pop %v2626
      %v2629 = vmul.f32 %v2618, %v2627
      %v2630 = vmul.f32 %v2620, %v2628
      %2631 = vrot.lane.b32.xlu0 %v2106, 96
      %v2632 = vpop.permute.xlu0 %2631
      %2633 = vrot.lane.b32.xlu0 %v2110, 96
      %v2634 = vpop.permute.xlu0 %2633
      %v2638 = vsel %vm712, %v2629, 0
      %v2641 = vsel %vm712, %v2630, 0
      %2643 = vmatprep.subr.mxu0 0.0
      %2644 = vmatpush1.msra.mxu0 0.0
      %2645 = vmatprep.subr.mxu0 0.0
      %2646 = vmatpush1.msra.mxu0 0.0
      %2647 = vmatprep.subr.mxu0 0.0
      %2648 = vmatpush1.msra.mxu0 0.0
      %2649 = vmatprep.subr.mxu0 0.0
      %2650 = vmatpush1.msra.mxu0 0.0
      %2651 = vmatprep.subr.mxu0 0.0
      %2652 = vmatpush1.msra.mxu0 0.0
      %2653 = vmatprep.subr.mxu0 0.0
      %2654 = vmatpush1.msra.mxu0 0.0
      %2655 = vmatprep.subr.mxu0 0.0
      %2656 = vmatpush1.msra.mxu0 0.0
      %2657 = vmatprep.subr.mxu0 0.0
      %2658 = vmatpush1.msra.mxu0 0.0
      %2659 = vmatprep.subr.mxu0 0.0
      %2660 = vmatpush1.msra.mxu0 0.0
      %2661 = vmatprep.subr.mxu0 0.0
      %2662 = vmatpush1.msra.mxu0 0.0
      %2663 = vmatprep.subr.mxu0 0.0
      %2664 = vmatpush1.msra.mxu0 0.0
      %2665 = vmatprep.subr.mxu0 0.0
      %2666 = vmatpush1.msra.mxu0 0.0
      %2667 = vmatprep.subr.mxu0 0.0
      %2668 = vmatpush1.msra.mxu0 0.0
      %2669 = vmatprep.subr.mxu0 0.0
      %2670 = vmatpush1.msra.mxu0 0.0
      %2671 = vmatprep.subr.mxu0 0.0
      %2672 = vmatpush1.msra.mxu0 %v2634
      %2673 = vmatprep.subr.mxu0 0.0
      %2674 = vmatpush1.msra.mxu0 %v2632
      %2675 = vmatprep.subr.mxu0 0.0
      %2676 = vmatpush2.msra.mxu0 0.0
      %2677 = vmatprep.subr.mxu0 0.0
      %2678 = vmatpush2.msra.mxu0 0.0
      %2679 = vmatprep.subr.mxu0 0.0
      %2680 = vmatpush2.msra.mxu0 0.0
      %2681 = vmatprep.subr.mxu0 0.0
      %2682 = vmatpush2.msra.mxu0 0.0
      %2683 = vmatprep.subr.mxu0 0.0
      %2684 = vmatpush2.msra.mxu0 0.0
      %2685 = vmatprep.subr.mxu0 0.0
      %2686 = vmatpush2.msra.mxu0 0.0
      %2687 = vmatprep.subr.mxu0 0.0
      %2688 = vmatpush2.msra.mxu0 0.0
      %2689 = vmatprep.subr.mxu0 0.0
      %2690 = vmatpush2.msra.mxu0 0.0
      %2691 = vmatprep.subr.mxu0 0.0
      %2692 = vmatpush2.msra.mxu0 0.0
      %2693 = vmatprep.subr.mxu0 0.0
      %2694 = vmatpush2.msra.mxu0 0.0
      %2695 = vmatprep.subr.mxu0 0.0
      %2696 = vmatpush2.msra.mxu0 0.0
      %2697 = vmatprep.subr.mxu0 0.0
      %2698 = vmatpush2.msra.mxu0 0.0
      %2699 = vmatprep.subr.mxu0 0.0
      %2700 = vmatpush2.msra.mxu0 0.0
      %2701 = vmatprep.subr.mxu0 0.0
      %2702 = vmatpush2.msra.mxu0 0.0
      %2703 = vmatprep.subr.mxu0 0.0
      %2704 = vmatpush2.msra.mxu0 0.0
      %2705 = vmatprep.subr.mxu0 0.0
      %2706 = vmatpush2.msra.mxu0 0.0
      %2707 = vmatprep.mubr.f32.mxu0 0.0
      %2708 = vmatmul.mubr.f32.gmra.mxu0 %v2638
      %v2709 = vpop.f32.mrf.mxu0
      %v2710 = vadd.f32 0.0, %v2709
      %v2711 = vpop.f32.mrf.mxu0
      %2712 = vmatprep.mubr.f32.mxu0 0.0
      %2713 = vmatmul.mubr.f32.gmra.mxu0 %v2641
      %v2714 = vpop.f32.mrf.mxu0
      %v2715 = vadd.f32 0.0, %v2714
      %v2716 = vpop.f32.mrf.mxu0
      %2717 = vdwg.mxu0
      %2718 = vrot.lane.b32.xlu0 %v2104, 80
      %v2719 = vpop.permute.xlu0 %2718
      %2720 = vrot.lane.b32.xlu0 %v2108, 80
      %v2721 = vpop.permute.xlu0 %2720
      %2722 = vrot.lane.b32.xlu0 %v2104, 16
      %v2723 = vpop.permute.xlu0 %2722
      %2724 = vrot.lane.b32.xlu0 %v2108, 16
      %v2725 = vpop.permute.xlu0 %2724
      %v2726 = vsel %vm712, %v2719, 0
      %v2728 = vsel %vm712, %v2721, 0
      %v2730 = vsel %vm712, %v2723, 0
      %v2732 = vsel %vm712, %v2725, 0
      %2734 = vmatprep.subr.mxu0 0.0
      %2735 = vmatpush1.xpose.msra.mxu0 0.0
      %2736 = vmatprep.subr.mxu0 0.0
      %2737 = vmatpush1.xpose.msra.mxu0 0.0
      %2738 = vmatprep.subr.mxu0 0.0
      %2739 = vmatpush1.xpose.msra.mxu0 0.0
      %2740 = vmatprep.subr.mxu0 0.0
      %2741 = vmatpush1.xpose.msra.mxu0 0.0
      %2742 = vmatprep.subr.mxu0 0.0
      %2743 = vmatpush1.xpose.msra.mxu0 0.0
      %2744 = vmatprep.subr.mxu0 0.0
      %2745 = vmatpush1.xpose.msra.mxu0 0.0
      %2746 = vmatprep.subr.mxu0 0.0
      %2747 = vmatpush1.xpose.msra.mxu0 0.0
      %2748 = vmatprep.subr.mxu0 0.0
      %2749 = vmatpush1.xpose.msra.mxu0 0.0
      %2750 = vmatprep.subr.mxu0 0.0
      %2751 = vmatpush1.xpose.msra.mxu0 0.0
      %2752 = vmatprep.subr.mxu0 0.0
      %2753 = vmatpush1.xpose.msra.mxu0 0.0
      %2754 = vmatprep.subr.mxu0 0.0
      %2755 = vmatpush1.xpose.msra.mxu0 0.0
      %2756 = vmatprep.subr.mxu0 0.0
      %2757 = vmatpush1.xpose.msra.mxu0 0.0
      %2758 = vmatprep.subr.mxu0 0.0
      %2759 = vmatpush1.xpose.msra.mxu0 0.0
      %2760 = vmatprep.subr.mxu0 0.0
      %2761 = vmatpush1.xpose.msra.mxu0 0.0
      %2762 = vmatprep.subr.mxu0 0.0
      %2763 = vmatpush1.xpose.msra.mxu0 %v2732
      %2764 = vmatprep.subr.mxu0 0.0
      %2765 = vmatpush1.xpose.msra.mxu0 %v2730
      %2766 = vmatprep.subr.mxu0 0.0
      %2767 = vmatpush2.xpose.msra.mxu0 0.0
      %2768 = vmatprep.subr.mxu0 0.0
      %2769 = vmatpush2.xpose.msra.mxu0 0.0
      %2770 = vmatprep.subr.mxu0 0.0
      %2771 = vmatpush2.xpose.msra.mxu0 0.0
      %2772 = vmatprep.subr.mxu0 0.0
      %2773 = vmatpush2.xpose.msra.mxu0 0.0
      %2774 = vmatprep.subr.mxu0 0.0
      %2775 = vmatpush2.xpose.msra.mxu0 0.0
      %2776 = vmatprep.subr.mxu0 0.0
      %2777 = vmatpush2.xpose.msra.mxu0 0.0
      %2778 = vmatprep.subr.mxu0 0.0
      %2779 = vmatpush2.xpose.msra.mxu0 0.0
      %2780 = vmatprep.subr.mxu0 0.0
      %2781 = vmatpush2.xpose.msra.mxu0 0.0
      %2782 = vmatprep.subr.mxu0 0.0
      %2783 = vmatpush2.xpose.msra.mxu0 0.0
      %2784 = vmatprep.subr.mxu0 0.0
      %2785 = vmatpush2.xpose.msra.mxu0 0.0
      %2786 = vmatprep.subr.mxu0 0.0
      %2787 = vmatpush2.xpose.msra.mxu0 0.0
      %2788 = vmatprep.subr.mxu0 0.0
      %2789 = vmatpush2.xpose.msra.mxu0 0.0
      %2790 = vmatprep.subr.mxu0 0.0
      %2791 = vmatpush2.xpose.msra.mxu0 0.0
      %2792 = vmatprep.subr.mxu0 0.0
      %2793 = vmatpush2.xpose.msra.mxu0 0.0
      %2794 = vmatprep.subr.mxu0 0.0
      %2795 = vmatpush2.xpose.msra.mxu0 0.0
      %2796 = vmatprep.subr.mxu0 0.0
      %2797 = vmatpush2.xpose.msra.mxu0 0.0
      %2798 = vmatprep.mubr.f32.mxu0 0.0
      %2799 = vmatmul.mubr.f32.gmra.mxu0 %v2726
      %v2800 = vpop.f32.mrf.mxu0
      %v2801 = vadd.f32 0.0, %v2800
      %v2802 = vpop.f32.mrf.mxu0
      %2803 = vmatprep.mubr.f32.mxu0 0.0
      %2804 = vmatmul.mubr.f32.gmra.mxu0 %v2728
      %v2805 = vpop.f32.mrf.mxu0
      %v2806 = vadd.f32 0.0, %v2805
      %v2807 = vpop.f32.mrf.mxu0
      %2808 = vdwg.mxu0
      %v2809 = vmul.f32 %v2801, 0.125
      %v2810 = vmul.f32 %v2806, 0.125
      %v2811 = vadd.f32 %v2809, %v563
      %v2812 = vadd.f32 %v2810, %v564
      %v2813 = vsel %vm712, %v2811, -inf
      %2814 = vmax.xlane.f32.xlu0 %v2813
      %v2815 = vpop.xlane.xlu0 %2814
      %v2816 = vsel %vm712, %v2812, -inf
      %2817 = vmax.xlane.f32.xlu0 %v2816
      %v2818 = vpop.xlane.xlu0 %2817
      %v2819 = vsub.f32 %v2811, %v2815
      %v2820 = vsub.f32 %v2812, %v2818
      %v2821 = vmul.f32 %v2819, 1.442695
      %v2822 = vpow.pop %v2821
      %v2823 = vmul.f32 %v2820, 1.442695
      %v2824 = vpow.pop %v2823
      %v2825 = vsel %vm712, %v2822, 0.0
      %2826 = vadd.xlane.f32.xlu0 %v2825
      %v2827 = vpop.xlane.xlu0 %2826
      %v2828 = vsel %vm712, %v2824, 0.0
      %2829 = vadd.xlane.f32.xlu0 %v2828
      %v2830 = vpop.xlane.xlu0 %2829
      %v2831 = vrcp.pop %v2827
      %v2832 = vrcp.pop %v2830
      %v2833 = vmul.f32 %v2822, %v2831
      %v2834 = vmul.f32 %v2824, %v2832
      %2835 = vrot.lane.b32.xlu0 %v2106, 80
      %v2836 = vpop.permute.xlu0 %2835
      %2837 = vrot.lane.b32.xlu0 %v2110, 80
      %v2838 = vpop.permute.xlu0 %2837
      %v2842 = vsel %vm712, %v2833, 0
      %v2845 = vsel %vm712, %v2834, 0
      %2847 = vmatprep.subr.mxu0 0.0
      %2848 = vmatpush1.msra.mxu0 0.0
      %2849 = vmatprep.subr.mxu0 0.0
      %2850 = vmatpush1.msra.mxu0 0.0
      %2851 = vmatprep.subr.mxu0 0.0
      %2852 = vmatpush1.msra.mxu0 0.0
      %2853 = vmatprep.subr.mxu0 0.0
      %2854 = vmatpush1.msra.mxu0 0.0
      %2855 = vmatprep.subr.mxu0 0.0
      %2856 = vmatpush1.msra.mxu0 0.0
      %2857 = vmatprep.subr.mxu0 0.0
      %2858 = vmatpush1.msra.mxu0 0.0
      %2859 = vmatprep.subr.mxu0 0.0
      %2860 = vmatpush1.msra.mxu0 0.0
      %2861 = vmatprep.subr.mxu0 0.0
      %2862 = vmatpush1.msra.mxu0 0.0
      %2863 = vmatprep.subr.mxu0 0.0
      %2864 = vmatpush1.msra.mxu0 0.0
      %2865 = vmatprep.subr.mxu0 0.0
      %2866 = vmatpush1.msra.mxu0 0.0
      %2867 = vmatprep.subr.mxu0 0.0
      %2868 = vmatpush1.msra.mxu0 0.0
      %2869 = vmatprep.subr.mxu0 0.0
      %2870 = vmatpush1.msra.mxu0 0.0
      %2871 = vmatprep.subr.mxu0 0.0
      %2872 = vmatpush1.msra.mxu0 0.0
      %2873 = vmatprep.subr.mxu0 0.0
      %2874 = vmatpush1.msra.mxu0 0.0
      %2875 = vmatprep.subr.mxu0 0.0
      %2876 = vmatpush1.msra.mxu0 %v2838
      %2877 = vmatprep.subr.mxu0 0.0
      %2878 = vmatpush1.msra.mxu0 %v2836
      %2879 = vmatprep.subr.mxu0 0.0
      %2880 = vmatpush2.msra.mxu0 0.0
      %2881 = vmatprep.subr.mxu0 0.0
      %2882 = vmatpush2.msra.mxu0 0.0
      %2883 = vmatprep.subr.mxu0 0.0
      %2884 = vmatpush2.msra.mxu0 0.0
      %2885 = vmatprep.subr.mxu0 0.0
      %2886 = vmatpush2.msra.mxu0 0.0
      %2887 = vmatprep.subr.mxu0 0.0
      %2888 = vmatpush2.msra.mxu0 0.0
      %2889 = vmatprep.subr.mxu0 0.0
      %2890 = vmatpush2.msra.mxu0 0.0
      %2891 = vmatprep.subr.mxu0 0.0
      %2892 = vmatpush2.msra.mxu0 0.0
      %2893 = vmatprep.subr.mxu0 0.0
      %2894 = vmatpush2.msra.mxu0 0.0
      %2895 = vmatprep.subr.mxu0 0.0
      %2896 = vmatpush2.msra.mxu0 0.0
      %2897 = vmatprep.subr.mxu0 0.0
      %2898 = vmatpush2.msra.mxu0 0.0
      %2899 = vmatprep.subr.mxu0 0.0
      %2900 = vmatpush2.msra.mxu0 0.0
      %2901 = vmatprep.subr.mxu0 0.0
      %2902 = vmatpush2.msra.mxu0 0.0
      %2903 = vmatprep.subr.mxu0 0.0
      %2904 = vmatpush2.msra.mxu0 0.0
      %2905 = vmatprep.subr.mxu0 0.0
      %2906 = vmatpush2.msra.mxu0 0.0
      %2907 = vmatprep.subr.mxu0 0.0
      %2908 = vmatpush2.msra.mxu0 0.0
      %2909 = vmatprep.subr.mxu0 0.0
      %2910 = vmatpush2.msra.mxu0 0.0
      %2911 = vmatprep.mubr.f32.mxu0 0.0
      %2912 = vmatmul.mubr.f32.gmra.mxu0 %v2842
      %v2913 = vpop.f32.mrf.mxu0
      %v2914 = vadd.f32 0.0, %v2913
      %v2915 = vpop.f32.mrf.mxu0
      %2916 = vmatprep.mubr.f32.mxu0 0.0
      %2917 = vmatmul.mubr.f32.gmra.mxu0 %v2845
      %v2918 = vpop.f32.mrf.mxu0
      %v2919 = vadd.f32 0.0, %v2918
      %v2920 = vpop.f32.mrf.mxu0
      %2921 = vdwg.mxu0
      %2924 = vrot.lane.b32.xlu0 %v2506, 16
      %v2925 = vpop.permute.xlu0 %2924
      %2926 = vrot.lane.b32.xlu0 %v2511, 16
      %v2927 = vpop.permute.xlu0 %2926
      %2932 = vrot.lane.b32.xlu0 %v2710, 32
      %v2933 = vpop.permute.xlu0 %2932
      %2934 = vrot.lane.b32.xlu0 %v2715, 32
      %v2935 = vpop.permute.xlu0 %2934
      %2940 = vrot.lane.b32.xlu0 %v2914, 48
      %v2941 = vpop.permute.xlu0 %2940
      %2942 = vrot.lane.b32.xlu0 %v2919, 48
      %v2943 = vpop.permute.xlu0 %2942
      %v2946 = vsel %vm712, %v2300, %v2925
      %v2947 = vsel %vm712, %v2305, %v2927
      %v2948 = vsel %vm1543, %v2946, %v2933
      %v2949 = vsel %vm1543, %v2947, %v2935
      %v2950 = vsel %vm1546, %v2948, %v2941
      %v2951 = vsel %vm1546, %v2949, %v2943
      %v2952 = vpack.c.bf16 %v2951, %v2950
      %s2953 = scalar_lea.vmem %s5, 32
      %v2954 = vld [vmem:[%s2953] sm:$0xf]
      %v2955 = vld [vmem:[%s2953 + $0x4] sm:$0xf]
      %v2956 = vld [vmem:[%s2953 + $0x8] sm:$0xf]
      %v2957 = vld [vmem:[%s2953 + $0xc] sm:$0xf]
      %v2958 = vld [vmem:[%s2953 + $0x10] sm:$0xf]
      %v2959 = vld [vmem:[%s2953 + $0x14] sm:$0xf]
      %v2960 = vld [vmem:[%s2953 + $0x18] sm:$0xf]
      %v2961 = vld [vmem:[%s2953 + $0x1c] sm:$0xf]
      %s2962 = scalar_lea.vmem %s6, 1
      %v2963 = vld [vmem:[%s2962] sm:$0x1]
      %v2965 = vlaneseq
      %v2966 = vshrl.u32 %v2965, 7
      %v2967 = vsub.s32 0, %v2966
      %v2968 = vrot.slane %v2963, %v2967
      %v2978 = vunpack.c.l.b16 %v2954
      %v2979 = vunpack.c.l.b16 %v2955
      %v2980 = vunpack.c.l.b16 %v2956
      %v2981 = vunpack.c.l.b16 %v2957
      %v2982 = vunpack.c.l.b16 %v2958
      %v2983 = vunpack.c.l.b16 %v2959
      %v2984 = vunpack.c.l.b16 %v2960
      %v2985 = vunpack.c.l.b16 %v2961
      %v2986 = vpack.c.b16 %v2979, %v2978
      %v2987 = vpack.c.b16 %v2981, %v2980
      %v2988 = vpack.c.b16 %v2983, %v2982
      %v2989 = vpack.c.b16 %v2985, %v2984
      %v2995 = vsel %vm567, %v2952, 0
      %2997 = vmatprep.subr.bf16.mxu0 0
      %2998 = vmatpush1.bf16.msra.mxu0 0
      %2999 = vmatprep.subr.bf16.mxu0 0
      %3000 = vmatpush1.bf16.msra.mxu0 0
      %3001 = vmatprep.subr.bf16.mxu0 0
      %3002 = vmatpush1.bf16.msra.mxu0 0
      %3003 = vmatprep.subr.bf16.mxu0 0
      %3004 = vmatpush1.bf16.msra.mxu0 0
      %3005 = vmatprep.subr.bf16.mxu0 0
      %3006 = vmatpush1.bf16.msra.mxu0 %v2989
      %3007 = vmatprep.subr.bf16.mxu0 0
      %3008 = vmatpush1.bf16.msra.mxu0 %v2988
      %3009 = vmatprep.subr.bf16.mxu0 0
      %3010 = vmatpush1.bf16.msra.mxu0 %v2987
      %3011 = vmatprep.subr.bf16.mxu0 0
      %3012 = vmatpush1.bf16.msra.mxu0 %v2986
      %3013 = vmatprep.subr.bf16.mxu0 0
      %3014 = vmatpush2.bf16.msra.mxu0 0
      %3015 = vmatprep.subr.bf16.mxu0 0
      %3016 = vmatpush2.bf16.msra.mxu0 0
      %3017 = vmatprep.subr.bf16.mxu0 0
      %3018 = vmatpush2.bf16.msra.mxu0 0
      %3019 = vmatprep.subr.bf16.mxu0 0
      %3020 = vmatpush2.bf16.msra.mxu0 0
      %3021 = vmatprep.subr.bf16.mxu0 0
      %3022 = vmatpush2.bf16.msra.mxu0 0
      %3023 = vmatprep.subr.bf16.mxu0 0
      %3024 = vmatpush2.bf16.msra.mxu0 0
      %3025 = vmatprep.subr.bf16.mxu0 0
      %3026 = vmatpush2.bf16.msra.mxu0 0
      %3027 = vmatprep.subr.bf16.mxu0 0
      %3028 = vmatpush2.bf16.msra.mxu0 0
      %3029 = vmatprep.mubr.bf16.mxu0 0
      %3030 = vmatmul.mubr.bf16.gmra.mxu0 %v2995
      %v3031 = vpop.f32.mrf.mxu0
      %v3032 = vadd.f32 %v2968, %v3031
      %v3033 = vpop.f32.mrf.mxu0
      %v3034 = vpop.f32.mrf.mxu0
      %v3035 = vadd.f32 %v2968, %v3034
      %v3036 = vpop.f32.mrf.mxu0
      %3037 = vdwg.mxu0
      %v3038 = vadd.f32 %v1968, %v3032
      %v3039 = vadd.f32 %v1969, %v3035
      %s3040 = scalar_lea.vmem %s7, 1
      %v3041 = vld [vmem:[%s3040] sm:$0x1]
      %s3042 = scalar_lea.vmem %s8, 1
      %v3043 = vld [vmem:[%s3042] sm:$0x1]
      %v3044 = vsel %vm567, %v3038, 0.0
      %3045 = vadd.xlane.f32.xlu0 %v3044
      %v3046 = vpop.xlane.xlu0 %3045
      %v3047 = vsel %vm567, %v3039, 0.0
      %3048 = vadd.xlane.f32.xlu0 %v3047
      %v3049 = vpop.xlane.xlu0 %3048
      %v3050 = vmul.f32 %v3046, %v574
      %v3051 = vmul.f32 %v3049, %v574
      %v3052 = vsub.f32 %v3038, %v3050
      %v3053 = vsub.f32 %v3039, %v3051
      %v3054 = vmul.f32 %v3052, %v3052
      %v3055 = vmul.f32 %v3053, %v3053
      %v3056 = vsel %vm567, %v3054, 0.0
      %3057 = vadd.xlane.f32.xlu0 %v3056
      %v3058 = vpop.xlane.xlu0 %3057
      %v3059 = vsel %vm567, %v3055, 0.0
      %3060 = vadd.xlane.f32.xlu0 %v3059
      %v3061 = vpop.xlane.xlu0 %3060
      %v3062 = vmul.f32 %v3058, %v574
      %v3063 = vmul.f32 %v3061, %v574
      %v3064 = vadd.f32 %v3062, 1e-05
      %v3065 = vadd.f32 %v3063, 1e-05
      %v3066 = vrsqrt.pop %v3064
      %v3067 = vrsqrt.pop %v3065
      %v3068 = vmul.f32 %v3052, %v3066
      %v3069 = vmul.f32 %v3053, %v3067
      %v3071 = vlaneseq
      %v3072 = vshrl.u32 %v3071, 7
      %v3073 = vsub.s32 0, %v3072
      %v3074 = vrot.slane %v3041, %v3073
      %v3076 = vmul.f32 %v3068, %v3074
      %v3077 = vmul.f32 %v3069, %v3074
      %v3079 = vlaneseq
      %v3080 = vshrl.u32 %v3079, 7
      %v3081 = vsub.s32 0, %v3080
      %v3082 = vrot.slane %v3043, %v3081
      %v3084 = vadd.f32 %v3076, %v3082
      %v3085 = vadd.f32 %v3077, %v3082
      %v3086 = vpack.c.bf16 %v3085, %v3084
      %s3087 = scalar_lea.vmem %s9, 64
      %v3088 = vld [vmem:[%s3087] sm:$0xff]
      %v3089 = vld [vmem:[%s3087 + $0x8] sm:$0xff]
      %v3090 = vld [vmem:[%s3087 + $0x10] sm:$0xff]
      %v3091 = vld [vmem:[%s3087 + $0x18] sm:$0xff]
      %v3092 = vld [vmem:[%s3087 + $0x20] sm:$0xff]
      %v3093 = vld [vmem:[%s3087 + $0x28] sm:$0xff]
      %v3094 = vld [vmem:[%s3087 + $0x30] sm:$0xff]
      %v3095 = vld [vmem:[%s3087 + $0x38] sm:$0xff]
      %s3096 = scalar_lea.vmem %s10, 2
      %v3097 = vld [vmem:[%s3096] sm:$0x3]
      %v3099 = vlaneseq
      %v3100 = vshrl.u32 %v3099, 7
      %v3101 = vsub.s32 0, %v3100
      %v3102 = vrot.slane %v3097, %v3101
      %v3103 = vlaneseq
      %v3104 = vshrl.u32 %v3103, 7
      %v3105 = vsub.s32 1, %v3104
      %v3106 = vrot.slane %v3097, %v3105
      %v3117 = vunpack.c.l.b16 %v3088
      %v3118 = vunpack.c.h.b16 %v3088
      %v3119 = vunpack.c.l.b16 %v3089
      %v3120 = vunpack.c.h.b16 %v3089
      %v3121 = vunpack.c.l.b16 %v3090
      %v3122 = vunpack.c.h.b16 %v3090
      %v3123 = vunpack.c.l.b16 %v3091
      %v3124 = vunpack.c.h.b16 %v3091
      %v3125 = vunpack.c.l.b16 %v3092
      %v3126 = vunpack.c.h.b16 %v3092
      %v3127 = vunpack.c.l.b16 %v3093
      %v3128 = vunpack.c.h.b16 %v3093
      %v3129 = vunpack.c.l.b16 %v3094
      %v3130 = vunpack.c.h.b16 %v3094
      %v3131 = vunpack.c.l.b16 %v3095
      %v3132 = vunpack.c.h.b16 %v3095
      %v3133 = vpack.c.b16 %v3119, %v3117
      %v3134 = vpack.c.b16 %v3120, %v3118
      %v3135 = vpack.c.b16 %v3123, %v3121
      %v3136 = vpack.c.b16 %v3124, %v3122
      %v3137 = vpack.c.b16 %v3127, %v3125
      %v3138 = vpack.c.b16 %v3128, %v3126
      %v3139 = vpack.c.b16 %v3131, %v3129
      %v3140 = vpack.c.b16 %v3132, %v3130
      %v3150 = vsel %vm567, %v3086, 0
      %3152 = vmatprep.subr.bf16.mxu0 0
      %3153 = vmatpush1.bf16.msra.mxu0 0
      %3154 = vmatprep.subr.bf16.mxu0 0
      %3155 = vmatpush1.bf16.msra.mxu0 0
      %3156 = vmatprep.subr.bf16.mxu0 0
      %3157 = vmatpush1.bf16.msra.mxu0 0
      %3158 = vmatprep.subr.bf16.mxu0 0
      %3159 = vmatpush1.bf16.msra.mxu0 0
      %3160 = vmatprep.subr.bf16.mxu0 %v3140
      %3161 = vmatpush1.bf16.msra.mxu0 %v3139
      %3162 = vmatprep.subr.bf16.mxu0 %v3138
      %3163 = vmatpush1.bf16.msra.mxu0 %v3137
      %3164 = vmatprep.subr.bf16.mxu0 %v3136
      %3165 = vmatpush1.bf16.msra.mxu0 %v3135
      %3166 = vmatprep.subr.bf16.mxu0 %v3134
      %3167 = vmatpush1.bf16.msra.mxu0 %v3133
      %3168 = vmatprep.subr.bf16.mxu0 0
      %3169 = vmatpush2.bf16.msra.mxu0 0
      %3170 = vmatprep.subr.bf16.mxu0 0
      %3171 = vmatpush2.bf16.msra.mxu0 0
      %3172 = vmatprep.subr.bf16.mxu0 0
      %3173 = vmatpush2.bf16.msra.mxu0 0
      %3174 = vmatprep.subr.bf16.mxu0 0
      %3175 = vmatpush2.bf16.msra.mxu0 0
      %3176 = vmatprep.subr.bf16.mxu0 0
      %3177 = vmatpush2.bf16.msra.mxu0 0
      %3178 = vmatprep.subr.bf16.mxu0 0
      %3179 = vmatpush2.bf16.msra.mxu0 0
      %3180 = vmatprep.subr.bf16.mxu0 0
      %3181 = vmatpush2.bf16.msra.mxu0 0
      %3182 = vmatprep.subr.bf16.mxu0 0
      %3183 = vmatpush2.bf16.msra.mxu0 0
      %3184 = vmatprep.mubr.bf16.mxu0 0
      %3185 = vmatmul.mubr.bf16.gmra.mxu0 %v3150
      %v3186 = vpop.f32.mrf.mxu0
      %v3187 = vadd.f32 %v3102, %v3186
      %v3188 = vpop.f32.mrf.mxu0
      %v3189 = vadd.f32 %v3106, %v3188
      %v3190 = vpop.f32.mrf.mxu0
      %v3191 = vadd.f32 %v3102, %v3190
      %v3192 = vpop.f32.mrf.mxu0
      %v3193 = vadd.f32 %v3106, %v3192
      %3194 = vdwg.mxu0
      %v3195 = vmax.f32 %v3187, 0.0
      %v3196 = vmax.f32 %v3189, 0.0
      %v3197 = vmax.f32 %v3191, 0.0
      %v3198 = vmax.f32 %v3193, 0.0
      %v3199 = vpack.c.bf16 %v3197, %v3195
      %v3200 = vpack.c.bf16 %v3198, %v3196
      %s3201 = scalar_lea.vmem %s11, 128
      %v3202 = vld [vmem:[%s3201] sm:$0xf]
      %v3203 = vld [vmem:[%s3201 + $0x4] sm:$0xf]
      %v3204 = vld [vmem:[%s3201 + $0x8] sm:$0xf]
      %v3205 = vld [vmem:[%s3201 + $0xc] sm:$0xf]
      %v3206 = vld [vmem:[%s3201 + $0x10] sm:$0xf]
      %v3207 = vld [vmem:[%s3201 + $0x14] sm:$0xf]
      %v3208 = vld [vmem:[%s3201 + $0x18] sm:$0xf]
      %v3209 = vld [vmem:[%s3201 + $0x1c] sm:$0xf]
      %v3210 = vld [vmem:[%s3201 + $0x20] sm:$0xf]
      %v3211 = vld [vmem:[%s3201 + $0x24] sm:$0xf]
      %v3212 = vld [vmem:[%s3201 + $0x28] sm:$0xf]
      %v3213 = vld [vmem:[%s3201 + $0x2c] sm:$0xf]
      %v3214 = vld [vmem:[%s3201 + $0x30] sm:$0xf]
      %v3215 = vld [vmem:[%s3201 + $0x34] sm:$0xf]
      %v3216 = vld [vmem:[%s3201 + $0x38] sm:$0xf]
      %v3217 = vld [vmem:[%s3201 + $0x3c] sm:$0xf]
      %v3218 = vld [vmem:[%s3201 + $0x40] sm:$0xf]
      %v3219 = vld [vmem:[%s3201 + $0x44] sm:$0xf]
      %v3220 = vld [vmem:[%s3201 + $0x48] sm:$0xf]
      %v3221 = vld [vmem:[%s3201 + $0x4c] sm:$0xf]
      %v3222 = vld [vmem:[%s3201 + $0x50] sm:$0xf]
      %v3223 = vld [vmem:[%s3201 + $0x54] sm:$0xf]
      %v3224 = vld [vmem:[%s3201 + $0x58] sm:$0xf]
      %v3225 = vld [vmem:[%s3201 + $0x5c] sm:$0xf]
      %v3226 = vld [vmem:[%s3201 + $0x60] sm:$0xf]
      %v3227 = vld [vmem:[%s3201 + $0x64] sm:$0xf]
      %v3228 = vld [vmem:[%s3201 + $0x68] sm:$0xf]
      %v3229 = vld [vmem:[%s3201 + $0x6c] sm:$0xf]
      %v3230 = vld [vmem:[%s3201 + $0x70] sm:$0xf]
      %v3231 = vld [vmem:[%s3201 + $0x74] sm:$0xf]
      %v3232 = vld [vmem:[%s3201 + $0x78] sm:$0xf]
      %v3233 = vld [vmem:[%s3201 + $0x7c] sm:$0xf]
      %s3234 = scalar_lea.vmem %s12, 1
      %v3235 = vld [vmem:[%s3234] sm:$0x1]
      %v3237 = vlaneseq
      %v3238 = vshrl.u32 %v3237, 7
      %v3239 = vsub.s32 0, %v3238
      %v3240 = vrot.slane %v3235, %v3239
      %v3274 = vunpack.c.l.b16 %v3202
      %v3275 = vunpack.c.l.b16 %v3203
      %v3276 = vunpack.c.l.b16 %v3204
      %v3277 = vunpack.c.l.b16 %v3205
      %v3278 = vunpack.c.l.b16 %v3206
      %v3279 = vunpack.c.l.b16 %v3207
      %v3280 = vunpack.c.l.b16 %v3208
      %v3281 = vunpack.c.l.b16 %v3209
      %v3282 = vunpack.c.l.b16 %v3210
      %v3283 = vunpack.c.l.b16 %v3211
      %v3284 = vunpack.c.l.b16 %v3212
      %v3285 = vunpack.c.l.b16 %v3213
      %v3286 = vunpack.c.l.b16 %v3214
      %v3287 = vunpack.c.l.b16 %v3215
      %v3288 = vunpack.c.l.b16 %v3216
      %v3289 = vunpack.c.l.b16 %v3217
      %v3290 = vunpack.c.l.b16 %v3218
      %v3291 = vunpack.c.l.b16 %v3219
      %v3292 = vunpack.c.l.b16 %v3220
      %v3293 = vunpack.c.l.b16 %v3221
      %v3294 = vunpack.c.l.b16 %v3222
      %v3295 = vunpack.c.l.b16 %v3223
      %v3296 = vunpack.c.l.b16 %v3224
      %v3297 = vunpack.c.l.b16 %v3225
      %v3298 = vunpack.c.l.b16 %v3226
      %v3299 = vunpack.c.l.b16 %v3227
      %v3300 = vunpack.c.l.b16 %v3228
      %v3301 = vunpack.c.l.b16 %v3229
      %v3302 = vunpack.c.l.b16 %v3230
      %v3303 = vunpack.c.l.b16 %v3231
      %v3304 = vunpack.c.l.b16 %v3232
      %v3305 = vunpack.c.l.b16 %v3233
      %v3306 = vpack.c.b16 %v3275, %v3274
      %v3307 = vpack.c.b16 %v3277, %v3276
      %v3308 = vpack.c.b16 %v3279, %v3278
      %v3309 = vpack.c.b16 %v3281, %v3280
      %v3310 = vpack.c.b16 %v3283, %v3282
      %v3311 = vpack.c.b16 %v3285, %v3284
      %v3312 = vpack.c.b16 %v3287, %v3286
      %v3313 = vpack.c.b16 %v3289, %v3288
      %v3314 = vpack.c.b16 %v3291, %v3290
      %v3315 = vpack.c.b16 %v3293, %v3292
      %v3316 = vpack.c.b16 %v3295, %v3294
      %v3317 = vpack.c.b16 %v3297, %v3296
      %v3318 = vpack.c.b16 %v3299, %v3298
      %v3319 = vpack.c.b16 %v3301, %v3300
      %v3320 = vpack.c.b16 %v3303, %v3302
      %v3321 = vpack.c.b16 %v3305, %v3304
      %3338 = vmatprep.subr.bf16.mxu0 0
      %3339 = vmatpush1.bf16.msra.mxu0 %v3313
      %3340 = vmatprep.subr.bf16.mxu0 0
      %3341 = vmatpush1.bf16.msra.mxu0 %v3312
      %3342 = vmatprep.subr.bf16.mxu0 0
      %3343 = vmatpush1.bf16.msra.mxu0 %v3311
      %3344 = vmatprep.subr.bf16.mxu0 0
      %3345 = vmatpush1.bf16.msra.mxu0 %v3310
      %3346 = vmatprep.subr.bf16.mxu0 0
      %3347 = vmatpush1.bf16.msra.mxu0 %v3309
      %3348 = vmatprep.subr.bf16.mxu0 0
      %3349 = vmatpush1.bf16.msra.mxu0 %v3308
      %3350 = vmatprep.subr.bf16.mxu0 0
      %3351 = vmatpush1.bf16.msra.mxu0 %v3307
      %3352 = vmatprep.subr.bf16.mxu0 0
      %3353 = vmatpush1.bf16.msra.mxu0 %v3306
      %3354 = vmatprep.subr.bf16.mxu0 0
      %3355 = vmatpush2.bf16.msra.mxu0 %v3321
      %3356 = vmatprep.subr.bf16.mxu0 0
      %3357 = vmatpush2.bf16.msra.mxu0 %v3320
      %3358 = vmatprep.subr.bf16.mxu0 0
      %3359 = vmatpush2.bf16.msra.mxu0 %v3319
      %3360 = vmatprep.subr.bf16.mxu0 0
      %3361 = vmatpush2.bf16.msra.mxu0 %v3318
      %3362 = vmatprep.subr.bf16.mxu0 0
      %3363 = vmatpush2.bf16.msra.mxu0 %v3317
      %3364 = vmatprep.subr.bf16.mxu0 0
      %3365 = vmatpush2.bf16.msra.mxu0 %v3316
      %3366 = vmatprep.subr.bf16.mxu0 0
      %3367 = vmatpush2.bf16.msra.mxu0 %v3315
      %3368 = vmatprep.subr.bf16.mxu0 0
      %3369 = vmatpush2.bf16.msra.mxu0 %v3314
      %3370 = vmatprep.mubr.bf16.mxu0 %v3200
      %3371 = vmatmul.mubr.bf16.gmra.mxu0 %v3199
      %v3372 = vpop.f32.mrf.mxu0
      %v3373 = vadd.f32 %v3240, %v3372
      %v3374 = vpop.f32.mrf.mxu0
      %v3375 = vpop.f32.mrf.mxu0
      %v3376 = vadd.f32 %v3240, %v3375
      %v3377 = vpop.f32.mrf.mxu0
      %3378 = vdwg.mxu0
      %v3379 = vadd.f32 %v3038, %v3373
      %v3380 = vadd.f32 %v3039, %v3376
      %v3381 = vld [vmem:[%s13] sm:$0x1]
      %v3382 = vld [vmem:[%s14] sm:$0x1]
      %v3383 = vsel %vm567, %v3379, 0.0
      %3384 = vadd.xlane.f32.xlu0 %v3383
      %v3385 = vpop.xlane.xlu0 %3384
      %v3386 = vsel %vm567, %v3380, 0.0
      %3387 = vadd.xlane.f32.xlu0 %v3386
      %v3388 = vpop.xlane.xlu0 %3387
      %v3389 = vmul.f32 %v3385, %v574
      %v3390 = vmul.f32 %v3388, %v574
      %v3391 = vsub.f32 %v3379, %v3389
      %v3392 = vsub.f32 %v3380, %v3390
      %v3393 = vmul.f32 %v3391, %v3391
      %v3394 = vmul.f32 %v3392, %v3392
      %v3395 = vsel %vm567, %v3393, 0.0
      %3396 = vadd.xlane.f32.xlu0 %v3395
      %v3397 = vpop.xlane.xlu0 %3396
      %v3398 = vsel %vm567, %v3394, 0.0
      %3399 = vadd.xlane.f32.xlu0 %v3398
      %v3400 = vpop.xlane.xlu0 %3399
      %v3401 = vmul.f32 %v3397, %v574
      %v3402 = vmul.f32 %v3400, %v574
      %v3403 = vadd.f32 %v3401, 1e-05
      %v3404 = vadd.f32 %v3402, 1e-05
      %v3405 = vrsqrt.pop %v3403
      %v3406 = vrsqrt.pop %v3404
      %v3407 = vmul.f32 %v3391, %v3405
      %v3408 = vmul.f32 %v3392, %v3406
      %v3410 = vlaneseq
      %v3411 = vshrl.u32 %v3410, 7
      %v3412 = vsub.s32 0, %v3411
      %v3413 = vrot.slane %v3381, %v3412
      %v3415 = vmul.f32 %v3407, %v3413
      %v3416 = vmul.f32 %v3408, %v3413
      %v3418 = vlaneseq
      %v3419 = vshrl.u32 %v3418, 7
      %v3420 = vsub.s32 0, %v3419
      %v3421 = vrot.slane %v3382, %v3420
      %v3423 = vadd.f32 %v3415, %v3421
      %v3424 = vadd.f32 %v3416, %v3421
      %v3425 = vpack.c.bf16 %v3424, %v3423
      %v3426 = vld [vmem:[%s15] sm:$0xf]
      %v3427 = vld [vmem:[%s15 + $0x4] sm:$0xf]
      %v3428 = vld [vmem:[%s15 + $0x8] sm:$0xf]
      %v3429 = vld [vmem:[%s15 + $0xc] sm:$0xf]
      %v3430 = vld [vmem:[%s15 + $0x10] sm:$0xf]
      %v3431 = vld [vmem:[%s15 + $0x14] sm:$0xf]
      %v3432 = vld [vmem:[%s15 + $0x18] sm:$0xf]
      %v3433 = vld [vmem:[%s15 + $0x1c] sm:$0xf]
      %v3434 = vld [vmem:[%s16] sm:$0x1]
      %v3436 = vlaneseq
      %v3437 = vshrl.u32 %v3436, 7
      %v3438 = vsub.s32 0, %v3437
      %v3439 = vrot.slane %v3434, %v3438
      %v3449 = vunpack.c.l.b16 %v3426
      %v3450 = vunpack.c.l.b16 %v3427
      %v3451 = vunpack.c.l.b16 %v3428
      %v3452 = vunpack.c.l.b16 %v3429
      %v3453 = vunpack.c.l.b16 %v3430
      %v3454 = vunpack.c.l.b16 %v3431
      %v3455 = vunpack.c.l.b16 %v3432
      %v3456 = vunpack.c.l.b16 %v3433
      %v3457 = vpack.c.b16 %v3450, %v3449
      %v3458 = vpack.c.b16 %v3452, %v3451
      %v3459 = vpack.c.b16 %v3454, %v3453
      %v3460 = vpack.c.b16 %v3456, %v3455
      %v3466 = vsel %vm567, %v3425, 0
      %3468 = vmatprep.subr.bf16.mxu0 0
      %3469 = vmatpush1.bf16.msra.mxu0 0
      %3470 = vmatprep.subr.bf16.mxu0 0
      %3471 = vmatpush1.bf16.msra.mxu0 0
      %3472 = vmatprep.subr.bf16.mxu0 0
      %3473 = vmatpush1.bf16.msra.mxu0 0
      %3474 = vmatprep.subr.bf16.mxu0 0
      %3475 = vmatpush1.bf16.msra.mxu0 0
      %3476 = vmatprep.subr.bf16.mxu0 0
      %3477 = vmatpush1.bf16.msra.mxu0 %v3460
      %3478 = vmatprep.subr.bf16.mxu0 0
      %3479 = vmatpush1.bf16.msra.mxu0 %v3459
      %3480 = vmatprep.subr.bf16.mxu0 0
      %3481 = vmatpush1.bf16.msra.mxu0 %v3458
      %3482 = vmatprep.subr.bf16.mxu0 0
      %3483 = vmatpush1.bf16.msra.mxu0 %v3457
      %3484 = vmatprep.subr.bf16.mxu0 0
      %3485 = vmatpush2.bf16.msra.mxu0 0
      %3486 = vmatprep.subr.bf16.mxu0 0
      %3487 = vmatpush2.bf16.msra.mxu0 0
      %3488 = vmatprep.subr.bf16.mxu0 0
      %3489 = vmatpush2.bf16.msra.mxu0 0
      %3490 = vmatprep.subr.bf16.mxu0 0
      %3491 = vmatpush2.bf16.msra.mxu0 0
      %3492 = vmatprep.subr.bf16.mxu0 0
      %3493 = vmatpush2.bf16.msra.mxu0 0
      %3494 = vmatprep.subr.bf16.mxu0 0
      %3495 = vmatpush2.bf16.msra.mxu0 0
      %3496 = vmatprep.subr.bf16.mxu0 0
      %3497 = vmatpush2.bf16.msra.mxu0 0
      %3498 = vmatprep.subr.bf16.mxu0 0
      %3499 = vmatpush2.bf16.msra.mxu0 0
      %3500 = vmatprep.mubr.bf16.mxu0 0
      %3501 = vmatmul.mubr.bf16.gmra.mxu0 %v3466
      %v3502 = vpop.f32.mrf.mxu0
      %v3503 = vadd.f32 %v3439, %v3502
      %v3504 = vpop.f32.mrf.mxu0
      %v3505 = vpop.f32.mrf.mxu0
      %v3506 = vadd.f32 %v3439, %v3505
      %v3507 = vpop.f32.mrf.mxu0
      %3508 = vdwg.mxu0
      %3509 = vst [vmem:[%s548] sm:$0xff] %v3503
      %3510 = vst [vmem:[%s548 + $0x8] sm:$0xff] %v3506
      %p3511 = scmp.lt.s32.totalorder %s28, 1
      %s3512 = scalar_select %p3511, %s28, 1
      %s3513 = smul.addr %s3512, 2
      %s3514 = smul.addr %s3513, 8
      %s3515 = scalar_lea.vmem %s17, %s3514
      // Predicated region
      $region89: #{bigram_lm_forward.1} parent=87 // pred_check
        %p3516 = pneg %p408
      $region90: #{bigram_lm_forward.1} parent=87 // pred_check_branch
        %3518 = sbr.rel (%p3516) target = $region92
      $region91: #{bigram_lm_forward.1} parent=87 // pred_region
        _
      $region92: #{bigram_lm_forward.1} parent=87 // pred_fallthru
        _
    $region88: #{bigram_lm_forward.1} parent=5 // pred_fallthru
      _
    %p3519 = scmp.le.s32.totalorder 2, %s23
    // Predicated region
    $region93: #{bigram_lm_forward.1} parent=5 // pred_check
      %p3520 = pneg %p3519
    $region94: #{bigram_lm_forward.1} parent=5 // pred_check_branch
      %3522 = sbr.rel (%p3520) target = $region96
    $region95: #{bigram_lm_forward.1} parent=5 // pred_region
      %s3523 = ssub.s32 %s23, 2
      // Predicated region
      $region97: #{bigram_lm_forward.1} parent=95 // pred_check
        %p3524 = pneg %p414
      $region98: #{bigram_lm_forward.1} parent=95 // pred_check_branch
        %3526 = sbr.rel (%p3524) target = $region100
      $region99: #{bigram_lm_forward.1} parent=95 // pred_region
        %p3527 = scmp.lt.s32.totalorder %s29, 1
        %s3528 = scalar_select %p3527, %s29, 1
        %s3529 = smul.addr %s3528, 2
        %s3530 = smul.addr %s3529, 8
        %s3531 = scalar_lea.vmem %s17, %s3530
      $region100: #{bigram_lm_forward.1} parent=95 // pred_fallthru
        _
    $region96: #{bigram_lm_forward.1} parent=5 // pred_fallthru
      _
  $region6: #{bigram_lm_forward.1} parent=0 // loop_footer
    %s27 = sadd.s32 1, %s23
  $region7: #{bigram_lm_forward.1} parent=0 // loop_footer_branch
    %22 = sbr.rel target = $region3
  $region8: #{bigram_lm_forward.1} parent=0 // loop_exit
    _

</llo_original>
